<compile_context>
chip_gen: v7x
topology: tpu7x:2x2x1
jax: 0.10.0
libtpu: 0.0.40
codegen_flags: <defaults>
</compile_context>

<pallas_src>
import functools

import jax
import jax.numpy as jnp
from jax.experimental import pallas as pl
from jax.experimental.pallas import tpu as pltpu

EPS = 1e-5
VMEM_LIMIT = 48 * 1024 * 1024   # safe on v7x (64 MiB phys), roomy on v5e/v6e


def _round_up(x, m):
    return (x + m - 1) // m * m


def _conv_stats_kernel(
    xf_hbm, w_ref, b_ref, gamma_ref, beta_ref, mask_ref, gat_ref, sct_ref,   # inputs
    y_ref, ab_ref,                                                           # outputs
    xbuf, dma_sem, xcol, s1_acc, s2_acc,                                     # scratch
    *, offsets, tm, win, cin_p, inv_count, eps):
    """Per (sample n, M-tile t): conv as ONE im2col-in-VMEM matmul + GN stats."""
    n = pl.program_id(0)
    t = pl.program_id(1)
    N = pl.num_programs(0)
    T = pl.num_programs(1)
    g = n * T + t            # global sequential step (both axes "arbitrary")
    slot = g & 1

    # Prime the manual pipeline once, at the very first grid step.
    @pl.when(g == 0)
    def _prime():
        pltpu.make_async_copy(
            xf_hbm.at[n, :, pl.ds(0, win)], xbuf.at[0], dma_sem.at[0]
        ).start()

    @pl.when(t == 0)
    def _init_stats():
        s1_acc[...] = jnp.zeros_like(s1_acc)
        s2_acc[...] = jnp.zeros_like(s2_acc)

    # Wait for this step's halo window (started by the previous step, or by
    # the prime above at g == 0).
    q0 = pl.multiple_of(t * tm, tm)
    pltpu.make_async_copy(
        xf_hbm.at[n, :, pl.ds(q0, win)], xbuf.at[slot], dma_sem.at[slot]
    ).wait()

    # Prefetch the NEXT grid step's window (may be the next sample's first
    # tile) into the free slot.  Correct because both grid axes iterate
    # sequentially on one core.
    @pl.when(g + 1 < N * T)
    def _prefetch():
        nxt = t + 1
        roll = nxt == T
        nn = jnp.where(roll, n + 1, n)
        nt = jnp.where(roll, 0, nxt)
        q1 = pl.multiple_of(nt * tm, tm)
        pltpu.make_async_copy(
            xf_hbm.at[nn, :, pl.ds(q1, win)],
            xbuf.at[1 - slot],
            dma_sem.at[1 - slot],
        ).start()

    # ---- im2col in VMEM: pack the K^3 shifted slices, then ONE matmul ----
    xwin = xbuf.at[slot]                                # (Cin_p, win) bf16 view
    for k, off in enumerate(offsets):                   # statically unrolled
        xcol[pl.ds(k * cin_p, cin_p), :] = xwin[:, pl.ds(off, tm)]
    y = jnp.dot(w_ref[...], xcol[...], preferred_element_type=jnp.float32)
    y = y + b_ref[...]                                  # (Cout, tm) f32

    # GroupNorm partial statistics (f32; junk padded-stride columns masked).
    # TODO(synk): if activations can be very large, accumulate shifted moments
    #             to avoid E[y^2]-mean^2 cancellation.
    m = mask_ref[...]                                   # (1, tm) f32
    ym = y * m
    s1_acc[...] += jnp.sum(ym, axis=1, keepdims=True)
    s2_acc[...] += jnp.sum(ym * y, axis=1, keepdims=True)

    # Store pre-norm activations in bf16 (lane-dense; halves HBM traffic).
    y_ref[0] = y.astype(y_ref.dtype)

    @pl.when(t == T - 1)
    def _finalize():
        s = jnp.concatenate([s1_acc[...], s2_acc[...]], axis=1)          # (Cout, 2)
        gs = jnp.dot(gat_ref[...], s, preferred_element_type=jnp.float32)   # (G, 2)
        pc = jnp.dot(sct_ref[...], gs, preferred_element_type=jnp.float32)  # (Cout, 2)
        mean = pc[:, 0:1] * inv_count
        ex2 = pc[:, 1:2] * inv_count
        var = jnp.maximum(ex2 - mean * mean, 0.0)
        rstd = jax.lax.rsqrt(var + eps)
        a = rstd * gamma_ref[...]
        b = beta_ref[...] - mean * a
        ab_ref[0] = jnp.concatenate([a, b], axis=1)      # fused affine for pass 2


def _norm_swish_kernel(y_ref, ab_ref, o_ref):
    """Streaming fused normalize+affine+Swish on lane-dense (Cout, tm2) tiles."""
    y = y_ref[0].astype(jnp.float32)                    # (Cout, tm2)
    ab = ab_ref[0]                                      # (Cout, 2)
    z = y * ab[:, 0:1] + ab[:, 1:2]
    o_ref[0] = z * jax.nn.sigmoid(z)


@functools.partial(jax.jit, static_argnames=("K", "num_groups", "tm"))
def cna_forward(x, conv_w, conv_b, gamma, beta, *, K=3, num_groups=32, tm=512):
    """x: (N, Cin, D, H, W) f32; conv_w: (Cout, Cin, K, K, K). Returns NCDHW."""
    N, Cin, D, H, W = x.shape
    Cout = conv_w.shape[0]
    assert Cout % num_groups == 0
    assert tm % 128 == 0
    cpg = Cout // num_groups
    M = D * H * W
    p = K // 2
    Dp, Hp, Wp = D + 2 * p, H + 2 * p, W + 2 * p
    plane = Hp * Wp
    K3 = K * K * K

    # Output lives on the padded-stride (Hp, Wp) grid so every conv tap is a
    # constant flat shift of the flattened padded input.
    Q = D * plane
    T = (Q + tm - 1) // tm
    Qp = T * tm
    halo = (K - 1) * (plane + Wp + 1)
    win = _round_up(tm + halo, 128)                  # DMA window per tile
    Lin = (T - 1) * tm + win                         # per-sample flat length
    Cin_p = _round_up(Cin, 16)                       # bf16 packed-row aligned
    Kc = K3 * Cin_p                                  # im2col contraction depth

    # ---- XLA-side glue (no im2col in HBM, input stays channel-major) ----
    xp = jnp.pad(x, ((0, 0), (0, 0), (p, p), (p, p), (p, p)))
    xf = xp.reshape(N, Cin, Dp * plane)
    xf = jnp.pad(xf, ((0, 0), (0, Cin_p - Cin), (0, Lin - Dp * plane)))
    xf = xf.astype(jnp.bfloat16)                     # bf16 MXU operand

    # Weights flattened to (Cout, K3*Cin_p), tap-major (kd, kh, kw), ci minor.
    wt = jnp.transpose(conv_w, (2, 3, 4, 0, 1)).reshape(K3, Cout, Cin)
    wt = jnp.pad(wt, ((0, 0), (0, 0), (0, Cin_p - Cin)))
    wflat = jnp.transpose(wt, (1, 0, 2)).reshape(Cout, Kc).astype(jnp.bfloat16)
    offsets = tuple(kd * plane + kh * Wp + kw
                    for kd in range(K) for kh in range(K) for kw in range(K))

    b_col = conv_b.reshape(Cout, 1).astype(jnp.float32)
    gamma_col = gamma.reshape(Cout, 1).astype(jnp.float32)
    beta_col = beta.reshape(Cout, 1).astype(jnp.float32)

    # Validity mask over the padded-stride output grid (junk columns = 0).
    q = jnp.arange(Qp)
    valid = ((q // plane) < D) & (((q // Wp) % Hp) < H) & ((q % Wp) < W)
    mask = valid.astype(jnp.float32).reshape(1, Qp)

    # Small group gather/scatter matrices (replaces the (Cout, Cout) gmat).
    grp = jnp.arange(Cout) // cpg
    gat = (jnp.arange(num_groups)[:, None] == grp[None, :]).astype(jnp.float32)
    sct = (grp[:, None] == jnp.arange(num_groups)[None, :]).astype(jnp.float32)

    kernel1 = functools.partial(
        _conv_stats_kernel, offsets=offsets, tm=tm, win=win, cin_p=Cin_p,
        inv_count=1.0 / float(M * cpg), eps=EPS)

    # -------- Pass 1: conv (single matmul) + GroupNorm statistics --------
    y_pre, ab = pl.pallas_call(
        kernel1,
        out_shape=(jax.ShapeDtypeStruct((N, Cout, Qp), jnp.bfloat16),
                   jax.ShapeDtypeStruct((N, Cout, 2), jnp.float32)),
        grid_spec=pltpu.PrefetchScalarGridSpec(
            num_scalar_prefetch=0,
            grid=(N, T),
            in_specs=[
                pl.BlockSpec(memory_space=pl.ANY),                       # xf (manual DMA)
                pl.BlockSpec((Cout, Kc), lambda n, t: (0, 0)),           # flattened weights
                pl.BlockSpec((Cout, 1), lambda n, t: (0, 0)),            # bias
                pl.BlockSpec((Cout, 1), lambda n, t: (0, 0)),            # gamma
                pl.BlockSpec((Cout, 1), lambda n, t: (0, 0)),            # beta
                pl.BlockSpec((1, tm), lambda n, t: (0, t)),              # validity mask
                pl.BlockSpec((num_groups, Cout), lambda n, t: (0, 0)),   # group gather
                pl.BlockSpec((Cout, num_groups), lambda n, t: (0, 0)),   # group scatter
            ],
            out_specs=(
                pl.BlockSpec((1, Cout, tm), lambda n, t: (n, 0, t)),     # pre-norm y (bf16)
                pl.BlockSpec((1, Cout, 2), lambda n, t: (n, 0, 0)),      # fused affine (a,b)
            ),
            scratch_shapes=[
                pltpu.VMEM((2, Cin_p, win), jnp.bfloat16),               # double-buffered window
                pltpu.SemaphoreType.DMA((2,)),
                pltpu.VMEM((Kc, tm), jnp.bfloat16),                      # im2col slab
                pltpu.VMEM((Cout, 1), jnp.float32),                      # sum(y)
                pltpu.VMEM((Cout, 1), jnp.float32),                      # sum(y^2)
            ],
        ),
        # Both axes sequential: required by the cross-sample window prefetch
        # and the per-sample stat accumulators.
        compiler_params=pltpu.CompilerParams(
            dimension_semantics=("arbitrary", "arbitrary"),
            vmem_limit_bytes=VMEM_LIMIT),
    )(xf, wflat, b_col, gamma_col, beta_col, mask, gat, sct)

    # -------- Pass 2: normalize + Swish (mem-bound, big lane tiles) --------
    tm2 = tm
    for k in range(T, 0, -1):
        if T % k == 0 and tm * k <= max(2048, tm):
            tm2 = tm * k
            break
    T2 = Qp // tm2

    out_big = pl.pallas_call(
        _norm_swish_kernel,
        out_shape=jax.ShapeDtypeStruct((N, Cout, Qp), jnp.float32),
        grid_spec=pltpu.PrefetchScalarGridSpec(
            num_scalar_prefetch=0,
            grid=(N, T2),
            in_specs=[
                pl.BlockSpec((1, Cout, tm2), lambda n, t: (n, 0, t)),
                pl.BlockSpec((1, Cout, 2), lambda n, t: (n, 0, 0)),
            ],
            out_specs=pl.BlockSpec((1, Cout, tm2), lambda n, t: (n, 0, t)),
        ),
        compiler_params=pltpu.CompilerParams(
            dimension_semantics=("parallel", "parallel"),
            vmem_limit_bytes=VMEM_LIMIT),
    )(y_pre, ab)

    # Padded-stride grid -> NCDHW: a pure slice, no transpose needed.
    out = out_big[:, :, :Q].reshape(N, Cout, D, Hp, Wp)[:, :, :, :H, :W]
    return out


def _reference(x, conv_w, conv_b, gamma, beta, K=3, num_groups=32):
    """Pure-JAX f32 reference matching PyTorch Conv3d + GroupNorm + Swish."""
    y = jax.lax.conv_general_dilated(
        x, conv_w, window_strides=(1, 1, 1),
        padding=[(K // 2, K // 2)] * 3,
        dimension_numbers=("NCDHW", "OIDHW", "NCDHW"))
    y = y + conv_b.reshape(1, -1, 1, 1, 1)
    N, C, D, H, W = y.shape
    yg = y.reshape(N, num_groups, C // num_groups, D, H, W)
    mu = jnp.mean(yg, axis=(2, 3, 4, 5), keepdims=True)
    var = jnp.mean((yg - mu) ** 2, axis=(2, 3, 4, 5), keepdims=True)
    yn = ((yg - mu) / jnp.sqrt(var + EPS)).reshape(N, C, D, H, W)
    z = yn * gamma.reshape(1, -1, 1, 1, 1) + beta.reshape(1, -1, 1, 1, 1)
    return z * jax.nn.sigmoid(z)


if __name__ == "__main__":
    # GroupNorm(32) requires Cout % 32 == 0; Cout=64 so channels-per-group is
    # 2 and the non-degenerate group-reduction path is exercised.  tm=512 and
    # Q=800 give T=2 tiles, exercising accumulation + cross-sample prefetch.
    N, Cin, Cout, D, H, W, K = 2, 4, 64, 8, 8, 8, 3

    key = jax.random.PRNGKey(0)
    kx, kw, kb, kg, kbe = jax.random.split(key, 5)
    x = jax.random.normal(kx, (N, Cin, D, H, W), dtype=jnp.float32)

    fan_in = Cin * K * K * K
    conv_w = jax.random.normal(kw, (Cout, Cin, K, K, K), dtype=jnp.float32)
    conv_w = conv_w * (1.0 / jnp.sqrt(float(fan_in)))
    conv_b = 0.01 * jax.random.normal(kb, (Cout,), dtype=jnp.float32)
    gamma = 1.0 + 0.1 * jax.random.normal(kg, (Cout,), dtype=jnp.float32)
    beta = 0.1 * jax.random.normal(kbe, (Cout,), dtype=jnp.float32)

    out = cna_forward(x, conv_w, conv_b, gamma, beta, K=K, num_groups=32, tm=512)
    out = jax.block_until_ready(out)

    ref = _reference(x, conv_w, conv_b, gamma, beta, K=K, num_groups=32)
    assert out.shape == (N, Cout, D, H, W)
    max_err = float(jnp.max(jnp.abs(out - ref)))
    # bf16 MXU operands + bf16 y_pre intermediate (f32 stats / epilogue) vs an
    # f32 reference.
    assert jnp.allclose(out, ref, rtol=3e-2, atol=3e-2), (
        f"mismatch vs reference, max|diff|={max_err}")

    print("KERNEL_OK")
</pallas_src>

<mosaic_0001>
module attributes {stable_mosaic.version = 11 : i64} {
  func.func @_conv_stats_kernel(%arg0: i32, %arg1: i32, %arg2: memref<2x16x1280xbf16, #tpu.memory_space<any>>, %arg3: memref<64x432xbf16, #tpu.memory_space<vmem>>, %arg4: memref<64x1xf32, #tpu.memory_space<vmem>>, %arg5: memref<64x1xf32, #tpu.memory_space<vmem>>, %arg6: memref<64x1xf32, #tpu.memory_space<vmem>>, %arg7: memref<1x512xf32, #tpu.memory_space<vmem>>, %arg8: memref<32x64xf32, #tpu.memory_space<vmem>>, %arg9: memref<64x32xf32, #tpu.memory_space<vmem>>, %arg10: memref<1x64x512xbf16, #tpu.memory_space<vmem>>, %arg11: memref<1x64x2xf32, #tpu.memory_space<vmem>>, %arg12: memref<2x16x768xbf16, #tpu.memory_space<vmem>>, %arg13: memref<2x!tpu.dma_semaphore, #tpu.memory_space<semaphore_mem>>, %arg14: memref<432x512xbf16, #tpu.memory_space<vmem>>, %arg15: memref<64x1xf32, #tpu.memory_space<vmem>>, %arg16: memref<64x1xf32, #tpu.memory_space<vmem>>) attributes {dimension_semantics = [#tpu.dimension_semantics<arbitrary>, #tpu.dimension_semantics<arbitrary>], iteration_bounds = array<i64: 2, 2>, scalar_prefetch = 0 : i64, scratch_operands = 5 : i64, tpu.core_type = #tpu.core_type<tc>, window_params = [{}, {pipeline_mode = #tpu.pipeline_mode<synchronous>, transform_indices = @transform_1, window_bounds = array<i64: 64, 432>}, {pipeline_mode = #tpu.pipeline_mode<synchronous>, transform_indices = @transform_2, window_bounds = array<i64: 64, 1>}, {pipeline_mode = #tpu.pipeline_mode<synchronous>, transform_indices = @transform_3, window_bounds = array<i64: 64, 1>}, {pipeline_mode = #tpu.pipeline_mode<synchronous>, transform_indices = @transform_4, window_bounds = array<i64: 64, 1>}, {transform_indices = @transform_5, window_bounds = array<i64: 1, 512>}, {pipeline_mode = #tpu.pipeline_mode<synchronous>, transform_indices = @transform_6, window_bounds = array<i64: 32, 64>}, {pipeline_mode = #tpu.pipeline_mode<synchronous>, transform_indices = @transform_7, window_bounds = array<i64: 64, 32>}, {transform_indices = @transform_8, window_bounds = array<i64: 1, 64, 512>}, {transform_indices = @transform_9, window_bounds = array<i64: 1, 64, 2>}]} {
    %c2_i32 = arith.constant 2 : i32
    %0 = arith.muli %arg0, %c2_i32 : i32
    %1 = arith.addi %0, %arg1 : i32
    %c1_i32 = arith.constant 1 : i32
    %2 = arith.andi %1, %c1_i32 : i32
    %c0_i32 = arith.constant 0 : i32
    %3 = arith.cmpi eq, %1, %c0_i32 : i32
    %4 = arith.extui %3 : i1 to i32
    %c0_i32_0 = arith.constant 0 : i32
    %5 = arith.cmpi ne, %4, %c0_i32_0 : i32
    scf.if %5 {
      %c0_i32_141 = arith.constant 0 : i32
      %c0_i32_142 = arith.constant 0 : i32
      %c0_i32_143 = arith.constant 0 : i32
      %c0_i32_144 = arith.constant 0 : i32
      %156 = tpu.memref_slice %arg2[%arg0, %c0_i32_143, %c0_i32_144] : memref<2x16x1280xbf16, #tpu.memory_space<any>> -> memref<1x16x768xbf16, #tpu.memory_space<any>>
      %157 = tpu.memref_squeeze %156 : memref<1x16x768xbf16, #tpu.memory_space<any>> -> memref<16x768xbf16, #tpu.memory_space<any>>
      %c0_i32_145 = arith.constant 0 : i32
      %c0_i32_146 = arith.constant 0 : i32
      %158 = tpu.memref_slice %arg12[%c0_i32_141, %c0_i32_145, %c0_i32_146] : memref<2x16x768xbf16, #tpu.memory_space<vmem>> -> memref<1x16x768xbf16, #tpu.memory_space<vmem>>
      %159 = tpu.memref_squeeze %158 : memref<1x16x768xbf16, #tpu.memory_space<vmem>> -> memref<16x768xbf16, #tpu.memory_space<vmem>>
      %160 = tpu.memref_slice %arg13[%c0_i32_142] : memref<2x!tpu.dma_semaphore, #tpu.memory_space<semaphore_mem>> -> memref<1x!tpu.dma_semaphore, #tpu.memory_space<semaphore_mem>>
      %161 = tpu.memref_squeeze %160 : memref<1x!tpu.dma_semaphore, #tpu.memory_space<semaphore_mem>> -> memref<!tpu.dma_semaphore, #tpu.memory_space<semaphore_mem>>
      tpu.enqueue_dma source(%157 : memref<16x768xbf16, #tpu.memory_space<any>>) target(%159 : memref<16x768xbf16, #tpu.memory_space<vmem>>) target_semaphore(%161 : memref<!tpu.dma_semaphore, #tpu.memory_space<semaphore_mem>>)
    } else {
    }
    %c0_i32_1 = arith.constant 0 : i32
    %6 = arith.cmpi eq, %arg1, %c0_i32_1 : i32
    %7 = arith.extui %6 : i1 to i32
    %c0_i32_2 = arith.constant 0 : i32
    %8 = arith.cmpi ne, %7, %c0_i32_2 : i32
    scf.if %8 {
      %cst_141 = arith.constant 0.000000e+00 : f32
      %156 = vector.broadcast %cst_141 : f32 to vector<64x1xf32>
      %c0_142 = arith.constant 0 : index
      %c0_143 = arith.constant 0 : index
      %157 = vector.load %arg15[%c0_142, %c0_143] : memref<64x1xf32, #tpu.memory_space<vmem>>, vector<64x1xf32>
      tpu.vector_store %arg15[%c0_142, %c0_143], %156 {strides = array<i32>} : memref<64x1xf32, #tpu.memory_space<vmem>>, vector<64x1xf32>,
      %cst_144 = arith.constant 0.000000e+00 : f32
      %158 = vector.broadcast %cst_144 : f32 to vector<64x1xf32>
      %c0_145 = arith.constant 0 : index
      %c0_146 = arith.constant 0 : index
      %159 = vector.load %arg16[%c0_145, %c0_146] : memref<64x1xf32, #tpu.memory_space<vmem>>, vector<64x1xf32>
      tpu.vector_store %arg16[%c0_145, %c0_146], %158 {strides = array<i32>} : memref<64x1xf32, #tpu.memory_space<vmem>>, vector<64x1xf32>,
    } else {
    }
    %c512_i32 = arith.constant 512 : i32
    %9 = arith.muli %arg1, %c512_i32 : i32
    %10 = tpu.assume_multiple %9, 512 : i32
    %c0_i32_3 = arith.constant 0 : i32
    %11 = tpu.memref_slice %arg2[%arg0, %c0_i32_3, %10] : memref<2x16x1280xbf16, #tpu.memory_space<any>> -> memref<1x16x768xbf16, #tpu.memory_space<any>>
    %12 = tpu.memref_squeeze %11 : memref<1x16x768xbf16, #tpu.memory_space<any>> -> memref<16x768xbf16, #tpu.memory_space<any>>
    %c0_i32_4 = arith.constant 0 : i32
    %c0_i32_5 = arith.constant 0 : i32
    %13 = tpu.memref_slice %arg12[%2, %c0_i32_4, %c0_i32_5] : memref<2x16x768xbf16, #tpu.memory_space<vmem>> -> memref<1x16x768xbf16, #tpu.memory_space<vmem>>
    %14 = tpu.memref_squeeze %13 : memref<1x16x768xbf16, #tpu.memory_space<vmem>> -> memref<16x768xbf16, #tpu.memory_space<vmem>>
    %15 = tpu.memref_slice %arg13[%2] : memref<2x!tpu.dma_semaphore, #tpu.memory_space<semaphore_mem>> -> memref<1x!tpu.dma_semaphore, #tpu.memory_space<semaphore_mem>>
    %16 = tpu.memref_squeeze %15 : memref<1x!tpu.dma_semaphore, #tpu.memory_space<semaphore_mem>> -> memref<!tpu.dma_semaphore, #tpu.memory_space<semaphore_mem>>
    tpu.wait_dma2 semaphore(%16 : memref<!tpu.dma_semaphore, #tpu.memory_space<semaphore_mem>>) src(%12 : memref<16x768xbf16, #tpu.memory_space<any>>) dst(%14 : memref<16x768xbf16, #tpu.memory_space<vmem>>)
    %c1_i32_6 = arith.constant 1 : i32
    %17 = arith.addi %1, %c1_i32_6 : i32
    %c4_i32 = arith.constant 4 : i32
    %18 = arith.cmpi slt, %17, %c4_i32 : i32
    %19 = arith.extui %18 : i1 to i32
    %c0_i32_7 = arith.constant 0 : i32
    %20 = arith.cmpi ne, %19, %c0_i32_7 : i32
    scf.if %20 {
      %c1_i32_141 = arith.constant 1 : i32
      %156 = arith.addi %arg1, %c1_i32_141 : i32
      %c2_i32_142 = arith.constant 2 : i32
      %157 = arith.cmpi eq, %156, %c2_i32_142 : i32
      %c1_i32_143 = arith.constant 1 : i32
      %158 = arith.addi %arg0, %c1_i32_143 : i32
      %159 = arith.select %157, %158, %arg0 : i32
      %c0_i32_144 = arith.constant 0 : i32
      %160 = arith.select %157, %c0_i32_144, %156 : i32
      %c512_i32_145 = arith.constant 512 : i32
      %161 = arith.muli %160, %c512_i32_145 : i32
      %162 = tpu.assume_multiple %161, 512 : i32
      %c1_i32_146 = arith.constant 1 : i32
      %163 = arith.subi %c1_i32_146, %2 : i32
      %c1_i32_147 = arith.constant 1 : i32
      %164 = arith.subi %c1_i32_147, %2 : i32
      %c0_i32_148 = arith.constant 0 : i32
      %165 = tpu.memref_slice %arg2[%159, %c0_i32_148, %162] : memref<2x16x1280xbf16, #tpu.memory_space<any>> -> memref<1x16x768xbf16, #tpu.memory_space<any>>
      %166 = tpu.memref_squeeze %165 : memref<1x16x768xbf16, #tpu.memory_space<any>> -> memref<16x768xbf16, #tpu.memory_space<any>>
      %c0_i32_149 = arith.constant 0 : i32
      %c0_i32_150 = arith.constant 0 : i32
      %167 = tpu.memref_slice %arg12[%163, %c0_i32_149, %c0_i32_150] : memref<2x16x768xbf16, #tpu.memory_space<vmem>> -> memref<1x16x768xbf16, #tpu.memory_space<vmem>>
      %168 = tpu.memref_squeeze %167 : memref<1x16x768xbf16, #tpu.memory_space<vmem>> -> memref<16x768xbf16, #tpu.memory_space<vmem>>
      %169 = tpu.memref_slice %arg13[%164] : memref<2x!tpu.dma_semaphore, #tpu.memory_space<semaphore_mem>> -> memref<1x!tpu.dma_semaphore, #tpu.memory_space<semaphore_mem>>
      %170 = tpu.memref_squeeze %169 : memref<1x!tpu.dma_semaphore, #tpu.memory_space<semaphore_mem>> -> memref<!tpu.dma_semaphore, #tpu.memory_space<semaphore_mem>>
      tpu.enqueue_dma source(%166 : memref<16x768xbf16, #tpu.memory_space<any>>) target(%168 : memref<16x768xbf16, #tpu.memory_space<vmem>>) target_semaphore(%170 : memref<!tpu.dma_semaphore, #tpu.memory_space<semaphore_mem>>)
    } else {
    }
    %c0_i32_8 = arith.constant 0 : i32
    %c0_i32_9 = arith.constant 0 : i32
    %21 = tpu.memref_slice %arg12[%2, %c0_i32_8, %c0_i32_9] : memref<2x16x768xbf16, #tpu.memory_space<vmem>> -> memref<1x16x768xbf16, #tpu.memory_space<vmem>>
    %22 = tpu.memref_squeeze %21 : memref<1x16x768xbf16, #tpu.memory_space<vmem>> -> memref<16x768xbf16, #tpu.memory_space<vmem>>
    %c0 = arith.constant 0 : index
    %c0_10 = arith.constant 0 : index
    %23 = vector.load %22[%c0, %c0_10] : memref<16x768xbf16, #tpu.memory_space<vmem>>, vector<16x512xbf16>
    %c0_11 = arith.constant 0 : index
    %c0_12 = arith.constant 0 : index
    %24 = vector.load %arg14[%c0_11, %c0_12] : memref<432x512xbf16, #tpu.memory_space<vmem>>, vector<16x512xbf16>
    tpu.vector_store %arg14[%c0_11, %c0_12], %23 {strides = array<i32>} : memref<432x512xbf16, #tpu.memory_space<vmem>>, vector<16x512xbf16>,
    %c0_i32_13 = arith.constant 0 : i32
    %c0_i32_14 = arith.constant 0 : i32
    %25 = tpu.memref_slice %arg12[%2, %c0_i32_13, %c0_i32_14] : memref<2x16x768xbf16, #tpu.memory_space<vmem>> -> memref<1x16x768xbf16, #tpu.memory_space<vmem>>
    %26 = tpu.memref_squeeze %25 : memref<1x16x768xbf16, #tpu.memory_space<vmem>> -> memref<16x768xbf16, #tpu.memory_space<vmem>>
    %c0_15 = arith.constant 0 : index
    %c1 = arith.constant 1 : index
    %27 = vector.load %26[%c0_15, %c1] : memref<16x768xbf16, #tpu.memory_space<vmem>>, vector<16x512xbf16>
    %c16 = arith.constant 16 : index
    %c0_16 = arith.constant 0 : index
    %28 = vector.load %arg14[%c16, %c0_16] : memref<432x512xbf16, #tpu.memory_space<vmem>>, vector<16x512xbf16>
    tpu.vector_store %arg14[%c16, %c0_16], %27 {strides = array<i32>} : memref<432x512xbf16, #tpu.memory_space<vmem>>, vector<16x512xbf16>,
    %c0_i32_17 = arith.constant 0 : i32
    %c0_i32_18 = arith.constant 0 : i32
    %29 = tpu.memref_slice %arg12[%2, %c0_i32_17, %c0_i32_18] : memref<2x16x768xbf16, #tpu.memory_space<vmem>> -> memref<1x16x768xbf16, #tpu.memory_space<vmem>>
    %30 = tpu.memref_squeeze %29 : memref<1x16x768xbf16, #tpu.memory_space<vmem>> -> memref<16x768xbf16, #tpu.memory_space<vmem>>
    %c0_19 = arith.constant 0 : index
    %c2 = arith.constant 2 : index
    %31 = vector.load %30[%c0_19, %c2] : memref<16x768xbf16, #tpu.memory_space<vmem>>, vector<16x512xbf16>
    %c32 = arith.constant 32 : index
    %c0_20 = arith.constant 0 : index
    %32 = vector.load %arg14[%c32, %c0_20] : memref<432x512xbf16, #tpu.memory_space<vmem>>, vector<16x512xbf16>
    tpu.vector_store %arg14[%c32, %c0_20], %31 {strides = array<i32>} : memref<432x512xbf16, #tpu.memory_space<vmem>>, vector<16x512xbf16>,
    %c0_i32_21 = arith.constant 0 : i32
    %c0_i32_22 = arith.constant 0 : i32
    %33 = tpu.memref_slice %arg12[%2, %c0_i32_21, %c0_i32_22] : memref<2x16x768xbf16, #tpu.memory_space<vmem>> -> memref<1x16x768xbf16, #tpu.memory_space<vmem>>
    %34 = tpu.memref_squeeze %33 : memref<1x16x768xbf16, #tpu.memory_space<vmem>> -> memref<16x768xbf16, #tpu.memory_space<vmem>>
    %c0_23 = arith.constant 0 : index
    %c10 = arith.constant 10 : index
    %35 = vector.load %34[%c0_23, %c10] : memref<16x768xbf16, #tpu.memory_space<vmem>>, vector<16x512xbf16>
    %c48 = arith.constant 48 : index
    %c0_24 = arith.constant 0 : index
    %36 = vector.load %arg14[%c48, %c0_24] : memref<432x512xbf16, #tpu.memory_space<vmem>>, vector<16x512xbf16>
    tpu.vector_store %arg14[%c48, %c0_24], %35 {strides = array<i32>} : memref<432x512xbf16, #tpu.memory_space<vmem>>, vector<16x512xbf16>,
    %c0_i32_25 = arith.constant 0 : i32
    %c0_i32_26 = arith.constant 0 : i32
    %37 = tpu.memref_slice %arg12[%2, %c0_i32_25, %c0_i32_26] : memref<2x16x768xbf16, #tpu.memory_space<vmem>> -> memref<1x16x768xbf16, #tpu.memory_space<vmem>>
    %38 = tpu.memref_squeeze %37 : memref<1x16x768xbf16, #tpu.memory_space<vmem>> -> memref<16x768xbf16, #tpu.memory_space<vmem>>
    %c0_27 = arith.constant 0 : index
    %c11 = arith.constant 11 : index
    %39 = vector.load %38[%c0_27, %c11] : memref<16x768xbf16, #tpu.memory_space<vmem>>, vector<16x512xbf16>
    %c64 = arith.constant 64 : index
    %c0_28 = arith.constant 0 : index
    %40 = vector.load %arg14[%c64, %c0_28] : memref<432x512xbf16, #tpu.memory_space<vmem>>, vector<16x512xbf16>
    tpu.vector_store %arg14[%c64, %c0_28], %39 {strides = array<i32>} : memref<432x512xbf16, #tpu.memory_space<vmem>>, vector<16x512xbf16>,
    %c0_i32_29 = arith.constant 0 : i32
    %c0_i32_30 = arith.constant 0 : i32
    %41 = tpu.memref_slice %arg12[%2, %c0_i32_29, %c0_i32_30] : memref<2x16x768xbf16, #tpu.memory_space<vmem>> -> memref<1x16x768xbf16, #tpu.memory_space<vmem>>
    %42 = tpu.memref_squeeze %41 : memref<1x16x768xbf16, #tpu.memory_space<vmem>> -> memref<16x768xbf16, #tpu.memory_space<vmem>>
    %c0_31 = arith.constant 0 : index
    %c12 = arith.constant 12 : index
    %43 = vector.load %42[%c0_31, %c12] : memref<16x768xbf16, #tpu.memory_space<vmem>>, vector<16x512xbf16>
    %c80 = arith.constant 80 : index
    %c0_32 = arith.constant 0 : index
    %44 = vector.load %arg14[%c80, %c0_32] : memref<432x512xbf16, #tpu.memory_space<vmem>>, vector<16x512xbf16>
    tpu.vector_store %arg14[%c80, %c0_32], %43 {strides = array<i32>} : memref<432x512xbf16, #tpu.memory_space<vmem>>, vector<16x512xbf16>,
    %c0_i32_33 = arith.constant 0 : i32
    %c0_i32_34 = arith.constant 0 : i32
    %45 = tpu.memref_slice %arg12[%2, %c0_i32_33, %c0_i32_34] : memref<2x16x768xbf16, #tpu.memory_space<vmem>> -> memref<1x16x768xbf16, #tpu.memory_space<vmem>>
    %46 = tpu.memref_squeeze %45 : memref<1x16x768xbf16, #tpu.memory_space<vmem>> -> memref<16x768xbf16, #tpu.memory_space<vmem>>
    %c0_35 = arith.constant 0 : index
    %c20 = arith.constant 20 : index
    %47 = vector.load %46[%c0_35, %c20] : memref<16x768xbf16, #tpu.memory_space<vmem>>, vector<16x512xbf16>
    %c96 = arith.constant 96 : index
    %c0_36 = arith.constant 0 : index
    %48 = vector.load %arg14[%c96, %c0_36] : memref<432x512xbf16, #tpu.memory_space<vmem>>, vector<16x512xbf16>
    tpu.vector_store %arg14[%c96, %c0_36], %47 {strides = array<i32>} : memref<432x512xbf16, #tpu.memory_space<vmem>>, vector<16x512xbf16>,
    %c0_i32_37 = arith.constant 0 : i32
    %c0_i32_38 = arith.constant 0 : i32
    %49 = tpu.memref_slice %arg12[%2, %c0_i32_37, %c0_i32_38] : memref<2x16x768xbf16, #tpu.memory_space<vmem>> -> memref<1x16x768xbf16, #tpu.memory_space<vmem>>
    %50 = tpu.memref_squeeze %49 : memref<1x16x768xbf16, #tpu.memory_space<vmem>> -> memref<16x768xbf16, #tpu.memory_space<vmem>>
    %c0_39 = arith.constant 0 : index
    %c21 = arith.constant 21 : index
    %51 = vector.load %50[%c0_39, %c21] : memref<16x768xbf16, #tpu.memory_space<vmem>>, vector<16x512xbf16>
    %c112 = arith.constant 112 : index
    %c0_40 = arith.constant 0 : index
    %52 = vector.load %arg14[%c112, %c0_40] : memref<432x512xbf16, #tpu.memory_space<vmem>>, vector<16x512xbf16>
    tpu.vector_store %arg14[%c112, %c0_40], %51 {strides = array<i32>} : memref<432x512xbf16, #tpu.memory_space<vmem>>, vector<16x512xbf16>,
    %c0_i32_41 = arith.constant 0 : i32
    %c0_i32_42 = arith.constant 0 : i32
    %53 = tpu.memref_slice %arg12[%2, %c0_i32_41, %c0_i32_42] : memref<2x16x768xbf16, #tpu.memory_space<vmem>> -> memref<1x16x768xbf16, #tpu.memory_space<vmem>>
    %54 = tpu.memref_squeeze %53 : memref<1x16x768xbf16, #tpu.memory_space<vmem>> -> memref<16x768xbf16, #tpu.memory_space<vmem>>
    %c0_43 = arith.constant 0 : index
    %c22 = arith.constant 22 : index
    %55 = vector.load %54[%c0_43, %c22] : memref<16x768xbf16, #tpu.memory_space<vmem>>, vector<16x512xbf16>
    %c128 = arith.constant 128 : index
    %c0_44 = arith.constant 0 : index
    %56 = vector.load %arg14[%c128, %c0_44] : memref<432x512xbf16, #tpu.memory_space<vmem>>, vector<16x512xbf16>
    tpu.vector_store %arg14[%c128, %c0_44], %55 {strides = array<i32>} : memref<432x512xbf16, #tpu.memory_space<vmem>>, vector<16x512xbf16>,
    %c0_i32_45 = arith.constant 0 : i32
    %c0_i32_46 = arith.constant 0 : i32
    %57 = tpu.memref_slice %arg12[%2, %c0_i32_45, %c0_i32_46] : memref<2x16x768xbf16, #tpu.memory_space<vmem>> -> memref<1x16x768xbf16, #tpu.memory_space<vmem>>
    %58 = tpu.memref_squeeze %57 : memref<1x16x768xbf16, #tpu.memory_space<vmem>> -> memref<16x768xbf16, #tpu.memory_space<vmem>>
    %c0_47 = arith.constant 0 : index
    %c100 = arith.constant 100 : index
    %59 = vector.load %58[%c0_47, %c100] : memref<16x768xbf16, #tpu.memory_space<vmem>>, vector<16x512xbf16>
    %c144 = arith.constant 144 : index
    %c0_48 = arith.constant 0 : index
    %60 = vector.load %arg14[%c144, %c0_48] : memref<432x512xbf16, #tpu.memory_space<vmem>>, vector<16x512xbf16>
    tpu.vector_store %arg14[%c144, %c0_48], %59 {strides = array<i32>} : memref<432x512xbf16, #tpu.memory_space<vmem>>, vector<16x512xbf16>,
    %c0_i32_49 = arith.constant 0 : i32
    %c0_i32_50 = arith.constant 0 : i32
    %61 = tpu.memref_slice %arg12[%2, %c0_i32_49, %c0_i32_50] : memref<2x16x768xbf16, #tpu.memory_space<vmem>> -> memref<1x16x768xbf16, #tpu.memory_space<vmem>>
    %62 = tpu.memref_squeeze %61 : memref<1x16x768xbf16, #tpu.memory_space<vmem>> -> memref<16x768xbf16, #tpu.memory_space<vmem>>
    %c0_51 = arith.constant 0 : index
    %c101 = arith.constant 101 : index
    %63 = vector.load %62[%c0_51, %c101] : memref<16x768xbf16, #tpu.memory_space<vmem>>, vector<16x512xbf16>
    %c160 = arith.constant 160 : index
    %c0_52 = arith.constant 0 : index
    %64 = vector.load %arg14[%c160, %c0_52] : memref<432x512xbf16, #tpu.memory_space<vmem>>, vector<16x512xbf16>
    tpu.vector_store %arg14[%c160, %c0_52], %63 {strides = array<i32>} : memref<432x512xbf16, #tpu.memory_space<vmem>>, vector<16x512xbf16>,
    %c0_i32_53 = arith.constant 0 : i32
    %c0_i32_54 = arith.constant 0 : i32
    %65 = tpu.memref_slice %arg12[%2, %c0_i32_53, %c0_i32_54] : memref<2x16x768xbf16, #tpu.memory_space<vmem>> -> memref<1x16x768xbf16, #tpu.memory_space<vmem>>
    %66 = tpu.memref_squeeze %65 : memref<1x16x768xbf16, #tpu.memory_space<vmem>> -> memref<16x768xbf16, #tpu.memory_space<vmem>>
    %c0_55 = arith.constant 0 : index
    %c102 = arith.constant 102 : index
    %67 = vector.load %66[%c0_55, %c102] : memref<16x768xbf16, #tpu.memory_space<vmem>>, vector<16x512xbf16>
    %c176 = arith.constant 176 : index
    %c0_56 = arith.constant 0 : index
    %68 = vector.load %arg14[%c176, %c0_56] : memref<432x512xbf16, #tpu.memory_space<vmem>>, vector<16x512xbf16>
    tpu.vector_store %arg14[%c176, %c0_56], %67 {strides = array<i32>} : memref<432x512xbf16, #tpu.memory_space<vmem>>, vector<16x512xbf16>,
    %c0_i32_57 = arith.constant 0 : i32
    %c0_i32_58 = arith.constant 0 : i32
    %69 = tpu.memref_slice %arg12[%2, %c0_i32_57, %c0_i32_58] : memref<2x16x768xbf16, #tpu.memory_space<vmem>> -> memref<1x16x768xbf16, #tpu.memory_space<vmem>>
    %70 = tpu.memref_squeeze %69 : memref<1x16x768xbf16, #tpu.memory_space<vmem>> -> memref<16x768xbf16, #tpu.memory_space<vmem>>
    %c0_59 = arith.constant 0 : index
    %c110 = arith.constant 110 : index
    %71 = vector.load %70[%c0_59, %c110] : memref<16x768xbf16, #tpu.memory_space<vmem>>, vector<16x512xbf16>
    %c192 = arith.constant 192 : index
    %c0_60 = arith.constant 0 : index
    %72 = vector.load %arg14[%c192, %c0_60] : memref<432x512xbf16, #tpu.memory_space<vmem>>, vector<16x512xbf16>
    tpu.vector_store %arg14[%c192, %c0_60], %71 {strides = array<i32>} : memref<432x512xbf16, #tpu.memory_space<vmem>>, vector<16x512xbf16>,
    %c0_i32_61 = arith.constant 0 : i32
    %c0_i32_62 = arith.constant 0 : i32
    %73 = tpu.memref_slice %arg12[%2, %c0_i32_61, %c0_i32_62] : memref<2x16x768xbf16, #tpu.memory_space<vmem>> -> memref<1x16x768xbf16, #tpu.memory_space<vmem>>
    %74 = tpu.memref_squeeze %73 : memref<1x16x768xbf16, #tpu.memory_space<vmem>> -> memref<16x768xbf16, #tpu.memory_space<vmem>>
    %c0_63 = arith.constant 0 : index
    %c111 = arith.constant 111 : index
    %75 = vector.load %74[%c0_63, %c111] : memref<16x768xbf16, #tpu.memory_space<vmem>>, vector<16x512xbf16>
    %c208 = arith.constant 208 : index
    %c0_64 = arith.constant 0 : index
    %76 = vector.load %arg14[%c208, %c0_64] : memref<432x512xbf16, #tpu.memory_space<vmem>>, vector<16x512xbf16>
    tpu.vector_store %arg14[%c208, %c0_64], %75 {strides = array<i32>} : memref<432x512xbf16, #tpu.memory_space<vmem>>, vector<16x512xbf16>,
    %c0_i32_65 = arith.constant 0 : i32
    %c0_i32_66 = arith.constant 0 : i32
    %77 = tpu.memref_slice %arg12[%2, %c0_i32_65, %c0_i32_66] : memref<2x16x768xbf16, #tpu.memory_space<vmem>> -> memref<1x16x768xbf16, #tpu.memory_space<vmem>>
    %78 = tpu.memref_squeeze %77 : memref<1x16x768xbf16, #tpu.memory_space<vmem>> -> memref<16x768xbf16, #tpu.memory_space<vmem>>
    %c0_67 = arith.constant 0 : index
    %c112_68 = arith.constant 112 : index
    %79 = vector.load %78[%c0_67, %c112_68] : memref<16x768xbf16, #tpu.memory_space<vmem>>, vector<16x512xbf16>
    %c224 = arith.constant 224 : index
    %c0_69 = arith.constant 0 : index
    %80 = vector.load %arg14[%c224, %c0_69] : memref<432x512xbf16, #tpu.memory_space<vmem>>, vector<16x512xbf16>
    tpu.vector_store %arg14[%c224, %c0_69], %79 {strides = array<i32>} : memref<432x512xbf16, #tpu.memory_space<vmem>>, vector<16x512xbf16>,
    %c0_i32_70 = arith.constant 0 : i32
    %c0_i32_71 = arith.constant 0 : i32
    %81 = tpu.memref_slice %arg12[%2, %c0_i32_70, %c0_i32_71] : memref<2x16x768xbf16, #tpu.memory_space<vmem>> -> memref<1x16x768xbf16, #tpu.memory_space<vmem>>
    %82 = tpu.memref_squeeze %81 : memref<1x16x768xbf16, #tpu.memory_space<vmem>> -> memref<16x768xbf16, #tpu.memory_space<vmem>>
    %c0_72 = arith.constant 0 : index
    %c120 = arith.constant 120 : index
    %83 = vector.load %82[%c0_72, %c120] : memref<16x768xbf16, #tpu.memory_space<vmem>>, vector<16x512xbf16>
    %c240 = arith.constant 240 : index
    %c0_73 = arith.constant 0 : index
    %84 = vector.load %arg14[%c240, %c0_73] : memref<432x512xbf16, #tpu.memory_space<vmem>>, vector<16x512xbf16>
    tpu.vector_store %arg14[%c240, %c0_73], %83 {strides = array<i32>} : memref<432x512xbf16, #tpu.memory_space<vmem>>, vector<16x512xbf16>,
    %c0_i32_74 = arith.constant 0 : i32
    %c0_i32_75 = arith.constant 0 : i32
    %85 = tpu.memref_slice %arg12[%2, %c0_i32_74, %c0_i32_75] : memref<2x16x768xbf16, #tpu.memory_space<vmem>> -> memref<1x16x768xbf16, #tpu.memory_space<vmem>>
    %86 = tpu.memref_squeeze %85 : memref<1x16x768xbf16, #tpu.memory_space<vmem>> -> memref<16x768xbf16, #tpu.memory_space<vmem>>
    %c0_76 = arith.constant 0 : index
    %c121 = arith.constant 121 : index
    %87 = vector.load %86[%c0_76, %c121] : memref<16x768xbf16, #tpu.memory_space<vmem>>, vector<16x512xbf16>
    %c256 = arith.constant 256 : index
    %c0_77 = arith.constant 0 : index
    %88 = vector.load %arg14[%c256, %c0_77] : memref<432x512xbf16, #tpu.memory_space<vmem>>, vector<16x512xbf16>
    tpu.vector_store %arg14[%c256, %c0_77], %87 {strides = array<i32>} : memref<432x512xbf16, #tpu.memory_space<vmem>>, vector<16x512xbf16>,
    %c0_i32_78 = arith.constant 0 : i32
    %c0_i32_79 = arith.constant 0 : i32
    %89 = tpu.memref_slice %arg12[%2, %c0_i32_78, %c0_i32_79] : memref<2x16x768xbf16, #tpu.memory_space<vmem>> -> memref<1x16x768xbf16, #tpu.memory_space<vmem>>
    %90 = tpu.memref_squeeze %89 : memref<1x16x768xbf16, #tpu.memory_space<vmem>> -> memref<16x768xbf16, #tpu.memory_space<vmem>>
    %c0_80 = arith.constant 0 : index
    %c122 = arith.constant 122 : index
    %91 = vector.load %90[%c0_80, %c122] : memref<16x768xbf16, #tpu.memory_space<vmem>>, vector<16x512xbf16>
    %c272 = arith.constant 272 : index
    %c0_81 = arith.constant 0 : index
    %92 = vector.load %arg14[%c272, %c0_81] : memref<432x512xbf16, #tpu.memory_space<vmem>>, vector<16x512xbf16>
    tpu.vector_store %arg14[%c272, %c0_81], %91 {strides = array<i32>} : memref<432x512xbf16, #tpu.memory_space<vmem>>, vector<16x512xbf16>,
    %c0_i32_82 = arith.constant 0 : i32
    %c0_i32_83 = arith.constant 0 : i32
    %93 = tpu.memref_slice %arg12[%2, %c0_i32_82, %c0_i32_83] : memref<2x16x768xbf16, #tpu.memory_space<vmem>> -> memref<1x16x768xbf16, #tpu.memory_space<vmem>>
    %94 = tpu.memref_squeeze %93 : memref<1x16x768xbf16, #tpu.memory_space<vmem>> -> memref<16x768xbf16, #tpu.memory_space<vmem>>
    %c0_84 = arith.constant 0 : index
    %c200 = arith.constant 200 : index
    %95 = vector.load %94[%c0_84, %c200] : memref<16x768xbf16, #tpu.memory_space<vmem>>, vector<16x512xbf16>
    %c288 = arith.constant 288 : index
    %c0_85 = arith.constant 0 : index
    %96 = vector.load %arg14[%c288, %c0_85] : memref<432x512xbf16, #tpu.memory_space<vmem>>, vector<16x512xbf16>
    tpu.vector_store %arg14[%c288, %c0_85], %95 {strides = array<i32>} : memref<432x512xbf16, #tpu.memory_space<vmem>>, vector<16x512xbf16>,
    %c0_i32_86 = arith.constant 0 : i32
    %c0_i32_87 = arith.constant 0 : i32
    %97 = tpu.memref_slice %arg12[%2, %c0_i32_86, %c0_i32_87] : memref<2x16x768xbf16, #tpu.memory_space<vmem>> -> memref<1x16x768xbf16, #tpu.memory_space<vmem>>
    %98 = tpu.memref_squeeze %97 : memref<1x16x768xbf16, #tpu.memory_space<vmem>> -> memref<16x768xbf16, #tpu.memory_space<vmem>>
    %c0_88 = arith.constant 0 : index
    %c201 = arith.constant 201 : index
    %99 = vector.load %98[%c0_88, %c201] : memref<16x768xbf16, #tpu.memory_space<vmem>>, vector<16x512xbf16>
    %c304 = arith.constant 304 : index
    %c0_89 = arith.constant 0 : index
    %100 = vector.load %arg14[%c304, %c0_89] : memref<432x512xbf16, #tpu.memory_space<vmem>>, vector<16x512xbf16>
    tpu.vector_store %arg14[%c304, %c0_89], %99 {strides = array<i32>} : memref<432x512xbf16, #tpu.memory_space<vmem>>, vector<16x512xbf16>,
    %c0_i32_90 = arith.constant 0 : i32
    %c0_i32_91 = arith.constant 0 : i32
    %101 = tpu.memref_slice %arg12[%2, %c0_i32_90, %c0_i32_91] : memref<2x16x768xbf16, #tpu.memory_space<vmem>> -> memref<1x16x768xbf16, #tpu.memory_space<vmem>>
    %102 = tpu.memref_squeeze %101 : memref<1x16x768xbf16, #tpu.memory_space<vmem>> -> memref<16x768xbf16, #tpu.memory_space<vmem>>
    %c0_92 = arith.constant 0 : index
    %c202 = arith.constant 202 : index
    %103 = vector.load %102[%c0_92, %c202] : memref<16x768xbf16, #tpu.memory_space<vmem>>, vector<16x512xbf16>
    %c320 = arith.constant 320 : index
    %c0_93 = arith.constant 0 : index
    %104 = vector.load %arg14[%c320, %c0_93] : memref<432x512xbf16, #tpu.memory_space<vmem>>, vector<16x512xbf16>
    tpu.vector_store %arg14[%c320, %c0_93], %103 {strides = array<i32>} : memref<432x512xbf16, #tpu.memory_space<vmem>>, vector<16x512xbf16>,
    %c0_i32_94 = arith.constant 0 : i32
    %c0_i32_95 = arith.constant 0 : i32
    %105 = tpu.memref_slice %arg12[%2, %c0_i32_94, %c0_i32_95] : memref<2x16x768xbf16, #tpu.memory_space<vmem>> -> memref<1x16x768xbf16, #tpu.memory_space<vmem>>
    %106 = tpu.memref_squeeze %105 : memref<1x16x768xbf16, #tpu.memory_space<vmem>> -> memref<16x768xbf16, #tpu.memory_space<vmem>>
    %c0_96 = arith.constant 0 : index
    %c210 = arith.constant 210 : index
    %107 = vector.load %106[%c0_96, %c210] : memref<16x768xbf16, #tpu.memory_space<vmem>>, vector<16x512xbf16>
    %c336 = arith.constant 336 : index
    %c0_97 = arith.constant 0 : index
    %108 = vector.load %arg14[%c336, %c0_97] : memref<432x512xbf16, #tpu.memory_space<vmem>>, vector<16x512xbf16>
    tpu.vector_store %arg14[%c336, %c0_97], %107 {strides = array<i32>} : memref<432x512xbf16, #tpu.memory_space<vmem>>, vector<16x512xbf16>,
    %c0_i32_98 = arith.constant 0 : i32
    %c0_i32_99 = arith.constant 0 : i32
    %109 = tpu.memref_slice %arg12[%2, %c0_i32_98, %c0_i32_99] : memref<2x16x768xbf16, #tpu.memory_space<vmem>> -> memref<1x16x768xbf16, #tpu.memory_space<vmem>>
    %110 = tpu.memref_squeeze %109 : memref<1x16x768xbf16, #tpu.memory_space<vmem>> -> memref<16x768xbf16, #tpu.memory_space<vmem>>
    %c0_100 = arith.constant 0 : index
    %c211 = arith.constant 211 : index
    %111 = vector.load %110[%c0_100, %c211] : memref<16x768xbf16, #tpu.memory_space<vmem>>, vector<16x512xbf16>
    %c352 = arith.constant 352 : index
    %c0_101 = arith.constant 0 : index
    %112 = vector.load %arg14[%c352, %c0_101] : memref<432x512xbf16, #tpu.memory_space<vmem>>, vector<16x512xbf16>
    tpu.vector_store %arg14[%c352, %c0_101], %111 {strides = array<i32>} : memref<432x512xbf16, #tpu.memory_space<vmem>>, vector<16x512xbf16>,
    %c0_i32_102 = arith.constant 0 : i32
    %c0_i32_103 = arith.constant 0 : i32
    %113 = tpu.memref_slice %arg12[%2, %c0_i32_102, %c0_i32_103] : memref<2x16x768xbf16, #tpu.memory_space<vmem>> -> memref<1x16x768xbf16, #tpu.memory_space<vmem>>
    %114 = tpu.memref_squeeze %113 : memref<1x16x768xbf16, #tpu.memory_space<vmem>> -> memref<16x768xbf16, #tpu.memory_space<vmem>>
    %c0_104 = arith.constant 0 : index
    %c212 = arith.constant 212 : index
    %115 = vector.load %114[%c0_104, %c212] : memref<16x768xbf16, #tpu.memory_space<vmem>>, vector<16x512xbf16>
    %c368 = arith.constant 368 : index
    %c0_105 = arith.constant 0 : index
    %116 = vector.load %arg14[%c368, %c0_105] : memref<432x512xbf16, #tpu.memory_space<vmem>>, vector<16x512xbf16>
    tpu.vector_store %arg14[%c368, %c0_105], %115 {strides = array<i32>} : memref<432x512xbf16, #tpu.memory_space<vmem>>, vector<16x512xbf16>,
    %c0_i32_106 = arith.constant 0 : i32
    %c0_i32_107 = arith.constant 0 : i32
    %117 = tpu.memref_slice %arg12[%2, %c0_i32_106, %c0_i32_107] : memref<2x16x768xbf16, #tpu.memory_space<vmem>> -> memref<1x16x768xbf16, #tpu.memory_space<vmem>>
    %118 = tpu.memref_squeeze %117 : memref<1x16x768xbf16, #tpu.memory_space<vmem>> -> memref<16x768xbf16, #tpu.memory_space<vmem>>
    %c0_108 = arith.constant 0 : index
    %c220 = arith.constant 220 : index
    %119 = vector.load %118[%c0_108, %c220] : memref<16x768xbf16, #tpu.memory_space<vmem>>, vector<16x512xbf16>
    %c384 = arith.constant 384 : index
    %c0_109 = arith.constant 0 : index
    %120 = vector.load %arg14[%c384, %c0_109] : memref<432x512xbf16, #tpu.memory_space<vmem>>, vector<16x512xbf16>
    tpu.vector_store %arg14[%c384, %c0_109], %119 {strides = array<i32>} : memref<432x512xbf16, #tpu.memory_space<vmem>>, vector<16x512xbf16>,
    %c0_i32_110 = arith.constant 0 : i32
    %c0_i32_111 = arith.constant 0 : i32
    %121 = tpu.memref_slice %arg12[%2, %c0_i32_110, %c0_i32_111] : memref<2x16x768xbf16, #tpu.memory_space<vmem>> -> memref<1x16x768xbf16, #tpu.memory_space<vmem>>
    %122 = tpu.memref_squeeze %121 : memref<1x16x768xbf16, #tpu.memory_space<vmem>> -> memref<16x768xbf16, #tpu.memory_space<vmem>>
    %c0_112 = arith.constant 0 : index
    %c221 = arith.constant 221 : index
    %123 = vector.load %122[%c0_112, %c221] : memref<16x768xbf16, #tpu.memory_space<vmem>>, vector<16x512xbf16>
    %c400 = arith.constant 400 : index
    %c0_113 = arith.constant 0 : index
    %124 = vector.load %arg14[%c400, %c0_113] : memref<432x512xbf16, #tpu.memory_space<vmem>>, vector<16x512xbf16>
    tpu.vector_store %arg14[%c400, %c0_113], %123 {strides = array<i32>} : memref<432x512xbf16, #tpu.memory_space<vmem>>, vector<16x512xbf16>,
    %c0_i32_114 = arith.constant 0 : i32
    %c0_i32_115 = arith.constant 0 : i32
    %125 = tpu.memref_slice %arg12[%2, %c0_i32_114, %c0_i32_115] : memref<2x16x768xbf16, #tpu.memory_space<vmem>> -> memref<1x16x768xbf16, #tpu.memory_space<vmem>>
    %126 = tpu.memref_squeeze %125 : memref<1x16x768xbf16, #tpu.memory_space<vmem>> -> memref<16x768xbf16, #tpu.memory_space<vmem>>
    %c0_116 = arith.constant 0 : index
    %c222 = arith.constant 222 : index
    %127 = vector.load %126[%c0_116, %c222] : memref<16x768xbf16, #tpu.memory_space<vmem>>, vector<16x512xbf16>
    %c416 = arith.constant 416 : index
    %c0_117 = arith.constant 0 : index
    %128 = vector.load %arg14[%c416, %c0_117] : memref<432x512xbf16, #tpu.memory_space<vmem>>, vector<16x512xbf16>
    tpu.vector_store %arg14[%c416, %c0_117], %127 {strides = array<i32>} : memref<432x512xbf16, #tpu.memory_space<vmem>>, vector<16x512xbf16>,
    %c0_118 = arith.constant 0 : index
    %c0_119 = arith.constant 0 : index
    %129 = vector.load %arg3[%c0_118, %c0_119] : memref<64x432xbf16, #tpu.memory_space<vmem>>, vector<64x432xbf16>
    %c0_120 = arith.constant 0 : index
    %c0_121 = arith.constant 0 : index
    %130 = vector.load %arg14[%c0_120, %c0_121] : memref<432x512xbf16, #tpu.memory_space<vmem>>, vector<432x512xbf16>
    %cst = arith.constant dense<0.000000e+00> : vector<64x512xf32>
    %131 = tpu.matmul %129, %130, %cst {dimension_numbers = #tpu.dot_dimension_numbers<[1], [0], [0], [1], [0, 0, 1, 1], [], []>} : vector<64x432xbf16>, vector<432x512xbf16>, vector<64x512xf32> -> vector<64x512xf32>
    %c0_122 = arith.constant 0 : index
    %c0_123 = arith.constant 0 : index
    %132 = vector.load %arg4[%c0_122, %c0_123] : memref<64x1xf32, #tpu.memory_space<vmem>>, vector<64x1xf32>
    %133 = vector.broadcast %132 : vector<64x1xf32> to vector<64x512xf32>
    %134 = arith.addf %131, %133 : vector<64x512xf32>
    %c0_124 = arith.constant 0 : index
    %c0_125 = arith.constant 0 : index
    %135 = vector.load %arg7[%c0_124, %c0_125] : memref<1x512xf32, #tpu.memory_space<vmem>>, vector<1x512xf32>
    %136 = vector.broadcast %135 : vector<1x512xf32> to vector<64x512xf32>
    %137 = arith.mulf %134, %136 : vector<64x512xf32>
    %c0_126 = arith.constant 0 : index
    %c0_127 = arith.constant 0 : index
    %138 = vector.load %arg15[%c0_126, %c0_127] : memref<64x1xf32, #tpu.memory_space<vmem>>, vector<64x1xf32>
    %cst_128 = arith.constant dense<0.000000e+00> : vector<64xf32>
    %139 = vector.multi_reduction <add>, %137, %cst_128 [1] : vector<64x512xf32> to vector<64xf32>
    %140 = vector.shape_cast %139 : vector<64xf32> to vector<64x1xf32>
    %141 = arith.addf %138, %140 : vector<64x1xf32>
    %c0_129 = arith.constant 0 : index
    %c0_130 = arith.constant 0 : index
    %142 = vector.load %arg15[%c0_129, %c0_130] : memref<64x1xf32, #tpu.memory_space<vmem>>, vector<64x1xf32>
    tpu.vector_store %arg15[%c0_129, %c0_130], %141 {strides = array<i32>} : memref<64x1xf32, #tpu.memory_space<vmem>>, vector<64x1xf32>,
    %c0_131 = arith.constant 0 : index
    %c0_132 = arith.constant 0 : index
    %143 = vector.load %arg16[%c0_131, %c0_132] : memref<64x1xf32, #tpu.memory_space<vmem>>, vector<64x1xf32>
    %144 = arith.mulf %137, %134 : vector<64x512xf32>
    %cst_133 = arith.constant dense<0.000000e+00> : vector<64xf32>
    %145 = vector.multi_reduction <add>, %144, %cst_133 [1] : vector<64x512xf32> to vector<64xf32>
    %146 = vector.shape_cast %145 : vector<64xf32> to vector<64x1xf32>
    %147 = arith.addf %143, %146 : vector<64x1xf32>
    %c0_134 = arith.constant 0 : index
    %c0_135 = arith.constant 0 : index
    %148 = vector.load %arg16[%c0_134, %c0_135] : memref<64x1xf32, #tpu.memory_space<vmem>>, vector<64x1xf32>
    tpu.vector_store %arg16[%c0_134, %c0_135], %147 {strides = array<i32>} : memref<64x1xf32, #tpu.memory_space<vmem>>, vector<64x1xf32>,
    %149 = arith.truncf %134 : vector<64x512xf32> to vector<64x512xbf16>
    %c0_136 = arith.constant 0 : index
    %c0_137 = arith.constant 0 : index
    %c0_138 = arith.constant 0 : index
    %150 = vector.load %arg10[%c0_136, %c0_137, %c0_138] : memref<1x64x512xbf16, #tpu.memory_space<vmem>>, vector<1x64x512xbf16>
    %151 = vector.shape_cast %150 : vector<1x64x512xbf16> to vector<64x512xbf16>
    %152 = vector.shape_cast %149 : vector<64x512xbf16> to vector<1x64x512xbf16>
    tpu.vector_store %arg10[%c0_136, %c0_137, %c0_138], %152 {strides = array<i32>} : memref<1x64x512xbf16, #tpu.memory_space<vmem>>, vector<1x64x512xbf16>,
    %c1_i32_139 = arith.constant 1 : i32
    %153 = arith.cmpi eq, %arg1, %c1_i32_139 : i32
    %154 = arith.extui %153 : i1 to i32
    %c0_i32_140 = arith.constant 0 : i32
    %155 = arith.cmpi ne, %154, %c0_i32_140 : i32
    scf.if %155 {
      %c0_141 = arith.constant 0 : index
      %c0_142 = arith.constant 0 : index
      %156 = vector.load %arg15[%c0_141, %c0_142] : memref<64x1xf32, #tpu.memory_space<vmem>>, vector<64x1xf32>
      %c0_143 = arith.constant 0 : index
      %c0_144 = arith.constant 0 : index
      %157 = vector.load %arg16[%c0_143, %c0_144] : memref<64x1xf32, #tpu.memory_space<vmem>>, vector<64x1xf32>
      %158 = tpu.concatenate %156, %157 in 1 : vector<64x1xf32>, vector<64x1xf32> -> vector<64x2xf32>
      %c0_145 = arith.constant 0 : index
      %c0_146 = arith.constant 0 : index
      %159 = vector.load %arg8[%c0_145, %c0_146] : memref<32x64xf32, #tpu.memory_space<vmem>>, vector<32x64xf32>
      %cst_147 = arith.constant dense<0.000000e+00> : vector<32x2xf32>
      %160 = tpu.matmul %159, %158, %cst_147 {dimension_numbers = #tpu.dot_dimension_numbers<[1], [0], [0], [1], [0, 0, 1, 1], [], []>} : vector<32x64xf32>, vector<64x2xf32>, vector<32x2xf32> -> vector<32x2xf32>
      %c0_148 = arith.constant 0 : index
      %c0_149 = arith.constant 0 : index
      %161 = vector.load %arg9[%c0_148, %c0_149] : memref<64x32xf32, #tpu.memory_space<vmem>>, vector<64x32xf32>
      %cst_150 = arith.constant dense<0.000000e+00> : vector<64x2xf32>
      %162 = tpu.matmul %161, %160, %cst_150 {dimension_numbers = #tpu.dot_dimension_numbers<[1], [0], [0], [1], [0, 0, 1, 1], [], []>} : vector<64x32xf32>, vector<32x2xf32>, vector<64x2xf32> -> vector<64x2xf32>
      %163 = vector.extract_strided_slice %162 {offsets = [0, 0], sizes = [64, 1], strides = [1, 1]} : vector<64x2xf32> to vector<64x1xf32>
      %cst_151 = arith.constant 9.765625E-4 : f32
      %164 = vector.broadcast %cst_151 : f32 to vector<64x1xf32>
      %165 = arith.mulf %163, %164 : vector<64x1xf32>
      %166 = vector.extract_strided_slice %162 {offsets = [0, 1], sizes = [64, 1], strides = [1, 1]} : vector<64x2xf32> to vector<64x1xf32>
      %cst_152 = arith.constant 9.765625E-4 : f32
      %167 = vector.broadcast %cst_152 : f32 to vector<64x1xf32>
      %168 = arith.mulf %166, %167 : vector<64x1xf32>
      %169 = arith.mulf %165, %165 : vector<64x1xf32>
      %170 = arith.subf %168, %169 : vector<64x1xf32>
      %cst_153 = arith.constant 0.000000e+00 : f32
      %171 = vector.broadcast %cst_153 : f32 to vector<64x1xf32>
      %172 = arith.maximumf %170, %171 : vector<64x1xf32>
      %cst_154 = arith.constant 9.99999974E-6 : f32
      %173 = vector.broadcast %cst_154 : f32 to vector<64x1xf32>
      %174 = arith.addf %172, %173 : vector<64x1xf32>
      %175 = math.rsqrt %174 : vector<64x1xf32>
      %c0_155 = arith.constant 0 : index
      %c0_156 = arith.constant 0 : index
      %176 = vector.load %arg5[%c0_155, %c0_156] : memref<64x1xf32, #tpu.memory_space<vmem>>, vector<64x1xf32>
      %177 = arith.mulf %175, %176 : vector<64x1xf32>
      %c0_157 = arith.constant 0 : index
      %c0_158 = arith.constant 0 : index
      %178 = vector.load %arg6[%c0_157, %c0_158] : memref<64x1xf32, #tpu.memory_space<vmem>>, vector<64x1xf32>
      %179 = arith.mulf %165, %177 : vector<64x1xf32>
      %180 = arith.subf %178, %179 : vector<64x1xf32>
      %181 = tpu.concatenate %177, %180 in 1 : vector<64x1xf32>, vector<64x1xf32> -> vector<64x2xf32>
      %c0_159 = arith.constant 0 : index
      %c0_160 = arith.constant 0 : index
      %c0_161 = arith.constant 0 : index
      %182 = vector.load %arg11[%c0_159, %c0_160, %c0_161] : memref<1x64x2xf32, #tpu.memory_space<vmem>>, vector<1x64x2xf32>
      %183 = vector.shape_cast %182 : vector<1x64x2xf32> to vector<64x2xf32>
      %184 = vector.shape_cast %181 : vector<64x2xf32> to vector<1x64x2xf32>
      tpu.vector_store %arg11[%c0_159, %c0_160, %c0_161], %184 {strides = array<i32>} : memref<1x64x2xf32, #tpu.memory_space<vmem>>, vector<1x64x2xf32>,
    } else {
    }
    return
  }
  func.func @transform_1(%arg0: i32, %arg1: i32) -> (i32, i32) {
    %c0_i32 = arith.constant 0 : i32
    %c0_i32_0 = arith.constant 0 : i32
    %c0_i32_1 = arith.constant 0 : i32
    return %c0_i32, %c0_i32_0 : i32, i32
  }
  func.func @transform_2(%arg0: i32, %arg1: i32) -> (i32, i32) {
    %c0_i32 = arith.constant 0 : i32
    %c0_i32_0 = arith.constant 0 : i32
    %c0_i32_1 = arith.constant 0 : i32
    return %c0_i32, %c0_i32_0 : i32, i32
  }
  func.func @transform_3(%arg0: i32, %arg1: i32) -> (i32, i32) {
    %c0_i32 = arith.constant 0 : i32
    %c0_i32_0 = arith.constant 0 : i32
    %c0_i32_1 = arith.constant 0 : i32
    return %c0_i32, %c0_i32_0 : i32, i32
  }
  func.func @transform_4(%arg0: i32, %arg1: i32) -> (i32, i32) {
    %c0_i32 = arith.constant 0 : i32
    %c0_i32_0 = arith.constant 0 : i32
    %c0_i32_1 = arith.constant 0 : i32
    return %c0_i32, %c0_i32_0 : i32, i32
  }
  func.func @transform_5(%arg0: i32, %arg1: i32) -> (i32, i32) {
    %c0_i32 = arith.constant 0 : i32
    %c0_i32_0 = arith.constant 0 : i32
    return %c0_i32, %arg1 : i32, i32
  }
  func.func @transform_6(%arg0: i32, %arg1: i32) -> (i32, i32) {
    %c0_i32 = arith.constant 0 : i32
    %c0_i32_0 = arith.constant 0 : i32
    %c0_i32_1 = arith.constant 0 : i32
    return %c0_i32, %c0_i32_0 : i32, i32
  }
  func.func @transform_7(%arg0: i32, %arg1: i32) -> (i32, i32) {
    %c0_i32 = arith.constant 0 : i32
    %c0_i32_0 = arith.constant 0 : i32
    %c0_i32_1 = arith.constant 0 : i32
    return %c0_i32, %c0_i32_0 : i32, i32
  }
  func.func @transform_8(%arg0: i32, %arg1: i32) -> (i32, i32, i32) {
    %c0_i32 = arith.constant 0 : i32
    %c0_i32_0 = arith.constant 0 : i32
    return %arg0, %c0_i32, %arg1 : i32, i32, i32
  }
  func.func @transform_9(%arg0: i32, %arg1: i32) -> (i32, i32, i32) {
    %c0_i32 = arith.constant 0 : i32
    %c0_i32_0 = arith.constant 0 : i32
    %c0_i32_1 = arith.constant 0 : i32
    return %arg0, %c0_i32, %c0_i32_0 : i32, i32, i32
  }
}

module attributes {stable_mosaic.version = 11 : i64} {
  func.func @_norm_swish_kernel(%arg0: i32, %arg1: i32, %arg2: memref<1x64x1024xbf16, #tpu.memory_space<vmem>>, %arg3: memref<1x64x2xf32, #tpu.memory_space<vmem>>, %arg4: memref<1x64x1024xf32, #tpu.memory_space<vmem>>) attributes {dimension_semantics = [#tpu.dimension_semantics<parallel>, #tpu.dimension_semantics<parallel>], iteration_bounds = array<i64: 2, 1>, scalar_prefetch = 0 : i64, scratch_operands = 0 : i64, tpu.core_type = #tpu.core_type<tc>, window_params = [{transform_indices = @transform_0, window_bounds = array<i64: 1, 64, 1024>}, {transform_indices = @transform_1, window_bounds = array<i64: 1, 64, 2>}, {transform_indices = @transform_2, window_bounds = array<i64: 1, 64, 1024>}]} {
    %c0 = arith.constant 0 : index
    %c0_0 = arith.constant 0 : index
    %c0_1 = arith.constant 0 : index
    %0 = vector.load %arg2[%c0, %c0_0, %c0_1] : memref<1x64x1024xbf16, #tpu.memory_space<vmem>>, vector<1x64x1024xbf16>
    %1 = vector.shape_cast %0 : vector<1x64x1024xbf16> to vector<64x1024xbf16>
    %2 = arith.extf %1 : vector<64x1024xbf16> to vector<64x1024xf32>
    %c0_2 = arith.constant 0 : index
    %c0_3 = arith.constant 0 : index
    %c0_4 = arith.constant 0 : index
    %3 = vector.load %arg3[%c0_2, %c0_3, %c0_4] : memref<1x64x2xf32, #tpu.memory_space<vmem>>, vector<1x64x2xf32>
    %4 = vector.shape_cast %3 : vector<1x64x2xf32> to vector<64x2xf32>
    %5 = vector.extract_strided_slice %4 {offsets = [0, 0], sizes = [64, 1], strides = [1, 1]} : vector<64x2xf32> to vector<64x1xf32>
    %6 = vector.broadcast %5 : vector<64x1xf32> to vector<64x1024xf32>
    %7 = arith.mulf %2, %6 : vector<64x1024xf32>
    %8 = vector.extract_strided_slice %4 {offsets = [0, 1], sizes = [64, 1], strides = [1, 1]} : vector<64x2xf32> to vector<64x1xf32>
    %9 = vector.broadcast %8 : vector<64x1xf32> to vector<64x1024xf32>
    %10 = arith.addf %7, %9 : vector<64x1024xf32>
    %11 = arith.negf %10 : vector<64x1024xf32>
    %12 = math.exp %11 : vector<64x1024xf32>
    %cst = arith.constant 1.000000e+00 : f32
    %13 = vector.broadcast %cst : f32 to vector<64x1024xf32>
    %14 = arith.addf %13, %12 : vector<64x1024xf32>
    %15 = arith.divf %13, %14 : vector<64x1024xf32>
    %16 = arith.mulf %10, %15 : vector<64x1024xf32>
    %c0_5 = arith.constant 0 : index
    %c0_6 = arith.constant 0 : index
    %c0_7 = arith.constant 0 : index
    %17 = vector.load %arg4[%c0_5, %c0_6, %c0_7] : memref<1x64x1024xf32, #tpu.memory_space<vmem>>, vector<1x64x1024xf32>
    %18 = vector.shape_cast %17 : vector<1x64x1024xf32> to vector<64x1024xf32>
    %19 = vector.shape_cast %16 : vector<64x1024xf32> to vector<1x64x1024xf32>
    tpu.vector_store %arg4[%c0_5, %c0_6, %c0_7], %19 {strides = array<i32>} : memref<1x64x1024xf32, #tpu.memory_space<vmem>>, vector<1x64x1024xf32>,
    return
  }
  func.func @transform_0(%arg0: i32, %arg1: i32) -> (i32, i32, i32) {
    %c0_i32 = arith.constant 0 : i32
    %c0_i32_0 = arith.constant 0 : i32
    return %arg0, %c0_i32, %arg1 : i32, i32, i32
  }
  func.func @transform_1(%arg0: i32, %arg1: i32) -> (i32, i32, i32) {
    %c0_i32 = arith.constant 0 : i32
    %c0_i32_0 = arith.constant 0 : i32
    %c0_i32_1 = arith.constant 0 : i32
    return %arg0, %c0_i32, %c0_i32_0 : i32, i32, i32
  }
  func.func @transform_2(%arg0: i32, %arg1: i32) -> (i32, i32, i32) {
    %c0_i32 = arith.constant 0 : i32
    %c0_i32_0 = arith.constant 0 : i32
    return %arg0, %c0_i32, %arg1 : i32, i32, i32
  }
}

</mosaic_0001>

<llo_original>
// kernel: cna_forward.3
$region0: #{cna_forward.3}
  #allocation0 [shape = 'u32[]', space=smem, size = 0x4, offset = 0x4, fixed_abs, tag = 'smem constant byte address 0x4 - core index']
  #allocation1 [shape = 'u32[144,128]{1,0:T(1,128)}', space=vmem, size = 0x12000, scoped, tag = 'internal scratch']
  %s0 = inlined_call_operand.vmem [shape: bf16[2,64,1024], index: 0, kind: input, shape index: {}]
  %s1 = inlined_call_operand.vmem [shape: f32[2,64,2], index: 1, kind: input, shape index: {}]
  %s2 = inlined_call_operand.vmem [shape: f32[2,64,1024], index: 2, kind: output, shape index: {}]
  %s3 = sld [smem:[#allocation0]]
  $region41: #{cna_forward.3} parent=0
    _
  %s5 = ssub.s32 1, %s3
  %s6 = scalar_select 0, %s5, %s3
  loop: start=0, step=1, limit=4
  $region2: #{cna_forward.3} parent=0 // loop_pre_header
    _
  $region3: #{cna_forward.3} parent=0 // loop_header
    %s8 = sphi 0, %s12
    %p9 = scmp.ge.s32.totalorder %s8, 4
    %s15 = sphi 0, %s27
    %s16 = sphi 0, %s23
    %s17 = sphi 0, %s15
    %s18 = sphi 0, %s16
    %s19 = sphi 0, %s17
    %s20 = sphi 0, %s18
    %s32 = sphi 0, %s34
    %s35 = sphi 0, %s32
    %s36 = sphi 0, %s35
    %s52 = sphi 0, %s36
    %s58 = sphi 0, %s60
    %s61 = sphi 0, %s58
    %s62 = sphi 0, %s61
    %s78 = sphi 0, %s62
    %s86 = sphi 0, %s88
    %s89 = sphi 0, %s86
    %s90 = sphi 0, %s89
    %s106 = sphi 0, %s90
  $region4: #{cna_forward.3} parent=0 // loop_header_branch
    %11 = sbr.rel (%p9) target = $region8
  $region5: #{cna_forward.3} parent=0 // loop_body
    %s13 = ssub.s32 %s8, 1
    %s14 = ssub.s32 %s8, 2
    %s21 = sadd.s32 1, %s16
    %p22 = scmp.ge.s32.totalorder %s21, 1
    %s23 = scalar_select %p22, 0, %s21
    %s24 = sadd.s32 1, %s15
    %s25 = scalar_select %p22, %s24, %s15
    %p26 = scmp.ge.s32.totalorder %s25, 2
    %s27 = scalar_select %p26, 0, %s25
    %s28 = ssub.s32 %s15, %s27
    %s29 = ssub.s32 %s16, %s23
    %s30 = sor.u32 %s28, %s29
    %p31 = scmp.eq.s32.totalorder %s30, 0
    %s33 = sadd.s32 %s32, 1
    %s34 = scalar_select %p31, %s32, %s33
    %p37 = pneg %p31
    %p38 = scmp.eq.s32.totalorder %s8, 1
    %p39 = por %p37, %p38
    %p40 = scmp.ne.s32.totalorder %s32, %s35
    %p41 = scmp.eq.s32.totalorder %s8, 0
    %p42 = por %p40, %p41
    %p43 = scmp.ne.s32.totalorder %s32, %s35
    %p44 = scmp.eq.s32.totalorder %s13, 1
    %p45 = por %p43, %p44
    %p46 = scmp.ne.s32.totalorder %s35, %s36
    %p47 = scmp.eq.s32.totalorder %s13, 0
    %p48 = por %p46, %p47
    %p49 = scmp.ne.s32.totalorder %s35, %s36
    %p50 = scmp.eq.s32.totalorder %s14, 1
    %p51 = por %p49, %p50
    %p53 = scmp.ne.s32.totalorder %s36, %s52
    %p54 = scmp.eq.s32.totalorder %s14, 0
    %p55 = por %p53, %p54
    %s56 = ssub.s32 %s15, %s27
    %p57 = scmp.eq.s32.totalorder %s56, 0
    %s59 = sadd.s32 %s58, 1
    %s60 = scalar_select %p57, %s58, %s59
    %p63 = pneg %p57
    %p64 = scmp.eq.s32.totalorder %s8, 1
    %p65 = por %p63, %p64
    %p66 = scmp.ne.s32.totalorder %s58, %s61
    %p67 = scmp.eq.s32.totalorder %s8, 0
    %p68 = por %p66, %p67
    %p69 = scmp.ne.s32.totalorder %s58, %s61
    %p70 = scmp.eq.s32.totalorder %s13, 1
    %p71 = por %p69, %p70
    %p72 = scmp.ne.s32.totalorder %s61, %s62
    %p73 = scmp.eq.s32.totalorder %s13, 0
    %p74 = por %p72, %p73
    %p75 = scmp.ne.s32.totalorder %s61, %s62
    %p76 = scmp.eq.s32.totalorder %s14, 1
    %p77 = por %p75, %p76
    %p79 = scmp.ne.s32.totalorder %s62, %s78
    %p80 = scmp.eq.s32.totalorder %s14, 0
    %p81 = por %p79, %p80
    %s82 = ssub.s32 %s15, %s27
    %s83 = ssub.s32 %s16, %s23
    %s84 = sor.u32 %s82, %s83
    %p85 = scmp.eq.s32.totalorder %s84, 0
    %s87 = sadd.s32 %s86, 1
    %s88 = scalar_select %p85, %s86, %s87
    %p91 = pneg %p85
    %p92 = scmp.eq.s32.totalorder %s8, 1
    %p93 = por %p91, %p92
    %p94 = scmp.ne.s32.totalorder %s86, %s89
    %p95 = scmp.eq.s32.totalorder %s8, 0
    %p96 = por %p94, %p95
    %p97 = scmp.ne.s32.totalorder %s86, %s89
    %p98 = scmp.eq.s32.totalorder %s13, 1
    %p99 = por %p97, %p98
    %p100 = scmp.ne.s32.totalorder %s89, %s90
    %p101 = scmp.eq.s32.totalorder %s13, 0
    %p102 = por %p100, %p101
    %p103 = scmp.ne.s32.totalorder %s89, %s90
    %p104 = scmp.eq.s32.totalorder %s14, 1
    %p105 = por %p103, %p104
    %p107 = scmp.ne.s32.totalorder %s90, %s106
    %p108 = scmp.eq.s32.totalorder %s14, 0
    %p109 = por %p107, %p108
    %p110 = scmp.le.s32.totalorder 1, %s8
    %p111 = scmp.lt.s32.totalorder %s8, 3
    %p112 = pnand %p110, %p111
    %p113 = pneg %p112
    // Predicated region
    $region9: #{cna_forward.3} parent=5 // pred_check
      _
    $region10: #{cna_forward.3} parent=5 // pred_check_branch
      %115 = sbr.rel (%p112) target = $region12
    $region11: #{cna_forward.3} parent=5 // pred_region
      %s116 = ssub.s32 %s8, 1
    $region12: #{cna_forward.3} parent=5 // pred_fallthru
      _
    %p117 = scmp.lt.s32.totalorder %s8, 2
    // Predicated region
    $region13: #{cna_forward.3} parent=5 // pred_check
      %p118 = pneg %p117
    $region14: #{cna_forward.3} parent=5 // pred_check_branch
      %120 = sbr.rel (%p118) target = $region16
    $region15: #{cna_forward.3} parent=5 // pred_region
      // Predicated region
      $region17: #{cna_forward.3} parent=15 // pred_check
        %p121 = pneg %p42
      $region18: #{cna_forward.3} parent=15 // pred_check_branch
        %123 = sbr.rel (%p121) target = $region20
      $region19: #{cna_forward.3} parent=15 // pred_region
        %s124 = smul.u32 8, %s16
        %p125 = scmp.lt.s32.totalorder %s15, 1
        %s126 = scalar_select %p125, %s15, 1
        %p127 = scmp.lt.s32.totalorder %s124, 7
        %s128 = scalar_select %p127, %s124, 7
        %s129 = smul.addr %s126, 64
        %s130 = sadd.s32 %s128, %s129
        %s131 = smul.addr %s130, 4
        %s132 = scalar_lea.vmem %s0, %s131
        %s133 = smul.u32 8, %s16
      $region20: #{cna_forward.3} parent=15 // pred_fallthru
        _
      // Predicated region
      $region21: #{cna_forward.3} parent=15 // pred_check
        %p134 = pneg %p68
      $region22: #{cna_forward.3} parent=15 // pred_check_branch
        %136 = sbr.rel (%p134) target = $region24
      $region23: #{cna_forward.3} parent=15 // pred_region
        %p137 = scmp.lt.s32.totalorder %s15, 1
        %s138 = scalar_select %p137, %s15, 1
        %s139 = smul.addr %s138, 8
        %s140 = smul.addr %s139, 8
        %s141 = scalar_lea.vmem %s1, %s140
      $region24: #{cna_forward.3} parent=15 // pred_fallthru
        _
    $region16: #{cna_forward.3} parent=5 // pred_fallthru
      _
    %p142 = scmp.le.s32.totalorder 1, %s8
    %p143 = scmp.lt.s32.totalorder %s8, 3
    %p144 = pnand %p142, %p143
    %p145 = pneg %p144
    // Predicated region
    $region25: #{cna_forward.3} parent=5 // pred_check
      _
    $region26: #{cna_forward.3} parent=5 // pred_check_branch
      %147 = sbr.rel (%p144) target = $region28
    $region27: #{cna_forward.3} parent=5 // pred_region
      %s148 = ssub.s32 %s8, 1
      %s149 = smul.u32 8, %s18
      %p150 = scmp.lt.s32.totalorder %s17, 1
      %s151 = scalar_select %p150, %s17, 1
      %p152 = scmp.lt.s32.totalorder %s149, 7
      %s153 = scalar_select %p152, %s149, 7
      %s154 = smul.addr %s151, 64
      %s155 = sadd.s32 %s153, %s154
      %s156 = smul.addr %s155, 4
      %s157 = scalar_lea.vmem %s0, %s156
      %p158 = pneg %p48
      %p159 = pneg %p45
      %p160 = scmp.lt.s32.totalorder %s17, 1
      %s161 = scalar_select %p160, %s17, 1
      %s162 = smul.addr %s161, 8
      %s163 = smul.addr %s162, 8
      %s164 = scalar_lea.vmem %s1, %s163
      %p165 = pneg %p74
      %p166 = pneg %p71
      %p167 = pneg %p102
      %p168 = pneg %p99
      %s169 = smul.u32 8, %s18
      %p170 = scmp.lt.s32.totalorder %s17, 1
      %s171 = scalar_select %p170, %s17, 1
      %p172 = scmp.lt.s32.totalorder %s169, 7
      %s173 = scalar_select %p172, %s169, 7
      %s174 = smul.addr %s171, 64
      %s175 = sadd.s32 %s173, %s174
      %s176 = smul.addr %s175, 8
      %s177 = scalar_lea.vmem %s2, %s176
      %s178 = smul.u32 8, %s18
      %p179 = scmp.lt.s32.totalorder %s17, 1
      %s180 = scalar_select %p179, %s17, 1
      %p181 = scmp.lt.s32.totalorder %s178, 7
      %s182 = scalar_select %p181, %s178, 7
      %s183 = smul.addr %s180, 64
      %s184 = sadd.s32 %s182, %s183
      %s185 = smul.addr %s184, 4
      %s186 = scalar_lea.vmem %s0, %s185
      %s187 = smul.u32 8, %s18
      %p188 = scmp.lt.s32.totalorder %s17, 1
      %s189 = scalar_select %p188, %s17, 1
      %s190 = smul.addr %s189, 8
      %s191 = smul.addr %s190, 8
      %s192 = scalar_lea.vmem %s1, %s191
      %s193 = smul.u32 8, %s18
      %p194 = scmp.lt.s32.totalorder %s17, 1
      %s195 = scalar_select %p194, %s17, 1
      %p196 = scmp.lt.s32.totalorder %s193, 7
      %s197 = scalar_select %p196, %s193, 7
      %s198 = smul.addr %s195, 64
      %s199 = sadd.s32 %s197, %s198
      %s200 = smul.addr %s199, 8
      %s201 = scalar_lea.vmem %s2, %s200
      %s202 = smul.u32 8, %s18
      %v203 = vld [vmem:[%s186] sm:$0xff]
      %v204 = vld [vmem:[%s186 + $0x8] sm:$0xff]
      %v205 = vld [vmem:[%s186 + $0x10] sm:$0xff]
      %v206 = vld [vmem:[%s186 + $0x18] sm:$0xff]
      %v207 = vld [vmem:[%s186 + $0x20] sm:$0xff]
      %v208 = vld [vmem:[%s186 + $0x28] sm:$0xff]
      %v209 = vld [vmem:[%s186 + $0x30] sm:$0xff]
      %v210 = vld [vmem:[%s186 + $0x38] sm:$0xff]
      %v211 = vld [vmem:[%s186 + $0x40] sm:$0xff]
      %v212 = vld [vmem:[%s186 + $0x48] sm:$0xff]
      %v213 = vld [vmem:[%s186 + $0x50] sm:$0xff]
      %v214 = vld [vmem:[%s186 + $0x58] sm:$0xff]
      %v215 = vld [vmem:[%s186 + $0x60] sm:$0xff]
      %v216 = vld [vmem:[%s186 + $0x68] sm:$0xff]
      %v217 = vld [vmem:[%s186 + $0x70] sm:$0xff]
      %v218 = vld [vmem:[%s186 + $0x78] sm:$0xff]
      %v219 = vld [vmem:[%s186 + $0x80] sm:$0xff]
      %v220 = vld [vmem:[%s186 + $0x88] sm:$0xff]
      %v221 = vld [vmem:[%s186 + $0x90] sm:$0xff]
      %v222 = vld [vmem:[%s186 + $0x98] sm:$0xff]
      %v223 = vld [vmem:[%s186 + $0xa0] sm:$0xff]
      %v224 = vld [vmem:[%s186 + $0xa8] sm:$0xff]
      %v225 = vld [vmem:[%s186 + $0xb0] sm:$0xff]
      %v226 = vld [vmem:[%s186 + $0xb8] sm:$0xff]
      %v227 = vld [vmem:[%s186 + $0xc0] sm:$0xff]
      %v228 = vld [vmem:[%s186 + $0xc8] sm:$0xff]
      %v229 = vld [vmem:[%s186 + $0xd0] sm:$0xff]
      %v230 = vld [vmem:[%s186 + $0xd8] sm:$0xff]
      %v231 = vld [vmem:[%s186 + $0xe0] sm:$0xff]
      %v232 = vld [vmem:[%s186 + $0xe8] sm:$0xff]
      %v233 = vld [vmem:[%s186 + $0xf0] sm:$0xff]
      %v234 = vld [vmem:[%s186 + $0xf8] sm:$0xff]
      %v235 = vunpack.c.l.bf16 %v203
      %v236 = vunpack.c.h.bf16 %v203
      %v237 = vunpack.c.l.bf16 %v204
      %v238 = vunpack.c.h.bf16 %v204
      %v239 = vunpack.c.l.bf16 %v205
      %v240 = vunpack.c.h.bf16 %v205
      %v241 = vunpack.c.l.bf16 %v206
      %v242 = vunpack.c.h.bf16 %v206
      %v243 = vunpack.c.l.bf16 %v207
      %v244 = vunpack.c.h.bf16 %v207
      %v245 = vunpack.c.l.bf16 %v208
      %v246 = vunpack.c.h.bf16 %v208
      %v247 = vunpack.c.l.bf16 %v209
      %v248 = vunpack.c.h.bf16 %v209
      %v249 = vunpack.c.l.bf16 %v210
      %v250 = vunpack.c.h.bf16 %v210
      %v251 = vunpack.c.l.bf16 %v211
      %v252 = vunpack.c.h.bf16 %v211
      %v253 = vunpack.c.l.bf16 %v212
      %v254 = vunpack.c.h.bf16 %v212
      %v255 = vunpack.c.l.bf16 %v213
      %v256 = vunpack.c.h.bf16 %v213
      %v257 = vunpack.c.l.bf16 %v214
      %v258 = vunpack.c.h.bf16 %v214
      %v259 = vunpack.c.l.bf16 %v215
      %v260 = vunpack.c.h.bf16 %v215
      %v261 = vunpack.c.l.bf16 %v216
      %v262 = vunpack.c.h.bf16 %v216
      %v263 = vunpack.c.l.bf16 %v217
      %v264 = vunpack.c.h.bf16 %v217
      %v265 = vunpack.c.l.bf16 %v218
      %v266 = vunpack.c.h.bf16 %v218
      %v267 = vunpack.c.l.bf16 %v219
      %v268 = vunpack.c.h.bf16 %v219
      %v269 = vunpack.c.l.bf16 %v220
      %v270 = vunpack.c.h.bf16 %v220
      %v271 = vunpack.c.l.bf16 %v221
      %v272 = vunpack.c.h.bf16 %v221
      %v273 = vunpack.c.l.bf16 %v222
      %v274 = vunpack.c.h.bf16 %v222
      %v275 = vunpack.c.l.bf16 %v223
      %v276 = vunpack.c.h.bf16 %v223
      %v277 = vunpack.c.l.bf16 %v224
      %v278 = vunpack.c.h.bf16 %v224
      %v279 = vunpack.c.l.bf16 %v225
      %v280 = vunpack.c.h.bf16 %v225
      %v281 = vunpack.c.l.bf16 %v226
      %v282 = vunpack.c.h.bf16 %v226
      %v283 = vunpack.c.l.bf16 %v227
      %v284 = vunpack.c.h.bf16 %v227
      %v285 = vunpack.c.l.bf16 %v228
      %v286 = vunpack.c.h.bf16 %v228
      %v287 = vunpack.c.l.bf16 %v229
      %v288 = vunpack.c.h.bf16 %v229
      %v289 = vunpack.c.l.bf16 %v230
      %v290 = vunpack.c.h.bf16 %v230
      %v291 = vunpack.c.l.bf16 %v231
      %v292 = vunpack.c.h.bf16 %v231
      %v293 = vunpack.c.l.bf16 %v232
      %v294 = vunpack.c.h.bf16 %v232
      %v295 = vunpack.c.l.bf16 %v233
      %v296 = vunpack.c.h.bf16 %v233
      %v297 = vunpack.c.l.bf16 %v234
      %v298 = vunpack.c.h.bf16 %v234
      %v299 = vld [vmem:[%s192] sm:$0xff]
      %v300 = vld [vmem:[%s192 + $0x8] sm:$0xff]
      %v301 = vld [vmem:[%s192 + $0x10] sm:$0xff]
      %v302 = vld [vmem:[%s192 + $0x18] sm:$0xff]
      %v303 = vld [vmem:[%s192 + $0x20] sm:$0xff]
      %v304 = vld [vmem:[%s192 + $0x28] sm:$0xff]
      %v305 = vld [vmem:[%s192 + $0x30] sm:$0xff]
      %v306 = vld [vmem:[%s192 + $0x38] sm:$0xff]
      %308 = vset.pattern.permute.xlu0 0
      %309 = vperm.xlu0 %308, %v299
      %v310 = vpop.permute.xlu0 %309
      %313 = vset.pattern.permute.xlu0 0
      %314 = vperm.xlu0 %313, %v300
      %v315 = vpop.permute.xlu0 %314
      %318 = vset.pattern.permute.xlu0 0
      %319 = vperm.xlu0 %318, %v301
      %v320 = vpop.permute.xlu0 %319
      %323 = vset.pattern.permute.xlu0 0
      %324 = vperm.xlu0 %323, %v302
      %v325 = vpop.permute.xlu0 %324
      %328 = vset.pattern.permute.xlu0 0
      %329 = vperm.xlu0 %328, %v303
      %v330 = vpop.permute.xlu0 %329
      %333 = vset.pattern.permute.xlu0 0
      %334 = vperm.xlu0 %333, %v304
      %v335 = vpop.permute.xlu0 %334
      %338 = vset.pattern.permute.xlu0 0
      %339 = vperm.xlu0 %338, %v305
      %v340 = vpop.permute.xlu0 %339
      %343 = vset.pattern.permute.xlu0 0
      %344 = vperm.xlu0 %343, %v306
      %v345 = vpop.permute.xlu0 %344
      %v347 = vmul.f32 %v235, %v310
      %v348 = vmul.f32 %v236, %v310
      %v349 = vmul.f32 %v237, %v310
      %v350 = vmul.f32 %v238, %v310
      %v351 = vmul.f32 %v239, %v310
      %v352 = vmul.f32 %v240, %v310
      %v353 = vmul.f32 %v241, %v310
      %v354 = vmul.f32 %v242, %v310
      %v355 = vmul.f32 %v243, %v315
      %v356 = vmul.f32 %v244, %v315
      %v357 = vmul.f32 %v245, %v315
      %v358 = vmul.f32 %v246, %v315
      %v359 = vmul.f32 %v247, %v315
      %v360 = vmul.f32 %v248, %v315
      %v361 = vmul.f32 %v249, %v315
      %v362 = vmul.f32 %v250, %v315
      %v363 = vmul.f32 %v251, %v320
      %v364 = vmul.f32 %v252, %v320
      %v365 = vmul.f32 %v253, %v320
      %v366 = vmul.f32 %v254, %v320
      %v367 = vmul.f32 %v255, %v320
      %v368 = vmul.f32 %v256, %v320
      %v369 = vmul.f32 %v257, %v320
      %v370 = vmul.f32 %v258, %v320
      %v371 = vmul.f32 %v259, %v325
      %v372 = vmul.f32 %v260, %v325
      %v373 = vmul.f32 %v261, %v325
      %v374 = vmul.f32 %v262, %v325
      %v375 = vmul.f32 %v263, %v325
      %v376 = vmul.f32 %v264, %v325
      %v377 = vmul.f32 %v265, %v325
      %v378 = vmul.f32 %v266, %v325
      %v379 = vmul.f32 %v267, %v330
      %v380 = vmul.f32 %v268, %v330
      %v381 = vmul.f32 %v269, %v330
      %v382 = vmul.f32 %v270, %v330
      %v383 = vmul.f32 %v271, %v330
      %v384 = vmul.f32 %v272, %v330
      %v385 = vmul.f32 %v273, %v330
      %v386 = vmul.f32 %v274, %v330
      %v387 = vmul.f32 %v275, %v335
      %v388 = vmul.f32 %v276, %v335
      %v389 = vmul.f32 %v277, %v335
      %v390 = vmul.f32 %v278, %v335
      %v391 = vmul.f32 %v279, %v335
      %v392 = vmul.f32 %v280, %v335
      %v393 = vmul.f32 %v281, %v335
      %v394 = vmul.f32 %v282, %v335
      %v395 = vmul.f32 %v283, %v340
      %v396 = vmul.f32 %v284, %v340
      %v397 = vmul.f32 %v285, %v340
      %v398 = vmul.f32 %v286, %v340
      %v399 = vmul.f32 %v287, %v340
      %v400 = vmul.f32 %v288, %v340
      %v401 = vmul.f32 %v289, %v340
      %v402 = vmul.f32 %v290, %v340
      %v403 = vmul.f32 %v291, %v345
      %v404 = vmul.f32 %v292, %v345
      %v405 = vmul.f32 %v293, %v345
      %v406 = vmul.f32 %v294, %v345
      %v407 = vmul.f32 %v295, %v345
      %v408 = vmul.f32 %v296, %v345
      %v409 = vmul.f32 %v297, %v345
      %v410 = vmul.f32 %v298, %v345
      %411 = vset.pattern.permute.xlu0 1
      %412 = vperm.xlu0 %411, %v299
      %v413 = vpop.permute.xlu0 %412
      %415 = vset.pattern.permute.xlu0 1
      %416 = vperm.xlu0 %415, %v300
      %v417 = vpop.permute.xlu0 %416
      %419 = vset.pattern.permute.xlu0 1
      %420 = vperm.xlu0 %419, %v301
      %v421 = vpop.permute.xlu0 %420
      %423 = vset.pattern.permute.xlu0 1
      %424 = vperm.xlu0 %423, %v302
      %v425 = vpop.permute.xlu0 %424
      %427 = vset.pattern.permute.xlu0 1
      %428 = vperm.xlu0 %427, %v303
      %v429 = vpop.permute.xlu0 %428
      %431 = vset.pattern.permute.xlu0 1
      %432 = vperm.xlu0 %431, %v304
      %v433 = vpop.permute.xlu0 %432
      %435 = vset.pattern.permute.xlu0 1
      %436 = vperm.xlu0 %435, %v305
      %v437 = vpop.permute.xlu0 %436
      %439 = vset.pattern.permute.xlu0 1
      %440 = vperm.xlu0 %439, %v306
      %v441 = vpop.permute.xlu0 %440
      %v443 = vadd.f32 %v347, %v413
      %v444 = vadd.f32 %v348, %v413
      %v445 = vadd.f32 %v349, %v413
      %v446 = vadd.f32 %v350, %v413
      %v447 = vadd.f32 %v351, %v413
      %v448 = vadd.f32 %v352, %v413
      %v449 = vadd.f32 %v353, %v413
      %v450 = vadd.f32 %v354, %v413
      %v451 = vadd.f32 %v355, %v417
      %v452 = vadd.f32 %v356, %v417
      %v453 = vadd.f32 %v357, %v417
      %v454 = vadd.f32 %v358, %v417
      %v455 = vadd.f32 %v359, %v417
      %v456 = vadd.f32 %v360, %v417
      %v457 = vadd.f32 %v361, %v417
      %v458 = vadd.f32 %v362, %v417
      %v459 = vadd.f32 %v363, %v421
      %v460 = vadd.f32 %v364, %v421
      %v461 = vadd.f32 %v365, %v421
      %v462 = vadd.f32 %v366, %v421
      %v463 = vadd.f32 %v367, %v421
      %v464 = vadd.f32 %v368, %v421
      %v465 = vadd.f32 %v369, %v421
      %v466 = vadd.f32 %v370, %v421
      %v467 = vadd.f32 %v371, %v425
      %v468 = vadd.f32 %v372, %v425
      %v469 = vadd.f32 %v373, %v425
      %v470 = vadd.f32 %v374, %v425
      %v471 = vadd.f32 %v375, %v425
      %v472 = vadd.f32 %v376, %v425
      %v473 = vadd.f32 %v377, %v425
      %v474 = vadd.f32 %v378, %v425
      %v475 = vadd.f32 %v379, %v429
      %v476 = vadd.f32 %v380, %v429
      %v477 = vadd.f32 %v381, %v429
      %v478 = vadd.f32 %v382, %v429
      %v479 = vadd.f32 %v383, %v429
      %v480 = vadd.f32 %v384, %v429
      %v481 = vadd.f32 %v385, %v429
      %v482 = vadd.f32 %v386, %v429
      %v483 = vadd.f32 %v387, %v433
      %v484 = vadd.f32 %v388, %v433
      %v485 = vadd.f32 %v389, %v433
      %v486 = vadd.f32 %v390, %v433
      %v487 = vadd.f32 %v391, %v433
      %v488 = vadd.f32 %v392, %v433
      %v489 = vadd.f32 %v393, %v433
      %v490 = vadd.f32 %v394, %v433
      %v491 = vadd.f32 %v395, %v437
      %v492 = vadd.f32 %v396, %v437
      %v493 = vadd.f32 %v397, %v437
      %v494 = vadd.f32 %v398, %v437
      %v495 = vadd.f32 %v399, %v437
      %v496 = vadd.f32 %v400, %v437
      %v497 = vadd.f32 %v401, %v437
      %v498 = vadd.f32 %v402, %v437
      %v499 = vadd.f32 %v403, %v441
      %v500 = vadd.f32 %v404, %v441
      %v501 = vadd.f32 %v405, %v441
      %v502 = vadd.f32 %v406, %v441
      %v503 = vadd.f32 %v407, %v441
      %v504 = vadd.f32 %v408, %v441
      %v505 = vadd.f32 %v409, %v441
      %v506 = vadd.f32 %v410, %v441
      %v507 = vxor.u32 %v443, 2147483648
      %v508 = vxor.u32 %v444, 2147483648
      %v509 = vxor.u32 %v445, 2147483648
      %v510 = vxor.u32 %v446, 2147483648
      %v511 = vxor.u32 %v447, 2147483648
      %v512 = vxor.u32 %v448, 2147483648
      %v513 = vxor.u32 %v449, 2147483648
      %v514 = vxor.u32 %v450, 2147483648
      %v515 = vxor.u32 %v451, 2147483648
      %v516 = vxor.u32 %v452, 2147483648
      %v517 = vxor.u32 %v453, 2147483648
      %v518 = vxor.u32 %v454, 2147483648
      %v519 = vxor.u32 %v455, 2147483648
      %v520 = vxor.u32 %v456, 2147483648
      %v521 = vxor.u32 %v457, 2147483648
      %v522 = vxor.u32 %v458, 2147483648
      %v523 = vxor.u32 %v459, 2147483648
      %v524 = vxor.u32 %v460, 2147483648
      %v525 = vxor.u32 %v461, 2147483648
      %v526 = vxor.u32 %v462, 2147483648
      %v527 = vxor.u32 %v463, 2147483648
      %v528 = vxor.u32 %v464, 2147483648
      %v529 = vxor.u32 %v465, 2147483648
      %v530 = vxor.u32 %v466, 2147483648
      %v531 = vxor.u32 %v467, 2147483648
      %v532 = vxor.u32 %v468, 2147483648
      %v533 = vxor.u32 %v469, 2147483648
      %v534 = vxor.u32 %v470, 2147483648
      %v535 = vxor.u32 %v471, 2147483648
      %v536 = vxor.u32 %v472, 2147483648
      %v537 = vxor.u32 %v473, 2147483648
      %v538 = vxor.u32 %v474, 2147483648
      %v539 = vxor.u32 %v475, 2147483648
      %v540 = vxor.u32 %v476, 2147483648
      %v541 = vxor.u32 %v477, 2147483648
      %v542 = vxor.u32 %v478, 2147483648
      %v543 = vxor.u32 %v479, 2147483648
      %v544 = vxor.u32 %v480, 2147483648
      %v545 = vxor.u32 %v481, 2147483648
      %v546 = vxor.u32 %v482, 2147483648
      %v547 = vxor.u32 %v483, 2147483648
      %v548 = vxor.u32 %v484, 2147483648
      %v549 = vxor.u32 %v485, 2147483648
      %v550 = vxor.u32 %v486, 2147483648
      %v551 = vxor.u32 %v487, 2147483648
      %v552 = vxor.u32 %v488, 2147483648
      %v553 = vxor.u32 %v489, 2147483648
      %v554 = vxor.u32 %v490, 2147483648
      %v555 = vxor.u32 %v491, 2147483648
      %v556 = vxor.u32 %v492, 2147483648
      %v557 = vxor.u32 %v493, 2147483648
      %v558 = vxor.u32 %v494, 2147483648
      %v559 = vxor.u32 %v495, 2147483648
      %v560 = vxor.u32 %v496, 2147483648
      %v561 = vxor.u32 %v497, 2147483648
      %v562 = vxor.u32 %v498, 2147483648
      %v563 = vxor.u32 %v499, 2147483648
      %v564 = vxor.u32 %v500, 2147483648
      %v565 = vxor.u32 %v501, 2147483648
      %v566 = vxor.u32 %v502, 2147483648
      %v567 = vxor.u32 %v503, 2147483648
      %v568 = vxor.u32 %v504, 2147483648
      %v569 = vxor.u32 %v505, 2147483648
      %v570 = vxor.u32 %v506, 2147483648
      %v571 = vmul.f32 %v507, 1.442695
      %v572 = vpow.pop %v571
      %v573 = vmul.f32 %v508, 1.442695
      %v574 = vpow.pop %v573
      %v575 = vmul.f32 %v509, 1.442695
      %v576 = vpow.pop %v575
      %v577 = vmul.f32 %v510, 1.442695
      %v578 = vpow.pop %v577
      %v579 = vmul.f32 %v511, 1.442695
      %v580 = vpow.pop %v579
      %v581 = vmul.f32 %v512, 1.442695
      %v582 = vpow.pop %v581
      %v583 = vmul.f32 %v513, 1.442695
      %v584 = vpow.pop %v583
      %v585 = vmul.f32 %v514, 1.442695
      %v586 = vpow.pop %v585
      %v587 = vmul.f32 %v515, 1.442695
      %v588 = vpow.pop %v587
      %v589 = vmul.f32 %v516, 1.442695
      %v590 = vpow.pop %v589
      %v591 = vmul.f32 %v517, 1.442695
      %v592 = vpow.pop %v591
      %v593 = vmul.f32 %v518, 1.442695
      %v594 = vpow.pop %v593
      %v595 = vmul.f32 %v519, 1.442695
      %v596 = vpow.pop %v595
      %v597 = vmul.f32 %v520, 1.442695
      %v598 = vpow.pop %v597
      %v599 = vmul.f32 %v521, 1.442695
      %v600 = vpow.pop %v599
      %v601 = vmul.f32 %v522, 1.442695
      %v602 = vpow.pop %v601
      %v603 = vmul.f32 %v523, 1.442695
      %v604 = vpow.pop %v603
      %v605 = vmul.f32 %v524, 1.442695
      %v606 = vpow.pop %v605
      %v607 = vmul.f32 %v525, 1.442695
      %v608 = vpow.pop %v607
      %v609 = vmul.f32 %v526, 1.442695
      %v610 = vpow.pop %v609
      %v611 = vmul.f32 %v527, 1.442695
      %v612 = vpow.pop %v611
      %v613 = vmul.f32 %v528, 1.442695
      %v614 = vpow.pop %v613
      %v615 = vmul.f32 %v529, 1.442695
      %v616 = vpow.pop %v615
      %v617 = vmul.f32 %v530, 1.442695
      %v618 = vpow.pop %v617
      %v619 = vmul.f32 %v531, 1.442695
      %v620 = vpow.pop %v619
      %v621 = vmul.f32 %v532, 1.442695
      %v622 = vpow.pop %v621
      %v623 = vmul.f32 %v533, 1.442695
      %v624 = vpow.pop %v623
      %v625 = vmul.f32 %v534, 1.442695
      %v626 = vpow.pop %v625
      %v627 = vmul.f32 %v535, 1.442695
      %v628 = vpow.pop %v627
      %v629 = vmul.f32 %v536, 1.442695
      %v630 = vpow.pop %v629
      %v631 = vmul.f32 %v537, 1.442695
      %v632 = vpow.pop %v631
      %v633 = vmul.f32 %v538, 1.442695
      %v634 = vpow.pop %v633
      %v635 = vmul.f32 %v539, 1.442695
      %v636 = vpow.pop %v635
      %v637 = vmul.f32 %v540, 1.442695
      %v638 = vpow.pop %v637
      %v639 = vmul.f32 %v541, 1.442695
      %v640 = vpow.pop %v639
      %v641 = vmul.f32 %v542, 1.442695
      %v642 = vpow.pop %v641
      %v643 = vmul.f32 %v543, 1.442695
      %v644 = vpow.pop %v643
      %v645 = vmul.f32 %v544, 1.442695
      %v646 = vpow.pop %v645
      %v647 = vmul.f32 %v545, 1.442695
      %v648 = vpow.pop %v647
      %v649 = vmul.f32 %v546, 1.442695
      %v650 = vpow.pop %v649
      %v651 = vmul.f32 %v547, 1.442695
      %v652 = vpow.pop %v651
      %v653 = vmul.f32 %v548, 1.442695
      %v654 = vpow.pop %v653
      %v655 = vmul.f32 %v549, 1.442695
      %v656 = vpow.pop %v655
      %v657 = vmul.f32 %v550, 1.442695
      %v658 = vpow.pop %v657
      %v659 = vmul.f32 %v551, 1.442695
      %v660 = vpow.pop %v659
      %v661 = vmul.f32 %v552, 1.442695
      %v662 = vpow.pop %v661
      %v663 = vmul.f32 %v553, 1.442695
      %v664 = vpow.pop %v663
      %v665 = vmul.f32 %v554, 1.442695
      %v666 = vpow.pop %v665
      %v667 = vmul.f32 %v555, 1.442695
      %v668 = vpow.pop %v667
      %v669 = vmul.f32 %v556, 1.442695
      %v670 = vpow.pop %v669
      %v671 = vmul.f32 %v557, 1.442695
      %v672 = vpow.pop %v671
      %v673 = vmul.f32 %v558, 1.442695
      %v674 = vpow.pop %v673
      %v675 = vmul.f32 %v559, 1.442695
      %v676 = vpow.pop %v675
      %v677 = vmul.f32 %v560, 1.442695
      %v678 = vpow.pop %v677
      %v679 = vmul.f32 %v561, 1.442695
      %v680 = vpow.pop %v679
      %v681 = vmul.f32 %v562, 1.442695
      %v682 = vpow.pop %v681
      %v683 = vmul.f32 %v563, 1.442695
      %v684 = vpow.pop %v683
      %v685 = vmul.f32 %v564, 1.442695
      %v686 = vpow.pop %v685
      %v687 = vmul.f32 %v565, 1.442695
      %v688 = vpow.pop %v687
      %v689 = vmul.f32 %v566, 1.442695
      %v690 = vpow.pop %v689
      %v691 = vmul.f32 %v567, 1.442695
      %v692 = vpow.pop %v691
      %v693 = vmul.f32 %v568, 1.442695
      %v694 = vpow.pop %v693
      %v695 = vmul.f32 %v569, 1.442695
      %v696 = vpow.pop %v695
      %v697 = vmul.f32 %v570, 1.442695
      %v698 = vpow.pop %v697
      %v699 = vadd.f32 %v572, 1.0
      %v700 = vadd.f32 %v574, 1.0
      %v701 = vadd.f32 %v576, 1.0
      %v702 = vadd.f32 %v578, 1.0
      %v703 = vadd.f32 %v580, 1.0
      %v704 = vadd.f32 %v582, 1.0
      %v705 = vadd.f32 %v584, 1.0
      %v706 = vadd.f32 %v586, 1.0
      %v707 = vadd.f32 %v588, 1.0
      %v708 = vadd.f32 %v590, 1.0
      %v709 = vadd.f32 %v592, 1.0
      %v710 = vadd.f32 %v594, 1.0
      %v711 = vadd.f32 %v596, 1.0
      %v712 = vadd.f32 %v598, 1.0
      %v713 = vadd.f32 %v600, 1.0
      %v714 = vadd.f32 %v602, 1.0
      %v715 = vadd.f32 %v604, 1.0
      %v716 = vadd.f32 %v606, 1.0
      %v717 = vadd.f32 %v608, 1.0
      %v718 = vadd.f32 %v610, 1.0
      %v719 = vadd.f32 %v612, 1.0
      %v720 = vadd.f32 %v614, 1.0
      %v721 = vadd.f32 %v616, 1.0
      %v722 = vadd.f32 %v618, 1.0
      %v723 = vadd.f32 %v620, 1.0
      %v724 = vadd.f32 %v622, 1.0
      %v725 = vadd.f32 %v624, 1.0
      %v726 = vadd.f32 %v626, 1.0
      %v727 = vadd.f32 %v628, 1.0
      %v728 = vadd.f32 %v630, 1.0
      %v729 = vadd.f32 %v632, 1.0
      %v730 = vadd.f32 %v634, 1.0
      %v731 = vadd.f32 %v636, 1.0
      %v732 = vadd.f32 %v638, 1.0
      %v733 = vadd.f32 %v640, 1.0
      %v734 = vadd.f32 %v642, 1.0
      %v735 = vadd.f32 %v644, 1.0
      %v736 = vadd.f32 %v646, 1.0
      %v737 = vadd.f32 %v648, 1.0
      %v738 = vadd.f32 %v650, 1.0
      %v739 = vadd.f32 %v652, 1.0
      %v740 = vadd.f32 %v654, 1.0
      %v741 = vadd.f32 %v656, 1.0
      %v742 = vadd.f32 %v658, 1.0
      %v743 = vadd.f32 %v660, 1.0
      %v744 = vadd.f32 %v662, 1.0
      %v745 = vadd.f32 %v664, 1.0
      %v746 = vadd.f32 %v666, 1.0
      %v747 = vadd.f32 %v668, 1.0
      %v748 = vadd.f32 %v670, 1.0
      %v749 = vadd.f32 %v672, 1.0
      %v750 = vadd.f32 %v674, 1.0
      %v751 = vadd.f32 %v676, 1.0
      %v752 = vadd.f32 %v678, 1.0
      %v753 = vadd.f32 %v680, 1.0
      %v754 = vadd.f32 %v682, 1.0
      %v755 = vadd.f32 %v684, 1.0
      %v756 = vadd.f32 %v686, 1.0
      %v757 = vadd.f32 %v688, 1.0
      %v758 = vadd.f32 %v690, 1.0
      %v759 = vadd.f32 %v692, 1.0
      %v760 = vadd.f32 %v694, 1.0
      %v761 = vadd.f32 %v696, 1.0
      %v762 = vadd.f32 %v698, 1.0
      %v763 = vrcp.pop %v699
      %v764 = vmul.f32 1.0, %v763
      %v765 = vrcp.pop %v700
      %v766 = vmul.f32 1.0, %v765
      %v767 = vrcp.pop %v701
      %v768 = vmul.f32 1.0, %v767
      %v769 = vrcp.pop %v702
      %v770 = vmul.f32 1.0, %v769
      %v771 = vrcp.pop %v703
      %v772 = vmul.f32 1.0, %v771
      %v773 = vrcp.pop %v704
      %v774 = vmul.f32 1.0, %v773
      %v775 = vrcp.pop %v705
      %v776 = vmul.f32 1.0, %v775
      %v777 = vrcp.pop %v706
      %v778 = vmul.f32 1.0, %v777
      %v779 = vrcp.pop %v707
      %v780 = vmul.f32 1.0, %v779
      %v781 = vrcp.pop %v708
      %v782 = vmul.f32 1.0, %v781
      %v783 = vrcp.pop %v709
      %v784 = vmul.f32 1.0, %v783
      %v785 = vrcp.pop %v710
      %v786 = vmul.f32 1.0, %v785
      %v787 = vrcp.pop %v711
      %v788 = vmul.f32 1.0, %v787
      %v789 = vrcp.pop %v712
      %v790 = vmul.f32 1.0, %v789
      %v791 = vrcp.pop %v713
      %v792 = vmul.f32 1.0, %v791
      %v793 = vrcp.pop %v714
      %v794 = vmul.f32 1.0, %v793
      %v795 = vrcp.pop %v715
      %v796 = vmul.f32 1.0, %v795
      %v797 = vrcp.pop %v716
      %v798 = vmul.f32 1.0, %v797
      %v799 = vrcp.pop %v717
      %v800 = vmul.f32 1.0, %v799
      %v801 = vrcp.pop %v718
      %v802 = vmul.f32 1.0, %v801
      %v803 = vrcp.pop %v719
      %v804 = vmul.f32 1.0, %v803
      %v805 = vrcp.pop %v720
      %v806 = vmul.f32 1.0, %v805
      %v807 = vrcp.pop %v721
      %v808 = vmul.f32 1.0, %v807
      %v809 = vrcp.pop %v722
      %v810 = vmul.f32 1.0, %v809
      %v811 = vrcp.pop %v723
      %v812 = vmul.f32 1.0, %v811
      %v813 = vrcp.pop %v724
      %v814 = vmul.f32 1.0, %v813
      %v815 = vrcp.pop %v725
      %v816 = vmul.f32 1.0, %v815
      %v817 = vrcp.pop %v726
      %v818 = vmul.f32 1.0, %v817
      %v819 = vrcp.pop %v727
      %v820 = vmul.f32 1.0, %v819
      %v821 = vrcp.pop %v728
      %v822 = vmul.f32 1.0, %v821
      %v823 = vrcp.pop %v729
      %v824 = vmul.f32 1.0, %v823
      %v825 = vrcp.pop %v730
      %v826 = vmul.f32 1.0, %v825
      %v827 = vrcp.pop %v731
      %v828 = vmul.f32 1.0, %v827
      %v829 = vrcp.pop %v732
      %v830 = vmul.f32 1.0, %v829
      %v831 = vrcp.pop %v733
      %v832 = vmul.f32 1.0, %v831
      %v833 = vrcp.pop %v734
      %v834 = vmul.f32 1.0, %v833
      %v835 = vrcp.pop %v735
      %v836 = vmul.f32 1.0, %v835
      %v837 = vrcp.pop %v736
      %v838 = vmul.f32 1.0, %v837
      %v839 = vrcp.pop %v737
      %v840 = vmul.f32 1.0, %v839
      %v841 = vrcp.pop %v738
      %v842 = vmul.f32 1.0, %v841
      %v843 = vrcp.pop %v739
      %v844 = vmul.f32 1.0, %v843
      %v845 = vrcp.pop %v740
      %v846 = vmul.f32 1.0, %v845
      %v847 = vrcp.pop %v741
      %v848 = vmul.f32 1.0, %v847
      %v849 = vrcp.pop %v742
      %v850 = vmul.f32 1.0, %v849
      %v851 = vrcp.pop %v743
      %v852 = vmul.f32 1.0, %v851
      %v853 = vrcp.pop %v744
      %v854 = vmul.f32 1.0, %v853
      %v855 = vrcp.pop %v745
      %v856 = vmul.f32 1.0, %v855
      %v857 = vrcp.pop %v746
      %v858 = vmul.f32 1.0, %v857
      %v859 = vrcp.pop %v747
      %v860 = vmul.f32 1.0, %v859
      %v861 = vrcp.pop %v748
      %v862 = vmul.f32 1.0, %v861
      %v863 = vrcp.pop %v749
      %v864 = vmul.f32 1.0, %v863
      %v865 = vrcp.pop %v750
      %v866 = vmul.f32 1.0, %v865
      %v867 = vrcp.pop %v751
      %v868 = vmul.f32 1.0, %v867
      %v869 = vrcp.pop %v752
      %v870 = vmul.f32 1.0, %v869
      %v871 = vrcp.pop %v753
      %v872 = vmul.f32 1.0, %v871
      %v873 = vrcp.pop %v754
      %v874 = vmul.f32 1.0, %v873
      %v875 = vrcp.pop %v755
      %v876 = vmul.f32 1.0, %v875
      %v877 = vrcp.pop %v756
      %v878 = vmul.f32 1.0, %v877
      %v879 = vrcp.pop %v757
      %v880 = vmul.f32 1.0, %v879
      %v881 = vrcp.pop %v758
      %v882 = vmul.f32 1.0, %v881
      %v883 = vrcp.pop %v759
      %v884 = vmul.f32 1.0, %v883
      %v885 = vrcp.pop %v760
      %v886 = vmul.f32 1.0, %v885
      %v887 = vrcp.pop %v761
      %v888 = vmul.f32 1.0, %v887
      %v889 = vrcp.pop %v762
      %v890 = vmul.f32 1.0, %v889
      %v891 = vmul.f32 %v443, %v764
      %v892 = vmul.f32 %v444, %v766
      %v893 = vmul.f32 %v445, %v768
      %v894 = vmul.f32 %v446, %v770
      %v895 = vmul.f32 %v447, %v772
      %v896 = vmul.f32 %v448, %v774
      %v897 = vmul.f32 %v449, %v776
      %v898 = vmul.f32 %v450, %v778
      %v899 = vmul.f32 %v451, %v780
      %v900 = vmul.f32 %v452, %v782
      %v901 = vmul.f32 %v453, %v784
      %v902 = vmul.f32 %v454, %v786
      %v903 = vmul.f32 %v455, %v788
      %v904 = vmul.f32 %v456, %v790
      %v905 = vmul.f32 %v457, %v792
      %v906 = vmul.f32 %v458, %v794
      %v907 = vmul.f32 %v459, %v796
      %v908 = vmul.f32 %v460, %v798
      %v909 = vmul.f32 %v461, %v800
      %v910 = vmul.f32 %v462, %v802
      %v911 = vmul.f32 %v463, %v804
      %v912 = vmul.f32 %v464, %v806
      %v913 = vmul.f32 %v465, %v808
      %v914 = vmul.f32 %v466, %v810
      %v915 = vmul.f32 %v467, %v812
      %v916 = vmul.f32 %v468, %v814
      %v917 = vmul.f32 %v469, %v816
      %v918 = vmul.f32 %v470, %v818
      %v919 = vmul.f32 %v471, %v820
      %v920 = vmul.f32 %v472, %v822
      %v921 = vmul.f32 %v473, %v824
      %v922 = vmul.f32 %v474, %v826
      %v923 = vmul.f32 %v475, %v828
      %v924 = vmul.f32 %v476, %v830
      %v925 = vmul.f32 %v477, %v832
      %v926 = vmul.f32 %v478, %v834
      %v927 = vmul.f32 %v479, %v836
      %v928 = vmul.f32 %v480, %v838
      %v929 = vmul.f32 %v481, %v840
      %v930 = vmul.f32 %v482, %v842
      %v931 = vmul.f32 %v483, %v844
      %v932 = vmul.f32 %v484, %v846
      %v933 = vmul.f32 %v485, %v848
      %v934 = vmul.f32 %v486, %v850
      %v935 = vmul.f32 %v487, %v852
      %v936 = vmul.f32 %v488, %v854
      %v937 = vmul.f32 %v489, %v856
      %v938 = vmul.f32 %v490, %v858
      %v939 = vmul.f32 %v491, %v860
      %v940 = vmul.f32 %v492, %v862
      %v941 = vmul.f32 %v493, %v864
      %v942 = vmul.f32 %v494, %v866
      %v943 = vmul.f32 %v495, %v868
      %v944 = vmul.f32 %v496, %v870
      %v945 = vmul.f32 %v497, %v872
      %v946 = vmul.f32 %v498, %v874
      %v947 = vmul.f32 %v499, %v876
      %v948 = vmul.f32 %v500, %v878
      %v949 = vmul.f32 %v501, %v880
      %v950 = vmul.f32 %v502, %v882
      %v951 = vmul.f32 %v503, %v884
      %v952 = vmul.f32 %v504, %v886
      %v953 = vmul.f32 %v505, %v888
      %v954 = vmul.f32 %v506, %v890
      %955 = vst [vmem:[%s201] sm:$0xff] %v891
      %956 = vst [vmem:[%s201 + $0x8] sm:$0xff] %v892
      %957 = vst [vmem:[%s201 + $0x10] sm:$0xff] %v893
      %958 = vst [vmem:[%s201 + $0x18] sm:$0xff] %v894
      %959 = vst [vmem:[%s201 + $0x20] sm:$0xff] %v895
      %960 = vst [vmem:[%s201 + $0x28] sm:$0xff] %v896
      %961 = vst [vmem:[%s201 + $0x30] sm:$0xff] %v897
      %962 = vst [vmem:[%s201 + $0x38] sm:$0xff] %v898
      %963 = vst [vmem:[%s201 + $0x40] sm:$0xff] %v899
      %964 = vst [vmem:[%s201 + $0x48] sm:$0xff] %v900
      %965 = vst [vmem:[%s201 + $0x50] sm:$0xff] %v901
      %966 = vst [vmem:[%s201 + $0x58] sm:$0xff] %v902
      %967 = vst [vmem:[%s201 + $0x60] sm:$0xff] %v903
      %968 = vst [vmem:[%s201 + $0x68] sm:$0xff] %v904
      %969 = vst [vmem:[%s201 + $0x70] sm:$0xff] %v905
      %970 = vst [vmem:[%s201 + $0x78] sm:$0xff] %v906
      %971 = vst [vmem:[%s201 + $0x80] sm:$0xff] %v907
      %972 = vst [vmem:[%s201 + $0x88] sm:$0xff] %v908
      %973 = vst [vmem:[%s201 + $0x90] sm:$0xff] %v909
      %974 = vst [vmem:[%s201 + $0x98] sm:$0xff] %v910
      %975 = vst [vmem:[%s201 + $0xa0] sm:$0xff] %v911
      %976 = vst [vmem:[%s201 + $0xa8] sm:$0xff] %v912
      %977 = vst [vmem:[%s201 + $0xb0] sm:$0xff] %v913
      %978 = vst [vmem:[%s201 + $0xb8] sm:$0xff] %v914
      %979 = vst [vmem:[%s201 + $0xc0] sm:$0xff] %v915
      %980 = vst [vmem:[%s201 + $0xc8] sm:$0xff] %v916
      %981 = vst [vmem:[%s201 + $0xd0] sm:$0xff] %v917
      %982 = vst [vmem:[%s201 + $0xd8] sm:$0xff] %v918
      %983 = vst [vmem:[%s201 + $0xe0] sm:$0xff] %v919
      %984 = vst [vmem:[%s201 + $0xe8] sm:$0xff] %v920
      %985 = vst [vmem:[%s201 + $0xf0] sm:$0xff] %v921
      %986 = vst [vmem:[%s201 + $0xf8] sm:$0xff] %v922
      %987 = vst [vmem:[%s201 + $0x100] sm:$0xff] %v923
      %988 = vst [vmem:[%s201 + $0x108] sm:$0xff] %v924
      %989 = vst [vmem:[%s201 + $0x110] sm:$0xff] %v925
      %990 = vst [vmem:[%s201 + $0x118] sm:$0xff] %v926
      %991 = vst [vmem:[%s201 + $0x120] sm:$0xff] %v927
      %992 = vst [vmem:[%s201 + $0x128] sm:$0xff] %v928
      %993 = vst [vmem:[%s201 + $0x130] sm:$0xff] %v929
      %994 = vst [vmem:[%s201 + $0x138] sm:$0xff] %v930
      %995 = vst [vmem:[%s201 + $0x140] sm:$0xff] %v931
      %996 = vst [vmem:[%s201 + $0x148] sm:$0xff] %v932
      %997 = vst [vmem:[%s201 + $0x150] sm:$0xff] %v933
      %998 = vst [vmem:[%s201 + $0x158] sm:$0xff] %v934
      %999 = vst [vmem:[%s201 + $0x160] sm:$0xff] %v935
      %1000 = vst [vmem:[%s201 + $0x168] sm:$0xff] %v936
      %1001 = vst [vmem:[%s201 + $0x170] sm:$0xff] %v937
      %1002 = vst [vmem:[%s201 + $0x178] sm:$0xff] %v938
      %1003 = vst [vmem:[%s201 + $0x180] sm:$0xff] %v939
      %1004 = vst [vmem:[%s201 + $0x188] sm:$0xff] %v940
      %1005 = vst [vmem:[%s201 + $0x190] sm:$0xff] %v941
      %1006 = vst [vmem:[%s201 + $0x198] sm:$0xff] %v942
      %1007 = vst [vmem:[%s201 + $0x1a0] sm:$0xff] %v943
      %1008 = vst [vmem:[%s201 + $0x1a8] sm:$0xff] %v944
      %1009 = vst [vmem:[%s201 + $0x1b0] sm:$0xff] %v945
      %1010 = vst [vmem:[%s201 + $0x1b8] sm:$0xff] %v946
      %1011 = vst [vmem:[%s201 + $0x1c0] sm:$0xff] %v947
      %1012 = vst [vmem:[%s201 + $0x1c8] sm:$0xff] %v948
      %1013 = vst [vmem:[%s201 + $0x1d0] sm:$0xff] %v949
      %1014 = vst [vmem:[%s201 + $0x1d8] sm:$0xff] %v950
      %1015 = vst [vmem:[%s201 + $0x1e0] sm:$0xff] %v951
      %1016 = vst [vmem:[%s201 + $0x1e8] sm:$0xff] %v952
      %1017 = vst [vmem:[%s201 + $0x1f0] sm:$0xff] %v953
      %1018 = vst [vmem:[%s201 + $0x1f8] sm:$0xff] %v954
      %s1019 = smul.u32 8, %s18
      %p1020 = scmp.lt.s32.totalorder %s17, 1
      %s1021 = scalar_select %p1020, %s17, 1
      %p1022 = scmp.lt.s32.totalorder %s1019, 7
      %s1023 = scalar_select %p1022, %s1019, 7
      %s1024 = smul.addr %s1021, 64
      %s1025 = sadd.s32 %s1023, %s1024
      %s1026 = smul.addr %s1025, 8
      %s1027 = scalar_lea.vmem %s2, %s1026
      // Predicated region
      $region29: #{cna_forward.3} parent=27 // pred_check
        %p1028 = pneg %p99
      $region30: #{cna_forward.3} parent=27 // pred_check_branch
        %1030 = sbr.rel (%p1028) target = $region32
      $region31: #{cna_forward.3} parent=27 // pred_region
        %s1031 = smul.u32 8, %s18
      $region32: #{cna_forward.3} parent=27 // pred_fallthru
        _
    $region28: #{cna_forward.3} parent=5 // pred_fallthru
      _
    %p1032 = scmp.le.s32.totalorder 2, %s8
    // Predicated region
    $region33: #{cna_forward.3} parent=5 // pred_check
      %p1033 = pneg %p1032
    $region34: #{cna_forward.3} parent=5 // pred_check_branch
      %1035 = sbr.rel (%p1033) target = $region36
    $region35: #{cna_forward.3} parent=5 // pred_region
      %s1036 = ssub.s32 %s8, 2
      // Predicated region
      $region37: #{cna_forward.3} parent=35 // pred_check
        %p1037 = pneg %p105
      $region38: #{cna_forward.3} parent=35 // pred_check_branch
        %1039 = sbr.rel (%p1037) target = $region40
      $region39: #{cna_forward.3} parent=35 // pred_region
        %s1040 = smul.u32 8, %s20
        %p1041 = scmp.lt.s32.totalorder %s19, 1
        %s1042 = scalar_select %p1041, %s19, 1
        %p1043 = scmp.lt.s32.totalorder %s1040, 7
        %s1044 = scalar_select %p1043, %s1040, 7
        %s1045 = smul.addr %s1042, 64
        %s1046 = sadd.s32 %s1044, %s1045
        %s1047 = smul.addr %s1046, 8
        %s1048 = scalar_lea.vmem %s2, %s1047
      $region40: #{cna_forward.3} parent=35 // pred_fallthru
        _
    $region36: #{cna_forward.3} parent=5 // pred_fallthru
      _
  $region6: #{cna_forward.3} parent=0 // loop_footer
    %s12 = sadd.s32 1, %s8
  $region7: #{cna_forward.3} parent=0 // loop_footer_branch
    %7 = sbr.rel target = $region3
  $region8: #{cna_forward.3} parent=0 // loop_exit
    _

// kernel: cna_forward.2
$region0: #{cna_forward.2}
  #allocation0 [shape = 'u32[]', space=smem, size = 0x4, offset = 0x4, fixed_abs, tag = 'smem constant byte address 0x4 - core index']
  #allocation1 [shape = 'u32[144,128]{1,0:T(1,128)}', space=vmem, size = 0x12000, scoped, tag = 'internal scratch']
  #allocation2 [shape = 'bf16[2,16,768]{2,1,0:T(16,128)(2,1)}', space=vmem, size = 0xc000, scoped, tag = 'scratch operand']
  #allocation3 [shape = 's32[2]{0}', space=sflag, size = 0x8, scoped, tag = 'scratch operand']
  #allocation4 [shape = 'bf16[432,512]{1,0:T(16,128)(2,1)}', space=vmem, size = 0x6c000, scoped, tag = 'scratch operand']
  #allocation5 [shape = 'f32[64,1]{1,0:T(8,128)}', space=vmem, size = 0x8000, scoped, tag = 'scratch operand']
  #allocation6 [shape = 'f32[64,1]{1,0:T(8,128)}', space=vmem, size = 0x8000, scoped, tag = 'scratch operand']
  #allocation8 [shape = 's32[]', space=sflag, size = 0x4, offset = 0, fixed_abs, tag = 'sflag constant byte address 0x0 - dummy sync flag']
  #allocation9 [shape = 's32[]', space=sflag, size = 0x4, offset = 0, fixed_abs, tag = 'sflag constant byte address 0x0 - dummy sync flag']
  %s0 = inlined_call_operand.vmem [shape: bf16[2,16,1280], index: 0, kind: input, shape index: {}]
  %s1 = inlined_call_operand.vmem [shape: bf16[64,432], index: 1, kind: input, shape index: {}]
  %s2 = inlined_call_operand.vmem [shape: f32[64,1], index: 2, kind: input, shape index: {}]
  %s3 = inlined_call_operand.vmem [shape: f32[64,1], index: 3, kind: input, shape index: {}]
  %s4 = inlined_call_operand.vmem [shape: f32[64,1], index: 4, kind: input, shape index: {}]
  %s5 = inlined_call_operand.vmem [shape: f32[1,1024], index: 5, kind: input, shape index: {}]
  %s6 = inlined_call_operand.vmem [shape: f32[32,64], index: 6, kind: input, shape index: {}]
  %s7 = inlined_call_operand.vmem [shape: f32[64,32], index: 7, kind: input, shape index: {}]
  %s8 = inlined_call_operand.vmem [shape: bf16[2,64,1024], index: 8, kind: output, shape index: {0}]
  %s9 = inlined_call_operand.vmem [shape: f32[2,64,2], index: 9, kind: output, shape index: {1}]
  %10 = xla_tuple %s8, %s9
  %s11 = sld [smem:[#allocation0]]
  $region178: #{cna_forward.2} parent=0
    _
  %s13 = ssub.s32 1, %s11
  %s14 = scalar_select 0, %s13, %s11
  $region1: #{cna_forward.2} parent=0
    #allocation7 [shape = 'u8[131072]{0}', space=vmem, size = 0x20000, scoped, tag = 'output window, operand 0']
    loop: start=0, step=1, limit=6
    $region2: #{cna_forward.2} parent=1 // loop_pre_header
      _
    $region3: #{cna_forward.2} parent=1 // loop_header
      %s16 = sphi 0, %s20
      %p17 = scmp.ge.s32.totalorder %s16, 6
      %s23 = sphi 0, %s35
      %s24 = sphi 0, %s31
      %s25 = sphi 0, %s23
      %s26 = sphi 0, %s24
      %s27 = sphi 0, %s25
      %s28 = sphi 0, %s26
      %s36 = sphi 0, %s36
      %s38 = sphi 0, %s36
      %s39 = sphi 0, %s38
      %s53 = sphi 0, %s39
      %s57 = sphi 0, %s57
      %s59 = sphi 0, %s57
      %s60 = sphi 0, %s59
      %s74 = sphi 0, %s60
      %s78 = sphi 0, %s78
      %s80 = sphi 0, %s78
      %s81 = sphi 0, %s80
      %s95 = sphi 0, %s81
      %s99 = sphi 0, %s99
      %s101 = sphi 0, %s99
      %s102 = sphi 0, %s101
      %s116 = sphi 0, %s102
      %s122 = sphi 0, %s124
      %s125 = sphi 0, %s122
      %s126 = sphi 0, %s125
      %s142 = sphi 0, %s126
      %s146 = sphi 0, %s146
      %s148 = sphi 0, %s146
      %s149 = sphi 0, %s148
      %s163 = sphi 0, %s149
      %s167 = sphi 0, %s167
      %s169 = sphi 0, %s167
      %s170 = sphi 0, %s169
      %s184 = sphi 0, %s170
      %s192 = sphi 0, %s194
      %s195 = sphi 0, %s192
      %s196 = sphi 0, %s195
      %s212 = sphi 0, %s196
      %s218 = sphi 0, %s220
      %s221 = sphi 0, %s218
      %s222 = sphi 0, %s221
      %s238 = sphi 0, %s222
    $region4: #{cna_forward.2} parent=1 // loop_header_branch
      %19 = sbr.rel (%p17) target = $region8
    $region5: #{cna_forward.2} parent=1 // loop_body
      %s21 = ssub.s32 %s16, 1
      %s22 = ssub.s32 %s16, 2
      %s29 = sadd.s32 1, %s24
      %p30 = scmp.ge.s32.totalorder %s29, 2
      %s31 = scalar_select %p30, 0, %s29
      %s32 = sadd.s32 1, %s23
      %s33 = scalar_select %p30, %s32, %s23
      %p34 = scmp.ge.s32.totalorder %s33, 2
      %s35 = scalar_select %p34, 0, %s33
      %s37 = sadd.s32 %s36, 1
      %p40 = scmp.eq.s32.totalorder %s16, 3
      %p41 = scmp.ne.s32.totalorder %s36, %s38
      %p42 = scmp.eq.s32.totalorder %s16, 0
      %p43 = por %p41, %p42
      %p44 = scmp.ne.s32.totalorder %s36, %s38
      %p45 = scmp.eq.s32.totalorder %s21, 3
      %p46 = por %p44, %p45
      %p47 = scmp.ne.s32.totalorder %s38, %s39
      %p48 = scmp.eq.s32.totalorder %s21, 0
      %p49 = por %p47, %p48
      %p50 = scmp.ne.s32.totalorder %s38, %s39
      %p51 = scmp.eq.s32.totalorder %s22, 3
      %p52 = por %p50, %p51
      %p54 = scmp.ne.s32.totalorder %s39, %s53
      %p55 = scmp.eq.s32.totalorder %s22, 0
      %p56 = por %p54, %p55
      %s58 = sadd.s32 %s57, 1
      %p61 = scmp.eq.s32.totalorder %s16, 3
      %p62 = scmp.ne.s32.totalorder %s57, %s59
      %p63 = scmp.eq.s32.totalorder %s16, 0
      %p64 = por %p62, %p63
      %p65 = scmp.ne.s32.totalorder %s57, %s59
      %p66 = scmp.eq.s32.totalorder %s21, 3
      %p67 = por %p65, %p66
      %p68 = scmp.ne.s32.totalorder %s59, %s60
      %p69 = scmp.eq.s32.totalorder %s21, 0
      %p70 = por %p68, %p69
      %p71 = scmp.ne.s32.totalorder %s59, %s60
      %p72 = scmp.eq.s32.totalorder %s22, 3
      %p73 = por %p71, %p72
      %p75 = scmp.ne.s32.totalorder %s60, %s74
      %p76 = scmp.eq.s32.totalorder %s22, 0
      %p77 = por %p75, %p76
      %s79 = sadd.s32 %s78, 1
      %p82 = scmp.eq.s32.totalorder %s16, 3
      %p83 = scmp.ne.s32.totalorder %s78, %s80
      %p84 = scmp.eq.s32.totalorder %s16, 0
      %p85 = por %p83, %p84
      %p86 = scmp.ne.s32.totalorder %s78, %s80
      %p87 = scmp.eq.s32.totalorder %s21, 3
      %p88 = por %p86, %p87
      %p89 = scmp.ne.s32.totalorder %s80, %s81
      %p90 = scmp.eq.s32.totalorder %s21, 0
      %p91 = por %p89, %p90
      %p92 = scmp.ne.s32.totalorder %s80, %s81
      %p93 = scmp.eq.s32.totalorder %s22, 3
      %p94 = por %p92, %p93
      %p96 = scmp.ne.s32.totalorder %s81, %s95
      %p97 = scmp.eq.s32.totalorder %s22, 0
      %p98 = por %p96, %p97
      %s100 = sadd.s32 %s99, 1
      %p103 = scmp.eq.s32.totalorder %s16, 3
      %p104 = scmp.ne.s32.totalorder %s99, %s101
      %p105 = scmp.eq.s32.totalorder %s16, 0
      %p106 = por %p104, %p105
      %p107 = scmp.ne.s32.totalorder %s99, %s101
      %p108 = scmp.eq.s32.totalorder %s21, 3
      %p109 = por %p107, %p108
      %p110 = scmp.ne.s32.totalorder %s101, %s102
      %p111 = scmp.eq.s32.totalorder %s21, 0
      %p112 = por %p110, %p111
      %p113 = scmp.ne.s32.totalorder %s101, %s102
      %p114 = scmp.eq.s32.totalorder %s22, 3
      %p115 = por %p113, %p114
      %p117 = scmp.ne.s32.totalorder %s102, %s116
      %p118 = scmp.eq.s32.totalorder %s22, 0
      %p119 = por %p117, %p118
      %s120 = ssub.s32 %s24, %s31
      %p121 = scmp.eq.s32.totalorder %s120, 0
      %s123 = sadd.s32 %s122, 1
      %s124 = scalar_select %p121, %s122, %s123
      %p127 = pneg %p121
      %p128 = scmp.eq.s32.totalorder %s16, 3
      %p129 = por %p127, %p128
      %p130 = scmp.ne.s32.totalorder %s122, %s125
      %p131 = scmp.eq.s32.totalorder %s16, 0
      %p132 = por %p130, %p131
      %p133 = scmp.ne.s32.totalorder %s122, %s125
      %p134 = scmp.eq.s32.totalorder %s21, 3
      %p135 = por %p133, %p134
      %p136 = scmp.ne.s32.totalorder %s125, %s126
      %p137 = scmp.eq.s32.totalorder %s21, 0
      %p138 = por %p136, %p137
      %p139 = scmp.ne.s32.totalorder %s125, %s126
      %p140 = scmp.eq.s32.totalorder %s22, 3
      %p141 = por %p139, %p140
      %p143 = scmp.ne.s32.totalorder %s126, %s142
      %p144 = scmp.eq.s32.totalorder %s22, 0
      %p145 = por %p143, %p144
      %s147 = sadd.s32 %s146, 1
      %p150 = scmp.eq.s32.totalorder %s16, 3
      %p151 = scmp.ne.s32.totalorder %s146, %s148
      %p152 = scmp.eq.s32.totalorder %s16, 0
      %p153 = por %p151, %p152
      %p154 = scmp.ne.s32.totalorder %s146, %s148
      %p155 = scmp.eq.s32.totalorder %s21, 3
      %p156 = por %p154, %p155
      %p157 = scmp.ne.s32.totalorder %s148, %s149
      %p158 = scmp.eq.s32.totalorder %s21, 0
      %p159 = por %p157, %p158
      %p160 = scmp.ne.s32.totalorder %s148, %s149
      %p161 = scmp.eq.s32.totalorder %s22, 3
      %p162 = por %p160, %p161
      %p164 = scmp.ne.s32.totalorder %s149, %s163
      %p165 = scmp.eq.s32.totalorder %s22, 0
      %p166 = por %p164, %p165
      %s168 = sadd.s32 %s167, 1
      %p171 = scmp.eq.s32.totalorder %s16, 3
      %p172 = scmp.ne.s32.totalorder %s167, %s169
      %p173 = scmp.eq.s32.totalorder %s16, 0
      %p174 = por %p172, %p173
      %p175 = scmp.ne.s32.totalorder %s167, %s169
      %p176 = scmp.eq.s32.totalorder %s21, 3
      %p177 = por %p175, %p176
      %p178 = scmp.ne.s32.totalorder %s169, %s170
      %p179 = scmp.eq.s32.totalorder %s21, 0
      %p180 = por %p178, %p179
      %p181 = scmp.ne.s32.totalorder %s169, %s170
      %p182 = scmp.eq.s32.totalorder %s22, 3
      %p183 = por %p181, %p182
      %p185 = scmp.ne.s32.totalorder %s170, %s184
      %p186 = scmp.eq.s32.totalorder %s22, 0
      %p187 = por %p185, %p186
      %s188 = ssub.s32 %s23, %s35
      %s189 = ssub.s32 %s24, %s31
      %s190 = sor.u32 %s188, %s189
      %p191 = scmp.eq.s32.totalorder %s190, 0
      %s193 = sadd.s32 %s192, 1
      %s194 = scalar_select %p191, %s192, %s193
      %p197 = pneg %p191
      %p198 = scmp.eq.s32.totalorder %s16, 3
      %p199 = por %p197, %p198
      %p200 = scmp.ne.s32.totalorder %s192, %s195
      %p201 = scmp.eq.s32.totalorder %s16, 0
      %p202 = por %p200, %p201
      %p203 = scmp.ne.s32.totalorder %s192, %s195
      %p204 = scmp.eq.s32.totalorder %s21, 3
      %p205 = por %p203, %p204
      %p206 = scmp.ne.s32.totalorder %s195, %s196
      %p207 = scmp.eq.s32.totalorder %s21, 0
      %p208 = por %p206, %p207
      %p209 = scmp.ne.s32.totalorder %s195, %s196
      %p210 = scmp.eq.s32.totalorder %s22, 3
      %p211 = por %p209, %p210
      %p213 = scmp.ne.s32.totalorder %s196, %s212
      %p214 = scmp.eq.s32.totalorder %s22, 0
      %p215 = por %p213, %p214
      %s216 = ssub.s32 %s23, %s35
      %p217 = scmp.eq.s32.totalorder %s216, 0
      %s219 = sadd.s32 %s218, 1
      %s220 = scalar_select %p217, %s218, %s219
      %p223 = pneg %p217
      %p224 = scmp.eq.s32.totalorder %s16, 3
      %p225 = por %p223, %p224
      %p226 = scmp.ne.s32.totalorder %s218, %s221
      %p227 = scmp.eq.s32.totalorder %s16, 0
      %p228 = por %p226, %p227
      %p229 = scmp.ne.s32.totalorder %s218, %s221
      %p230 = scmp.eq.s32.totalorder %s21, 3
      %p231 = por %p229, %p230
      %p232 = scmp.ne.s32.totalorder %s221, %s222
      %p233 = scmp.eq.s32.totalorder %s21, 0
      %p234 = por %p232, %p233
      %p235 = scmp.ne.s32.totalorder %s221, %s222
      %p236 = scmp.eq.s32.totalorder %s22, 3
      %p237 = por %p235, %p236
      %p239 = scmp.ne.s32.totalorder %s222, %s238
      %p240 = scmp.eq.s32.totalorder %s22, 0
      %p241 = por %p239, %p240
      %p242 = scmp.le.s32.totalorder 1, %s16
      %p243 = scmp.lt.s32.totalorder %s16, 5
      %p244 = pnand %p242, %p243
      %p245 = pneg %p244
      // Predicated region
      $region9: #{cna_forward.2} parent=5 // pred_check
        _
      $region10: #{cna_forward.2} parent=5 // pred_check_branch
        %247 = sbr.rel (%p244) target = $region12
      $region11: #{cna_forward.2} parent=5 // pred_region
        %s248 = ssub.s32 %s16, 1
        // Predicated region
        $region13: #{cna_forward.2} parent=11 // pred_check
          %p249 = pneg %p49
        $region14: #{cna_forward.2} parent=11 // pred_check_branch
          %251 = sbr.rel (%p249) target = $region16
        $region15: #{cna_forward.2} parent=11 // pred_region
          _
        $region16: #{cna_forward.2} parent=11 // pred_fallthru
          _
        // Predicated region
        $region17: #{cna_forward.2} parent=11 // pred_check
          %p252 = pneg %p70
        $region18: #{cna_forward.2} parent=11 // pred_check_branch
          %254 = sbr.rel (%p252) target = $region20
        $region19: #{cna_forward.2} parent=11 // pred_region
          _
        $region20: #{cna_forward.2} parent=11 // pred_fallthru
          _
        // Predicated region
        $region21: #{cna_forward.2} parent=11 // pred_check
          %p255 = pneg %p91
        $region22: #{cna_forward.2} parent=11 // pred_check_branch
          %257 = sbr.rel (%p255) target = $region24
        $region23: #{cna_forward.2} parent=11 // pred_region
          _
        $region24: #{cna_forward.2} parent=11 // pred_fallthru
          _
        // Predicated region
        $region25: #{cna_forward.2} parent=11 // pred_check
          %p258 = pneg %p112
        $region26: #{cna_forward.2} parent=11 // pred_check_branch
          %260 = sbr.rel (%p258) target = $region28
        $region27: #{cna_forward.2} parent=11 // pred_region
          _
        $region28: #{cna_forward.2} parent=11 // pred_fallthru
          _
        // Predicated region
        $region29: #{cna_forward.2} parent=11 // pred_check
          %p261 = pneg %p159
        $region30: #{cna_forward.2} parent=11 // pred_check_branch
          %263 = sbr.rel (%p261) target = $region32
        $region31: #{cna_forward.2} parent=11 // pred_region
          _
        $region32: #{cna_forward.2} parent=11 // pred_fallthru
          _
        // Predicated region
        $region33: #{cna_forward.2} parent=11 // pred_check
          %p264 = pneg %p180
        $region34: #{cna_forward.2} parent=11 // pred_check_branch
          %266 = sbr.rel (%p264) target = $region36
        $region35: #{cna_forward.2} parent=11 // pred_region
          _
        $region36: #{cna_forward.2} parent=11 // pred_fallthru
          _
      $region12: #{cna_forward.2} parent=5 // pred_fallthru
        _
      %p267 = scmp.lt.s32.totalorder %s16, 4
      // Predicated region
      $region37: #{cna_forward.2} parent=5 // pred_check
        %p268 = pneg %p267
      $region38: #{cna_forward.2} parent=5 // pred_check_branch
        %270 = sbr.rel (%p268) target = $region40
      $region39: #{cna_forward.2} parent=5 // pred_region
        // Predicated region
        $region41: #{cna_forward.2} parent=39 // pred_check
          %p271 = pneg %p132
        $region42: #{cna_forward.2} parent=39 // pred_check_branch
          %273 = sbr.rel (%p271) target = $region44
        $region43: #{cna_forward.2} parent=39 // pred_region
          %s274 = smul.u32 4, %s24
          %p275 = scmp.lt.s32.totalorder %s274, 7
          %s276 = scalar_select %p275, %s274, 7
          %s277 = scalar_lea.vmem %s5, %s276
          %s278 = smul.u32 4, %s24
        $region44: #{cna_forward.2} parent=39 // pred_fallthru
          _
      $region40: #{cna_forward.2} parent=5 // pred_fallthru
        _
      %p279 = scmp.le.s32.totalorder 1, %s16
      %p280 = scmp.lt.s32.totalorder %s16, 5
      %p281 = pnand %p279, %p280
      %p282 = pneg %p281
      // Predicated region
      $region45: #{cna_forward.2} parent=5 // pred_check
        _
      $region46: #{cna_forward.2} parent=5 // pred_check_branch
        %284 = sbr.rel (%p281) target = $region48
      $region47: #{cna_forward.2} parent=5 // pred_region
        %s285 = ssub.s32 %s16, 1
        %p286 = pneg %p49
        %p287 = pneg %p46
        %p288 = pneg %p70
        %p289 = pneg %p67
        %p290 = pneg %p91
        %p291 = pneg %p88
        %p292 = pneg %p112
        %p293 = pneg %p109
        %s294 = smul.u32 4, %s26
        %p295 = scmp.lt.s32.totalorder %s294, 7
        %s296 = scalar_select %p295, %s294, 7
        %s297 = scalar_lea.vmem %s5, %s296
        %p298 = pneg %p138
        %p299 = pneg %p135
        %p300 = pneg %p159
        %p301 = pneg %p156
        %p302 = pneg %p180
        %p303 = pneg %p177
        %p304 = pneg %p208
        %p305 = pneg %p205
        %s306 = sand.u32 %s195, 1
        %s307 = sand.u32 %s195, 1
        %s308 = smul.addr %s307, 128
        %s309 = scalar_lea.vmem [#allocation7], %s308
        %p310 = pneg %p234
        %p311 = pneg %p231
        %p312 = scmp.lt.s32.totalorder %s25, 1
        %s313 = scalar_select %p312, %s25, 1
        %s314 = smul.addr %s313, 8
        %s315 = smul.addr %s314, 8
        %s316 = scalar_lea.vmem %s9, %s315
        %s317 = smul.u32 4, %s26
        %p318 = scmp.lt.s32.totalorder %s317, 7
        %s319 = scalar_select %p318, %s317, 7
        %s320 = scalar_lea.vmem %s5, %s319
        %s321 = smul.u32 4, %s26
        %s322 = smul.u32 4, %s26
        %p323 = scmp.lt.s32.totalorder %s25, 1
        %s324 = scalar_select %p323, %s25, 1
        %s325 = smul.addr %s324, 8
        %s326 = smul.addr %s325, 8
        %s327 = scalar_lea.vmem %s9, %s326
        %s329 = smul.u32 %s25, 2
        %s330 = sadd.s32 %s329, %s26
        %s331 = sand.u32 %s330, 1
        %p332 = scmp.eq.s32.totalorder %s330, 0
        // Predicated region
        $region49: #{cna_forward.2} parent=47 // pred_check
          %p333 = pneg %p332
        $region50: #{cna_forward.2} parent=47 // pred_check_branch
          %335 = sbr.rel (%p333) target = $region52
        $region51: #{cna_forward.2} parent=47 // pred_region
          %s336 = smul.u32 %s25, 20
          %s337 = smul.addr %s336, 4
          %s338 = scalar_lea.vmem %s0, %s337
          %p340 = scmp.lt.u32.totalorder 4, 8
          %p341 = pneg %p340
          // Predicated region
          $region53: #{cna_forward.2} parent=51 // pred_check
            _
          $region54: #{cna_forward.2} parent=51 // pred_check_branch
            %343 = sbr.rel (%p340) target = $region56
          $region55: #{cna_forward.2} parent=51 // pred_region
            %s380 = sand.u32 4, 7
            %p381 = scmp.eq.s32.totalorder %s380, 0
            %p382 = pneg %p381
            // Predicated region
            $region68: #{cna_forward.2} parent=55 // pred_check
              _
            $region69: #{cna_forward.2} parent=55 // pred_check_branch
              %384 = sbr.rel (%p381) target = $region71
            $region70: #{cna_forward.2} parent=55 // pred_region
              %s385 = sand.u32 4, 7
              %s386 = ssub.s32 4, %s385
              %s387 = scalar_lea.vmem %s338, %s386
              %s388 = ssub.s32 4, %s385
              %s389 = scalar_lea.vmem [#allocation2], %s388
              loop: start=0, step=1, limit=1
              $region72: #{cna_forward.2} parent=70 // loop_pre_header
                _
              $region73: #{cna_forward.2} parent=70 // loop_header
                %s391 = sphi 0, %s395
                %p392 = scmp.ge.s32.totalorder %s391, 1
                %s396 = sphi %s338, %s338
                %s397 = sphi [#allocation2], [#allocation2]
              $region74: #{cna_forward.2} parent=70 // loop_header_branch
                %394 = sbr.rel (%p392) target = $region78
              $region75: #{cna_forward.2} parent=70 // loop_body
                _
              $region76: #{cna_forward.2} parent=70 // loop_footer
                %s395 = sadd.s32 1, %s391
              $region77: #{cna_forward.2} parent=70 // loop_footer_branch
                %390 = sbr.rel target = $region73
              $region78: #{cna_forward.2} parent=70 // loop_exit
                _
              %s398 = sshllo.u32 0, %s385
              loop: start=0, step=1, limit=1
              $region79: #{cna_forward.2} parent=70 // loop_pre_header
                _
              $region80: #{cna_forward.2} parent=70 // loop_header
                %s400 = sphi 0, %s404
                %p401 = scmp.ge.s32.totalorder %s400, 1
                %s405 = sphi %s387, %s387
                %s406 = sphi %s389, %s389
              $region81: #{cna_forward.2} parent=70 // loop_header_branch
                %403 = sbr.rel (%p401) target = $region85
              $region82: #{cna_forward.2} parent=70 // loop_body
                %v407 = vld [vmem:[%s405] sm:%s398]
                %408 = vst [vmem:[%s406] sm:%s398] %v407
                %v409 = vld [vmem:[%s405 + $0x28] sm:%s398]
                %410 = vst [vmem:[%s406 + $0x4] sm:%s398] %v409
                %v411 = vld [vmem:[%s405 + $0x4] sm:%s398]
                %412 = vst [vmem:[%s406 + $0x8] sm:%s398] %v411
                %v413 = vld [vmem:[%s405 + $0x2c] sm:%s398]
                %414 = vst [vmem:[%s406 + $0xc] sm:%s398] %v413
                %v415 = vld [vmem:[%s405 + $0x8] sm:%s398]
                %416 = vst [vmem:[%s406 + $0x10] sm:%s398] %v415
                %v417 = vld [vmem:[%s405 + $0x30] sm:%s398]
                %418 = vst [vmem:[%s406 + $0x14] sm:%s398] %v417
                %v419 = vld [vmem:[%s405 + $0xc] sm:%s398]
                %420 = vst [vmem:[%s406 + $0x18] sm:%s398] %v419
                %v421 = vld [vmem:[%s405 + $0x34] sm:%s398]
                %422 = vst [vmem:[%s406 + $0x1c] sm:%s398] %v421
                %v423 = vld [vmem:[%s405 + $0x10] sm:%s398]
                %424 = vst [vmem:[%s406 + $0x20] sm:%s398] %v423
                %v425 = vld [vmem:[%s405 + $0x38] sm:%s398]
                %426 = vst [vmem:[%s406 + $0x24] sm:%s398] %v425
                %v427 = vld [vmem:[%s405 + $0x14] sm:%s398]
                %428 = vst [vmem:[%s406 + $0x28] sm:%s398] %v427
                %v429 = vld [vmem:[%s405 + $0x3c] sm:%s398]
                %430 = vst [vmem:[%s406 + $0x2c] sm:%s398] %v429
              $region83: #{cna_forward.2} parent=70 // loop_footer
                %s404 = sadd.s32 1, %s400
              $region84: #{cna_forward.2} parent=70 // loop_footer_branch
                %399 = sbr.rel target = $region80
              $region85: #{cna_forward.2} parent=70 // loop_exit
                _
            $region71: #{cna_forward.2} parent=55 // pred_fallthru
              _
          $region56: #{cna_forward.2} parent=51 // pred_fallthru
            _
          // Predicated region
          $region57: #{cna_forward.2} parent=51 // pred_check
            %p344 = pneg %p340
          $region58: #{cna_forward.2} parent=51 // pred_check_branch
            %346 = sbr.rel (%p344) target = $region60
          $region59: #{cna_forward.2} parent=51 // pred_region
            %s347 = sshllo.u32 0, 4
            loop: start=0, step=1, limit=1
            $region61: #{cna_forward.2} parent=59 // loop_pre_header
              _
            $region62: #{cna_forward.2} parent=59 // loop_header
              %s349 = sphi 0, %s353
              %p350 = scmp.ge.s32.totalorder %s349, 1
              %s354 = sphi %s338, %s338
              %s355 = sphi [#allocation2], [#allocation2]
            $region63: #{cna_forward.2} parent=59 // loop_header_branch
              %352 = sbr.rel (%p350) target = $region67
            $region64: #{cna_forward.2} parent=59 // loop_body
              %v356 = vld [vmem:[%s354] sm:%s347]
              %357 = vst [vmem:[%s355] sm:%s347] %v356
              %v358 = vld [vmem:[%s354 + $0x28] sm:%s347]
              %359 = vst [vmem:[%s355 + $0x4] sm:%s347] %v358
              %v360 = vld [vmem:[%s354 + $0x4] sm:%s347]
              %361 = vst [vmem:[%s355 + $0x8] sm:%s347] %v360
              %v362 = vld [vmem:[%s354 + $0x2c] sm:%s347]
              %363 = vst [vmem:[%s355 + $0xc] sm:%s347] %v362
              %v364 = vld [vmem:[%s354 + $0x8] sm:%s347]
              %365 = vst [vmem:[%s355 + $0x10] sm:%s347] %v364
              %v366 = vld [vmem:[%s354 + $0x30] sm:%s347]
              %367 = vst [vmem:[%s355 + $0x14] sm:%s347] %v366
              %v368 = vld [vmem:[%s354 + $0xc] sm:%s347]
              %369 = vst [vmem:[%s355 + $0x18] sm:%s347] %v368
              %v370 = vld [vmem:[%s354 + $0x34] sm:%s347]
              %371 = vst [vmem:[%s355 + $0x1c] sm:%s347] %v370
              %v372 = vld [vmem:[%s354 + $0x10] sm:%s347]
              %373 = vst [vmem:[%s355 + $0x20] sm:%s347] %v372
              %v374 = vld [vmem:[%s354 + $0x38] sm:%s347]
              %375 = vst [vmem:[%s355 + $0x24] sm:%s347] %v374
              %v376 = vld [vmem:[%s354 + $0x14] sm:%s347]
              %377 = vst [vmem:[%s355 + $0x28] sm:%s347] %v376
              %v378 = vld [vmem:[%s354 + $0x3c] sm:%s347]
              %379 = vst [vmem:[%s355 + $0x2c] sm:%s347] %v378
            $region65: #{cna_forward.2} parent=59 // loop_footer
              %s353 = sadd.s32 1, %s349
            $region66: #{cna_forward.2} parent=59 // loop_footer_branch
              %348 = sbr.rel target = $region62
            $region67: #{cna_forward.2} parent=59 // loop_exit
              _
          $region60: #{cna_forward.2} parent=51 // pred_fallthru
            _
          // Predicated region
          $region86: #{cna_forward.2} parent=51 // pred_check
            _
          $region87: #{cna_forward.2} parent=51 // pred_check_branch
            %433 = sbr.rel (0) target = $region89
          $region88: #{cna_forward.2} parent=51 // pred_region
            %434 = vsyncadd [#allocation3], 768
          $region89: #{cna_forward.2} parent=51 // pred_fallthru
            _
        $region52: #{cna_forward.2} parent=47 // pred_fallthru
          _
        %p435 = scmp.eq.s32.totalorder %s26, 0
        // Predicated region
        $region90: #{cna_forward.2} parent=47 // pred_check
          %p436 = pneg %p435
        $region91: #{cna_forward.2} parent=47 // pred_check_branch
          %438 = sbr.rel (%p436) target = $region93
        $region92: #{cna_forward.2} parent=47 // pred_region
          %vm439 = vcmask 7168
          %440 = vst.msk [vmem:[#allocation5] sm:$0xff] %vm439, 0.0
          %441 = vst.msk [vmem:[#allocation5 + $0x8] sm:$0xff] %vm439, 0.0
          %442 = vst.msk [vmem:[#allocation5 + $0x10] sm:$0xff] %vm439, 0.0
          %443 = vst.msk [vmem:[#allocation5 + $0x18] sm:$0xff] %vm439, 0.0
          %444 = vst.msk [vmem:[#allocation5 + $0x20] sm:$0xff] %vm439, 0.0
          %445 = vst.msk [vmem:[#allocation5 + $0x28] sm:$0xff] %vm439, 0.0
          %446 = vst.msk [vmem:[#allocation5 + $0x30] sm:$0xff] %vm439, 0.0
          %447 = vst.msk [vmem:[#allocation5 + $0x38] sm:$0xff] %vm439, 0.0
          %448 = vst.msk [vmem:[#allocation6] sm:$0xff] %vm439, 0.0
          %449 = vst.msk [vmem:[#allocation6 + $0x8] sm:$0xff] %vm439, 0.0
          %450 = vst.msk [vmem:[#allocation6 + $0x10] sm:$0xff] %vm439, 0.0
          %451 = vst.msk [vmem:[#allocation6 + $0x18] sm:$0xff] %vm439, 0.0
          %452 = vst.msk [vmem:[#allocation6 + $0x20] sm:$0xff] %vm439, 0.0
          %453 = vst.msk [vmem:[#allocation6 + $0x28] sm:$0xff] %vm439, 0.0
          %454 = vst.msk [vmem:[#allocation6 + $0x30] sm:$0xff] %vm439, 0.0
          %455 = vst.msk [vmem:[#allocation6 + $0x38] sm:$0xff] %vm439, 0.0
        $region93: #{cna_forward.2} parent=47 // pred_fallthru
          _
        %s456 = smul.u32 %s26, 512
        %s457 = smul.u32 %s331, 6
        %s458 = smul.addr %s457, 8
        %s459 = scalar_lea.vmem [#allocation2], %s458
        %s460 = scalar_lea.sflag [#allocation3], %s331
        %s461 = smul.u32 4, 2
        %s462 = smul.u32 %s461, 6
        %s463 = sshll.u32 %s462, 4
        %464 = dma.done %s460, %s463
        %s465 = sadd.s32 %s330, 1
        %p466 = scmp.lt.s32.totalorder %s465, 4
        // Predicated region
        $region94: #{cna_forward.2} parent=47 // pred_check
          %p467 = pneg %p466
        $region95: #{cna_forward.2} parent=47 // pred_check_branch
          %469 = sbr.rel (%p467) target = $region97
        $region96: #{cna_forward.2} parent=47 // pred_region
          %s470 = sadd.s32 %s26, 1
          %p471 = scmp.eq.s32.totalorder %s470, 2
          %s472 = sadd.s32 %s25, 1
          %s473 = scalar_select %p471, %s472, %s25
          %s474 = scalar_select %p471, 0, %s470
          %s475 = smul.u32 %s474, 512
          %s476 = ssub.s32 1, %s331
          %s477 = sshra.s32 %s475, 7
          %s478 = sand.u32 %s475, 127
          %s479 = smul.u32 %s473, 20
          %s480 = sadd.s32 %s477, %s479
          %s481 = smul.addr %s480, 4
          %s482 = scalar_lea.vmem %s0, %s481
          %s483 = smul.u32 %s476, 6
          %s484 = smul.addr %s483, 8
          %s485 = scalar_lea.vmem [#allocation2], %s484
          %s486 = scalar_lea.sflag [#allocation3], %s476
          %p488 = scmp.lt.u32.totalorder 4, 8
          %p489 = pneg %p488
          // Predicated region
          $region98: #{cna_forward.2} parent=96 // pred_check
            _
          $region99: #{cna_forward.2} parent=96 // pred_check_branch
            %491 = sbr.rel (%p488) target = $region101
          $region100: #{cna_forward.2} parent=96 // pred_region
            %s528 = sand.u32 4, 7
            %p529 = scmp.eq.s32.totalorder %s528, 0
            %p530 = pneg %p529
            // Predicated region
            $region113: #{cna_forward.2} parent=100 // pred_check
              _
            $region114: #{cna_forward.2} parent=100 // pred_check_branch
              %532 = sbr.rel (%p529) target = $region116
            $region115: #{cna_forward.2} parent=100 // pred_region
              %s533 = sand.u32 4, 7
              %s534 = ssub.s32 4, %s533
              %s535 = scalar_lea.vmem %s482, %s534
              %s536 = ssub.s32 4, %s533
              %s537 = scalar_lea.vmem %s485, %s536 [#allocation2]
              loop: start=0, step=1, limit=1
              $region117: #{cna_forward.2} parent=115 // loop_pre_header
                _
              $region118: #{cna_forward.2} parent=115 // loop_header
                %s539 = sphi 0, %s543
                %p540 = scmp.ge.s32.totalorder %s539, 1
                %s544 = sphi %s482, %s482
                %s545 = sphi %s485, %s485
              $region119: #{cna_forward.2} parent=115 // loop_header_branch
                %542 = sbr.rel (%p540) target = $region123
              $region120: #{cna_forward.2} parent=115 // loop_body
                _
              $region121: #{cna_forward.2} parent=115 // loop_footer
                %s543 = sadd.s32 1, %s539
              $region122: #{cna_forward.2} parent=115 // loop_footer_branch
                %538 = sbr.rel target = $region118
              $region123: #{cna_forward.2} parent=115 // loop_exit
                _
              %s546 = sshllo.u32 0, %s533
              loop: start=0, step=1, limit=1
              $region124: #{cna_forward.2} parent=115 // loop_pre_header
                _
              $region125: #{cna_forward.2} parent=115 // loop_header
                %s548 = sphi 0, %s552
                %p549 = scmp.ge.s32.totalorder %s548, 1
                %s553 = sphi %s535, %s535
                %s554 = sphi %s537, %s537
              $region126: #{cna_forward.2} parent=115 // loop_header_branch
                %551 = sbr.rel (%p549) target = $region130
              $region127: #{cna_forward.2} parent=115 // loop_body
                %v555 = vld [vmem:[%s553] sm:%s546]
                %556 = vst [vmem:[%s554] sm:%s546] %v555
                %v557 = vld [vmem:[%s553 + $0x28] sm:%s546]
                %558 = vst [vmem:[%s554 + $0x4] sm:%s546] %v557
                %v559 = vld [vmem:[%s553 + $0x4] sm:%s546]
                %560 = vst [vmem:[%s554 + $0x8] sm:%s546] %v559
                %v561 = vld [vmem:[%s553 + $0x2c] sm:%s546]
                %562 = vst [vmem:[%s554 + $0xc] sm:%s546] %v561
                %v563 = vld [vmem:[%s553 + $0x8] sm:%s546]
                %564 = vst [vmem:[%s554 + $0x10] sm:%s546] %v563
                %v565 = vld [vmem:[%s553 + $0x30] sm:%s546]
                %566 = vst [vmem:[%s554 + $0x14] sm:%s546] %v565
                %v567 = vld [vmem:[%s553 + $0xc] sm:%s546]
                %568 = vst [vmem:[%s554 + $0x18] sm:%s546] %v567
                %v569 = vld [vmem:[%s553 + $0x34] sm:%s546]
                %570 = vst [vmem:[%s554 + $0x1c] sm:%s546] %v569
                %v571 = vld [vmem:[%s553 + $0x10] sm:%s546]
                %572 = vst [vmem:[%s554 + $0x20] sm:%s546] %v571
                %v573 = vld [vmem:[%s553 + $0x38] sm:%s546]
                %574 = vst [vmem:[%s554 + $0x24] sm:%s546] %v573
                %v575 = vld [vmem:[%s553 + $0x14] sm:%s546]
                %576 = vst [vmem:[%s554 + $0x28] sm:%s546] %v575
                %v577 = vld [vmem:[%s553 + $0x3c] sm:%s546]
                %578 = vst [vmem:[%s554 + $0x2c] sm:%s546] %v577
              $region128: #{cna_forward.2} parent=115 // loop_footer
                %s552 = sadd.s32 1, %s548
              $region129: #{cna_forward.2} parent=115 // loop_footer_branch
                %547 = sbr.rel target = $region125
              $region130: #{cna_forward.2} parent=115 // loop_exit
                _
            $region116: #{cna_forward.2} parent=100 // pred_fallthru
              _
          $region101: #{cna_forward.2} parent=96 // pred_fallthru
            _
          // Predicated region
          $region102: #{cna_forward.2} parent=96 // pred_check
            %p492 = pneg %p488
          $region103: #{cna_forward.2} parent=96 // pred_check_branch
            %494 = sbr.rel (%p492) target = $region105
          $region104: #{cna_forward.2} parent=96 // pred_region
            %s495 = sshllo.u32 0, 4
            loop: start=0, step=1, limit=1
            $region106: #{cna_forward.2} parent=104 // loop_pre_header
              _
            $region107: #{cna_forward.2} parent=104 // loop_header
              %s497 = sphi 0, %s501
              %p498 = scmp.ge.s32.totalorder %s497, 1
              %s502 = sphi %s482, %s482
              %s503 = sphi %s485, %s485
            $region108: #{cna_forward.2} parent=104 // loop_header_branch
              %500 = sbr.rel (%p498) target = $region112
            $region109: #{cna_forward.2} parent=104 // loop_body
              %v504 = vld [vmem:[%s502] sm:%s495]
              %505 = vst [vmem:[%s503] sm:%s495] %v504
              %v506 = vld [vmem:[%s502 + $0x28] sm:%s495]
              %507 = vst [vmem:[%s503 + $0x4] sm:%s495] %v506
              %v508 = vld [vmem:[%s502 + $0x4] sm:%s495]
              %509 = vst [vmem:[%s503 + $0x8] sm:%s495] %v508
              %v510 = vld [vmem:[%s502 + $0x2c] sm:%s495]
              %511 = vst [vmem:[%s503 + $0xc] sm:%s495] %v510
              %v512 = vld [vmem:[%s502 + $0x8] sm:%s495]
              %513 = vst [vmem:[%s503 + $0x10] sm:%s495] %v512
              %v514 = vld [vmem:[%s502 + $0x30] sm:%s495]
              %515 = vst [vmem:[%s503 + $0x14] sm:%s495] %v514
              %v516 = vld [vmem:[%s502 + $0xc] sm:%s495]
              %517 = vst [vmem:[%s503 + $0x18] sm:%s495] %v516
              %v518 = vld [vmem:[%s502 + $0x34] sm:%s495]
              %519 = vst [vmem:[%s503 + $0x1c] sm:%s495] %v518
              %v520 = vld [vmem:[%s502 + $0x10] sm:%s495]
              %521 = vst [vmem:[%s503 + $0x20] sm:%s495] %v520
              %v522 = vld [vmem:[%s502 + $0x38] sm:%s495]
              %523 = vst [vmem:[%s503 + $0x24] sm:%s495] %v522
              %v524 = vld [vmem:[%s502 + $0x14] sm:%s495]
              %525 = vst [vmem:[%s503 + $0x28] sm:%s495] %v524
              %v526 = vld [vmem:[%s502 + $0x3c] sm:%s495]
              %527 = vst [vmem:[%s503 + $0x2c] sm:%s495] %v526
            $region110: #{cna_forward.2} parent=104 // loop_footer
              %s501 = sadd.s32 1, %s497
            $region111: #{cna_forward.2} parent=104 // loop_footer_branch
              %496 = sbr.rel target = $region107
            $region112: #{cna_forward.2} parent=104 // loop_exit
              _
          $region105: #{cna_forward.2} parent=96 // pred_fallthru
            _
          // Predicated region
          $region131: #{cna_forward.2} parent=96 // pred_check
            _
          $region132: #{cna_forward.2} parent=96 // pred_check_branch
            %581 = sbr.rel (0) target = $region134
          $region133: #{cna_forward.2} parent=96 // pred_region
            %582 = vsyncadd %s486, 768
          $region134: #{cna_forward.2} parent=96 // pred_fallthru
            _
        $region97: #{cna_forward.2} parent=47 // pred_fallthru
          _
        %v583 = vld [vmem:[%s459] sm:$0xff]
        %v584 = vld [vmem:[%s459 + $0x8] sm:$0xff]
        %v585 = vld [vmem:[%s459 + $0x10] sm:$0xff]
        %v586 = vld [vmem:[%s459 + $0x18] sm:$0xff]
        %587 = vst [vmem:[#allocation4] sm:$0xff] %v583
        %588 = vst [vmem:[#allocation4 + $0x8] sm:$0xff] %v584
        %589 = vst [vmem:[#allocation4 + $0x10] sm:$0xff] %v585
        %590 = vst [vmem:[#allocation4 + $0x18] sm:$0xff] %v586
        %v591 = vld [vmem:[%s459] sm:$0xff]
        %v592 = vld [vmem:[%s459 + $0x8] sm:$0xff]
        %v593 = vld [vmem:[%s459 + $0x10] sm:$0xff]
        %v594 = vld [vmem:[%s459 + $0x18] sm:$0xff]
        %v595 = vld [vmem:[%s459 + $0x20] sm:$0xff]
        %601 = vrot.lane.b32.xlu0 %v591, 127
        %v602 = vpop.permute.xlu0 %601
        %603 = vrot.lane.b32.xlu0 %v592, 127
        %v604 = vpop.permute.xlu0 %603
        %605 = vrot.lane.b32.xlu0 %v593, 127
        %v606 = vpop.permute.xlu0 %605
        %607 = vrot.lane.b32.xlu0 %v594, 127
        %v608 = vpop.permute.xlu0 %607
        %609 = vrot.lane.b32.xlu0 %v595, 127
        %v610 = vpop.permute.xlu0 %609
        %vm611 = vcmask 1039360
        %v612 = vsel %vm611, %v602, %v604
        %v613 = vsel %vm611, %v604, %v606
        %v614 = vsel %vm611, %v606, %v608
        %v615 = vsel %vm611, %v608, %v610
        %620 = vst [vmem:[#allocation4 + $0x20] sm:$0xff] %v612
        %621 = vst [vmem:[#allocation4 + $0x28] sm:$0xff] %v613
        %622 = vst [vmem:[#allocation4 + $0x30] sm:$0xff] %v614
        %623 = vst [vmem:[#allocation4 + $0x38] sm:$0xff] %v615
        %v624 = vld [vmem:[%s459] sm:$0xff]
        %v625 = vld [vmem:[%s459 + $0x8] sm:$0xff]
        %v626 = vld [vmem:[%s459 + $0x10] sm:$0xff]
        %v627 = vld [vmem:[%s459 + $0x18] sm:$0xff]
        %v628 = vld [vmem:[%s459 + $0x20] sm:$0xff]
        %634 = vrot.lane.b32.xlu0 %v624, 126
        %v635 = vpop.permute.xlu0 %634
        %636 = vrot.lane.b32.xlu0 %v625, 126
        %v637 = vpop.permute.xlu0 %636
        %638 = vrot.lane.b32.xlu0 %v626, 126
        %v639 = vpop.permute.xlu0 %638
        %640 = vrot.lane.b32.xlu0 %v627, 126
        %v641 = vpop.permute.xlu0 %640
        %642 = vrot.lane.b32.xlu0 %v628, 126
        %v643 = vpop.permute.xlu0 %642
        %vm644 = vcmask 1031168
        %v645 = vsel %vm644, %v635, %v637
        %v646 = vsel %vm644, %v637, %v639
        %v647 = vsel %vm644, %v639, %v641
        %v648 = vsel %vm644, %v641, %v643
        %653 = vst [vmem:[#allocation4 + $0x40] sm:$0xff] %v645
        %654 = vst [vmem:[#allocation4 + $0x48] sm:$0xff] %v646
        %655 = vst [vmem:[#allocation4 + $0x50] sm:$0xff] %v647
        %656 = vst [vmem:[#allocation4 + $0x58] sm:$0xff] %v648
        %v657 = vld [vmem:[%s459] sm:$0xff]
        %v658 = vld [vmem:[%s459 + $0x8] sm:$0xff]
        %v659 = vld [vmem:[%s459 + $0x10] sm:$0xff]
        %v660 = vld [vmem:[%s459 + $0x18] sm:$0xff]
        %v661 = vld [vmem:[%s459 + $0x20] sm:$0xff]
        %667 = vrot.lane.b32.xlu0 %v657, 118
        %v668 = vpop.permute.xlu0 %667
        %669 = vrot.lane.b32.xlu0 %v658, 118
        %v670 = vpop.permute.xlu0 %669
        %671 = vrot.lane.b32.xlu0 %v659, 118
        %v672 = vpop.permute.xlu0 %671
        %673 = vrot.lane.b32.xlu0 %v660, 118
        %v674 = vpop.permute.xlu0 %673
        %675 = vrot.lane.b32.xlu0 %v661, 118
        %v676 = vpop.permute.xlu0 %675
        %vm677 = vcmask 965632
        %v678 = vsel %vm677, %v668, %v670
        %v679 = vsel %vm677, %v670, %v672
        %v680 = vsel %vm677, %v672, %v674
        %v681 = vsel %vm677, %v674, %v676
        %686 = vst [vmem:[#allocation4 + $0x60] sm:$0xff] %v678
        %687 = vst [vmem:[#allocation4 + $0x68] sm:$0xff] %v679
        %688 = vst [vmem:[#allocation4 + $0x70] sm:$0xff] %v680
        %689 = vst [vmem:[#allocation4 + $0x78] sm:$0xff] %v681
        %v690 = vld [vmem:[%s459] sm:$0xff]
        %v691 = vld [vmem:[%s459 + $0x8] sm:$0xff]
        %v692 = vld [vmem:[%s459 + $0x10] sm:$0xff]
        %v693 = vld [vmem:[%s459 + $0x18] sm:$0xff]
        %v694 = vld [vmem:[%s459 + $0x20] sm:$0xff]
        %700 = vrot.lane.b32.xlu0 %v690, 117
        %v701 = vpop.permute.xlu0 %700
        %702 = vrot.lane.b32.xlu0 %v691, 117
        %v703 = vpop.permute.xlu0 %702
        %704 = vrot.lane.b32.xlu0 %v692, 117
        %v705 = vpop.permute.xlu0 %704
        %706 = vrot.lane.b32.xlu0 %v693, 117
        %v707 = vpop.permute.xlu0 %706
        %708 = vrot.lane.b32.xlu0 %v694, 117
        %v709 = vpop.permute.xlu0 %708
        %vm710 = vcmask 957440
        %v711 = vsel %vm710, %v701, %v703
        %v712 = vsel %vm710, %v703, %v705
        %v713 = vsel %vm710, %v705, %v707
        %v714 = vsel %vm710, %v707, %v709
        %719 = vst [vmem:[#allocation4 + $0x80] sm:$0xff] %v711
        %720 = vst [vmem:[#allocation4 + $0x88] sm:$0xff] %v712
        %721 = vst [vmem:[#allocation4 + $0x90] sm:$0xff] %v713
        %722 = vst [vmem:[#allocation4 + $0x98] sm:$0xff] %v714
        %v723 = vld [vmem:[%s459] sm:$0xff]
        %v724 = vld [vmem:[%s459 + $0x8] sm:$0xff]
        %v725 = vld [vmem:[%s459 + $0x10] sm:$0xff]
        %v726 = vld [vmem:[%s459 + $0x18] sm:$0xff]
        %v727 = vld [vmem:[%s459 + $0x20] sm:$0xff]
        %733 = vrot.lane.b32.xlu0 %v723, 116
        %v734 = vpop.permute.xlu0 %733
        %735 = vrot.lane.b32.xlu0 %v724, 116
        %v736 = vpop.permute.xlu0 %735
        %737 = vrot.lane.b32.xlu0 %v725, 116
        %v738 = vpop.permute.xlu0 %737
        %739 = vrot.lane.b32.xlu0 %v726, 116
        %v740 = vpop.permute.xlu0 %739
        %741 = vrot.lane.b32.xlu0 %v727, 116
        %v742 = vpop.permute.xlu0 %741
        %vm743 = vcmask 949248
        %v744 = vsel %vm743, %v734, %v736
        %v745 = vsel %vm743, %v736, %v738
        %v746 = vsel %vm743, %v738, %v740
        %v747 = vsel %vm743, %v740, %v742
        %752 = vst [vmem:[#allocation4 + $0xa0] sm:$0xff] %v744
        %753 = vst [vmem:[#allocation4 + $0xa8] sm:$0xff] %v745
        %754 = vst [vmem:[#allocation4 + $0xb0] sm:$0xff] %v746
        %755 = vst [vmem:[#allocation4 + $0xb8] sm:$0xff] %v747
        %v756 = vld [vmem:[%s459] sm:$0xff]
        %v757 = vld [vmem:[%s459 + $0x8] sm:$0xff]
        %v758 = vld [vmem:[%s459 + $0x10] sm:$0xff]
        %v759 = vld [vmem:[%s459 + $0x18] sm:$0xff]
        %v760 = vld [vmem:[%s459 + $0x20] sm:$0xff]
        %766 = vrot.lane.b32.xlu0 %v756, 108
        %v767 = vpop.permute.xlu0 %766
        %768 = vrot.lane.b32.xlu0 %v757, 108
        %v769 = vpop.permute.xlu0 %768
        %770 = vrot.lane.b32.xlu0 %v758, 108
        %v771 = vpop.permute.xlu0 %770
        %772 = vrot.lane.b32.xlu0 %v759, 108
        %v773 = vpop.permute.xlu0 %772
        %774 = vrot.lane.b32.xlu0 %v760, 108
        %v775 = vpop.permute.xlu0 %774
        %vm776 = vcmask 883712
        %v777 = vsel %vm776, %v767, %v769
        %v778 = vsel %vm776, %v769, %v771
        %v779 = vsel %vm776, %v771, %v773
        %v780 = vsel %vm776, %v773, %v775
        %785 = vst [vmem:[#allocation4 + $0xc0] sm:$0xff] %v777
        %786 = vst [vmem:[#allocation4 + $0xc8] sm:$0xff] %v778
        %787 = vst [vmem:[#allocation4 + $0xd0] sm:$0xff] %v779
        %788 = vst [vmem:[#allocation4 + $0xd8] sm:$0xff] %v780
        %v789 = vld [vmem:[%s459] sm:$0xff]
        %v790 = vld [vmem:[%s459 + $0x8] sm:$0xff]
        %v791 = vld [vmem:[%s459 + $0x10] sm:$0xff]
        %v792 = vld [vmem:[%s459 + $0x18] sm:$0xff]
        %v793 = vld [vmem:[%s459 + $0x20] sm:$0xff]
        %799 = vrot.lane.b32.xlu0 %v789, 107
        %v800 = vpop.permute.xlu0 %799
        %801 = vrot.lane.b32.xlu0 %v790, 107
        %v802 = vpop.permute.xlu0 %801
        %803 = vrot.lane.b32.xlu0 %v791, 107
        %v804 = vpop.permute.xlu0 %803
        %805 = vrot.lane.b32.xlu0 %v792, 107
        %v806 = vpop.permute.xlu0 %805
        %807 = vrot.lane.b32.xlu0 %v793, 107
        %v808 = vpop.permute.xlu0 %807
        %vm809 = vcmask 875520
        %v810 = vsel %vm809, %v800, %v802
        %v811 = vsel %vm809, %v802, %v804
        %v812 = vsel %vm809, %v804, %v806
        %v813 = vsel %vm809, %v806, %v808
        %818 = vst [vmem:[#allocation4 + $0xe0] sm:$0xff] %v810
        %819 = vst [vmem:[#allocation4 + $0xe8] sm:$0xff] %v811
        %820 = vst [vmem:[#allocation4 + $0xf0] sm:$0xff] %v812
        %821 = vst [vmem:[#allocation4 + $0xf8] sm:$0xff] %v813
        %v822 = vld [vmem:[%s459] sm:$0xff]
        %v823 = vld [vmem:[%s459 + $0x8] sm:$0xff]
        %v824 = vld [vmem:[%s459 + $0x10] sm:$0xff]
        %v825 = vld [vmem:[%s459 + $0x18] sm:$0xff]
        %v826 = vld [vmem:[%s459 + $0x20] sm:$0xff]
        %832 = vrot.lane.b32.xlu0 %v822, 106
        %v833 = vpop.permute.xlu0 %832
        %834 = vrot.lane.b32.xlu0 %v823, 106
        %v835 = vpop.permute.xlu0 %834
        %836 = vrot.lane.b32.xlu0 %v824, 106
        %v837 = vpop.permute.xlu0 %836
        %838 = vrot.lane.b32.xlu0 %v825, 106
        %v839 = vpop.permute.xlu0 %838
        %840 = vrot.lane.b32.xlu0 %v826, 106
        %v841 = vpop.permute.xlu0 %840
        %vm842 = vcmask 867328
        %v843 = vsel %vm842, %v833, %v835
        %v844 = vsel %vm842, %v835, %v837
        %v845 = vsel %vm842, %v837, %v839
        %v846 = vsel %vm842, %v839, %v841
        %851 = vst [vmem:[#allocation4 + $0x100] sm:$0xff] %v843
        %852 = vst [vmem:[#allocation4 + $0x108] sm:$0xff] %v844
        %853 = vst [vmem:[#allocation4 + $0x110] sm:$0xff] %v845
        %854 = vst [vmem:[#allocation4 + $0x118] sm:$0xff] %v846
        %v855 = vld [vmem:[%s459] sm:$0xff]
        %v856 = vld [vmem:[%s459 + $0x8] sm:$0xff]
        %v857 = vld [vmem:[%s459 + $0x10] sm:$0xff]
        %v858 = vld [vmem:[%s459 + $0x18] sm:$0xff]
        %v859 = vld [vmem:[%s459 + $0x20] sm:$0xff]
        %865 = vrot.lane.b32.xlu0 %v855, 28
        %v866 = vpop.permute.xlu0 %865
        %867 = vrot.lane.b32.xlu0 %v856, 28
        %v868 = vpop.permute.xlu0 %867
        %869 = vrot.lane.b32.xlu0 %v857, 28
        %v870 = vpop.permute.xlu0 %869
        %871 = vrot.lane.b32.xlu0 %v858, 28
        %v872 = vpop.permute.xlu0 %871
        %873 = vrot.lane.b32.xlu0 %v859, 28
        %v874 = vpop.permute.xlu0 %873
        %vm875 = vcmask 228352
        %v876 = vsel %vm875, %v866, %v868
        %v877 = vsel %vm875, %v868, %v870
        %v878 = vsel %vm875, %v870, %v872
        %v879 = vsel %vm875, %v872, %v874
        %884 = vst [vmem:[#allocation4 + $0x120] sm:$0xff] %v876
        %885 = vst [vmem:[#allocation4 + $0x128] sm:$0xff] %v877
        %886 = vst [vmem:[#allocation4 + $0x130] sm:$0xff] %v878
        %887 = vst [vmem:[#allocation4 + $0x138] sm:$0xff] %v879
        %v888 = vld [vmem:[%s459] sm:$0xff]
        %v889 = vld [vmem:[%s459 + $0x8] sm:$0xff]
        %v890 = vld [vmem:[%s459 + $0x10] sm:$0xff]
        %v891 = vld [vmem:[%s459 + $0x18] sm:$0xff]
        %v892 = vld [vmem:[%s459 + $0x20] sm:$0xff]
        %898 = vrot.lane.b32.xlu0 %v888, 27
        %v899 = vpop.permute.xlu0 %898
        %900 = vrot.lane.b32.xlu0 %v889, 27
        %v901 = vpop.permute.xlu0 %900
        %902 = vrot.lane.b32.xlu0 %v890, 27
        %v903 = vpop.permute.xlu0 %902
        %904 = vrot.lane.b32.xlu0 %v891, 27
        %v905 = vpop.permute.xlu0 %904
        %906 = vrot.lane.b32.xlu0 %v892, 27
        %v907 = vpop.permute.xlu0 %906
        %vm908 = vcmask 220160
        %v909 = vsel %vm908, %v899, %v901
        %v910 = vsel %vm908, %v901, %v903
        %v911 = vsel %vm908, %v903, %v905
        %v912 = vsel %vm908, %v905, %v907
        %917 = vst [vmem:[#allocation4 + $0x140] sm:$0xff] %v909
        %918 = vst [vmem:[#allocation4 + $0x148] sm:$0xff] %v910
        %919 = vst [vmem:[#allocation4 + $0x150] sm:$0xff] %v911
        %920 = vst [vmem:[#allocation4 + $0x158] sm:$0xff] %v912
        %v921 = vld [vmem:[%s459] sm:$0xff]
        %v922 = vld [vmem:[%s459 + $0x8] sm:$0xff]
        %v923 = vld [vmem:[%s459 + $0x10] sm:$0xff]
        %v924 = vld [vmem:[%s459 + $0x18] sm:$0xff]
        %v925 = vld [vmem:[%s459 + $0x20] sm:$0xff]
        %931 = vrot.lane.b32.xlu0 %v921, 26
        %v932 = vpop.permute.xlu0 %931
        %933 = vrot.lane.b32.xlu0 %v922, 26
        %v934 = vpop.permute.xlu0 %933
        %935 = vrot.lane.b32.xlu0 %v923, 26
        %v936 = vpop.permute.xlu0 %935
        %937 = vrot.lane.b32.xlu0 %v924, 26
        %v938 = vpop.permute.xlu0 %937
        %939 = vrot.lane.b32.xlu0 %v925, 26
        %v940 = vpop.permute.xlu0 %939
        %vm941 = vcmask 211968
        %v942 = vsel %vm941, %v932, %v934
        %v943 = vsel %vm941, %v934, %v936
        %v944 = vsel %vm941, %v936, %v938
        %v945 = vsel %vm941, %v938, %v940
        %950 = vst [vmem:[#allocation4 + $0x160] sm:$0xff] %v942
        %951 = vst [vmem:[#allocation4 + $0x168] sm:$0xff] %v943
        %952 = vst [vmem:[#allocation4 + $0x170] sm:$0xff] %v944
        %953 = vst [vmem:[#allocation4 + $0x178] sm:$0xff] %v945
        %v954 = vld [vmem:[%s459] sm:$0xff]
        %v955 = vld [vmem:[%s459 + $0x8] sm:$0xff]
        %v956 = vld [vmem:[%s459 + $0x10] sm:$0xff]
        %v957 = vld [vmem:[%s459 + $0x18] sm:$0xff]
        %v958 = vld [vmem:[%s459 + $0x20] sm:$0xff]
        %964 = vrot.lane.b32.xlu0 %v954, 18
        %v965 = vpop.permute.xlu0 %964
        %966 = vrot.lane.b32.xlu0 %v955, 18
        %v967 = vpop.permute.xlu0 %966
        %968 = vrot.lane.b32.xlu0 %v956, 18
        %v969 = vpop.permute.xlu0 %968
        %970 = vrot.lane.b32.xlu0 %v957, 18
        %v971 = vpop.permute.xlu0 %970
        %972 = vrot.lane.b32.xlu0 %v958, 18
        %v973 = vpop.permute.xlu0 %972
        %vm974 = vcmask 146432
        %v975 = vsel %vm974, %v965, %v967
        %v976 = vsel %vm974, %v967, %v969
        %v977 = vsel %vm974, %v969, %v971
        %v978 = vsel %vm974, %v971, %v973
        %983 = vst [vmem:[#allocation4 + $0x180] sm:$0xff] %v975
        %984 = vst [vmem:[#allocation4 + $0x188] sm:$0xff] %v976
        %985 = vst [vmem:[#allocation4 + $0x190] sm:$0xff] %v977
        %986 = vst [vmem:[#allocation4 + $0x198] sm:$0xff] %v978
        %v987 = vld [vmem:[%s459] sm:$0xff]
        %v988 = vld [vmem:[%s459 + $0x8] sm:$0xff]
        %v989 = vld [vmem:[%s459 + $0x10] sm:$0xff]
        %v990 = vld [vmem:[%s459 + $0x18] sm:$0xff]
        %v991 = vld [vmem:[%s459 + $0x20] sm:$0xff]
        %997 = vrot.lane.b32.xlu0 %v987, 17
        %v998 = vpop.permute.xlu0 %997
        %999 = vrot.lane.b32.xlu0 %v988, 17
        %v1000 = vpop.permute.xlu0 %999
        %1001 = vrot.lane.b32.xlu0 %v989, 17
        %v1002 = vpop.permute.xlu0 %1001
        %1003 = vrot.lane.b32.xlu0 %v990, 17
        %v1004 = vpop.permute.xlu0 %1003
        %1005 = vrot.lane.b32.xlu0 %v991, 17
        %v1006 = vpop.permute.xlu0 %1005
        %vm1007 = vcmask 138240
        %v1008 = vsel %vm1007, %v998, %v1000
        %v1009 = vsel %vm1007, %v1000, %v1002
        %v1010 = vsel %vm1007, %v1002, %v1004
        %v1011 = vsel %vm1007, %v1004, %v1006
        %1016 = vst [vmem:[#allocation4 + $0x1a0] sm:$0xff] %v1008
        %1017 = vst [vmem:[#allocation4 + $0x1a8] sm:$0xff] %v1009
        %1018 = vst [vmem:[#allocation4 + $0x1b0] sm:$0xff] %v1010
        %1019 = vst [vmem:[#allocation4 + $0x1b8] sm:$0xff] %v1011
        %v1020 = vld [vmem:[%s459] sm:$0xff]
        %v1021 = vld [vmem:[%s459 + $0x8] sm:$0xff]
        %v1022 = vld [vmem:[%s459 + $0x10] sm:$0xff]
        %v1023 = vld [vmem:[%s459 + $0x18] sm:$0xff]
        %v1024 = vld [vmem:[%s459 + $0x20] sm:$0xff]
        %1030 = vrot.lane.b32.xlu0 %v1020, 16
        %v1031 = vpop.permute.xlu0 %1030
        %1032 = vrot.lane.b32.xlu0 %v1021, 16
        %v1033 = vpop.permute.xlu0 %1032
        %1034 = vrot.lane.b32.xlu0 %v1022, 16
        %v1035 = vpop.permute.xlu0 %1034
        %1036 = vrot.lane.b32.xlu0 %v1023, 16
        %v1037 = vpop.permute.xlu0 %1036
        %1038 = vrot.lane.b32.xlu0 %v1024, 16
        %v1039 = vpop.permute.xlu0 %1038
        %vm1040 = vcmask 130048
        %v1041 = vsel %vm1040, %v1031, %v1033
        %v1042 = vsel %vm1040, %v1033, %v1035
        %v1043 = vsel %vm1040, %v1035, %v1037
        %v1044 = vsel %vm1040, %v1037, %v1039
        %1049 = vst [vmem:[#allocation4 + $0x1c0] sm:$0xff] %v1041
        %1050 = vst [vmem:[#allocation4 + $0x1c8] sm:$0xff] %v1042
        %1051 = vst [vmem:[#allocation4 + $0x1d0] sm:$0xff] %v1043
        %1052 = vst [vmem:[#allocation4 + $0x1d8] sm:$0xff] %v1044
        %v1053 = vld [vmem:[%s459] sm:$0xff]
        %v1054 = vld [vmem:[%s459 + $0x8] sm:$0xff]
        %v1055 = vld [vmem:[%s459 + $0x10] sm:$0xff]
        %v1056 = vld [vmem:[%s459 + $0x18] sm:$0xff]
        %v1057 = vld [vmem:[%s459 + $0x20] sm:$0xff]
        %1063 = vrot.lane.b32.xlu0 %v1053, 8
        %v1064 = vpop.permute.xlu0 %1063
        %1065 = vrot.lane.b32.xlu0 %v1054, 8
        %v1066 = vpop.permute.xlu0 %1065
        %1067 = vrot.lane.b32.xlu0 %v1055, 8
        %v1068 = vpop.permute.xlu0 %1067
        %1069 = vrot.lane.b32.xlu0 %v1056, 8
        %v1070 = vpop.permute.xlu0 %1069
        %1071 = vrot.lane.b32.xlu0 %v1057, 8
        %v1072 = vpop.permute.xlu0 %1071
        %vm1073 = vcmask 64512
        %v1074 = vsel %vm1073, %v1064, %v1066
        %v1075 = vsel %vm1073, %v1066, %v1068
        %v1076 = vsel %vm1073, %v1068, %v1070
        %v1077 = vsel %vm1073, %v1070, %v1072
        %1082 = vst [vmem:[#allocation4 + $0x1e0] sm:$0xff] %v1074
        %1083 = vst [vmem:[#allocation4 + $0x1e8] sm:$0xff] %v1075
        %1084 = vst [vmem:[#allocation4 + $0x1f0] sm:$0xff] %v1076
        %1085 = vst [vmem:[#allocation4 + $0x1f8] sm:$0xff] %v1077
        %v1086 = vld [vmem:[%s459] sm:$0xff]
        %v1087 = vld [vmem:[%s459 + $0x8] sm:$0xff]
        %v1088 = vld [vmem:[%s459 + $0x10] sm:$0xff]
        %v1089 = vld [vmem:[%s459 + $0x18] sm:$0xff]
        %v1090 = vld [vmem:[%s459 + $0x20] sm:$0xff]
        %1096 = vrot.lane.b32.xlu0 %v1086, 7
        %v1097 = vpop.permute.xlu0 %1096
        %1098 = vrot.lane.b32.xlu0 %v1087, 7
        %v1099 = vpop.permute.xlu0 %1098
        %1100 = vrot.lane.b32.xlu0 %v1088, 7
        %v1101 = vpop.permute.xlu0 %1100
        %1102 = vrot.lane.b32.xlu0 %v1089, 7
        %v1103 = vpop.permute.xlu0 %1102
        %1104 = vrot.lane.b32.xlu0 %v1090, 7
        %v1105 = vpop.permute.xlu0 %1104
        %vm1106 = vcmask 56320
        %v1107 = vsel %vm1106, %v1097, %v1099
        %v1108 = vsel %vm1106, %v1099, %v1101
        %v1109 = vsel %vm1106, %v1101, %v1103
        %v1110 = vsel %vm1106, %v1103, %v1105
        %1115 = vst [vmem:[#allocation4 + $0x200] sm:$0xff] %v1107
        %1116 = vst [vmem:[#allocation4 + $0x208] sm:$0xff] %v1108
        %1117 = vst [vmem:[#allocation4 + $0x210] sm:$0xff] %v1109
        %1118 = vst [vmem:[#allocation4 + $0x218] sm:$0xff] %v1110
        %v1119 = vld [vmem:[%s459] sm:$0xff]
        %v1120 = vld [vmem:[%s459 + $0x8] sm:$0xff]
        %v1121 = vld [vmem:[%s459 + $0x10] sm:$0xff]
        %v1122 = vld [vmem:[%s459 + $0x18] sm:$0xff]
        %v1123 = vld [vmem:[%s459 + $0x20] sm:$0xff]
        %1129 = vrot.lane.b32.xlu0 %v1119, 6
        %v1130 = vpop.permute.xlu0 %1129
        %1131 = vrot.lane.b32.xlu0 %v1120, 6
        %v1132 = vpop.permute.xlu0 %1131
        %1133 = vrot.lane.b32.xlu0 %v1121, 6
        %v1134 = vpop.permute.xlu0 %1133
        %1135 = vrot.lane.b32.xlu0 %v1122, 6
        %v1136 = vpop.permute.xlu0 %1135
        %1137 = vrot.lane.b32.xlu0 %v1123, 6
        %v1138 = vpop.permute.xlu0 %1137
        %vm1139 = vcmask 48128
        %v1140 = vsel %vm1139, %v1130, %v1132
        %v1141 = vsel %vm1139, %v1132, %v1134
        %v1142 = vsel %vm1139, %v1134, %v1136
        %v1143 = vsel %vm1139, %v1136, %v1138
        %1148 = vst [vmem:[#allocation4 + $0x220] sm:$0xff] %v1140
        %1149 = vst [vmem:[#allocation4 + $0x228] sm:$0xff] %v1141
        %1150 = vst [vmem:[#allocation4 + $0x230] sm:$0xff] %v1142
        %1151 = vst [vmem:[#allocation4 + $0x238] sm:$0xff] %v1143
        %v1152 = vld [vmem:[%s459 + $0x8] sm:$0xff]
        %v1153 = vld [vmem:[%s459 + $0x10] sm:$0xff]
        %v1154 = vld [vmem:[%s459 + $0x18] sm:$0xff]
        %v1155 = vld [vmem:[%s459 + $0x20] sm:$0xff]
        %v1156 = vld [vmem:[%s459 + $0x28] sm:$0xff]
        %1162 = vrot.lane.b32.xlu0 %v1152, 56
        %v1163 = vpop.permute.xlu0 %1162
        %1164 = vrot.lane.b32.xlu0 %v1153, 56
        %v1165 = vpop.permute.xlu0 %1164
        %1166 = vrot.lane.b32.xlu0 %v1154, 56
        %v1167 = vpop.permute.xlu0 %1166
        %1168 = vrot.lane.b32.xlu0 %v1155, 56
        %v1169 = vpop.permute.xlu0 %1168
        %1170 = vrot.lane.b32.xlu0 %v1156, 56
        %v1171 = vpop.permute.xlu0 %1170
        %vm1172 = vcmask 457728
        %v1173 = vsel %vm1172, %v1163, %v1165
        %v1174 = vsel %vm1172, %v1165, %v1167
        %v1175 = vsel %vm1172, %v1167, %v1169
        %v1176 = vsel %vm1172, %v1169, %v1171
        %1181 = vst [vmem:[#allocation4 + $0x240] sm:$0xff] %v1173
        %1182 = vst [vmem:[#allocation4 + $0x248] sm:$0xff] %v1174
        %1183 = vst [vmem:[#allocation4 + $0x250] sm:$0xff] %v1175
        %1184 = vst [vmem:[#allocation4 + $0x258] sm:$0xff] %v1176
        %v1185 = vld [vmem:[%s459 + $0x8] sm:$0xff]
        %v1186 = vld [vmem:[%s459 + $0x10] sm:$0xff]
        %v1187 = vld [vmem:[%s459 + $0x18] sm:$0xff]
        %v1188 = vld [vmem:[%s459 + $0x20] sm:$0xff]
        %v1189 = vld [vmem:[%s459 + $0x28] sm:$0xff]
        %1195 = vrot.lane.b32.xlu0 %v1185, 55
        %v1196 = vpop.permute.xlu0 %1195
        %1197 = vrot.lane.b32.xlu0 %v1186, 55
        %v1198 = vpop.permute.xlu0 %1197
        %1199 = vrot.lane.b32.xlu0 %v1187, 55
        %v1200 = vpop.permute.xlu0 %1199
        %1201 = vrot.lane.b32.xlu0 %v1188, 55
        %v1202 = vpop.permute.xlu0 %1201
        %1203 = vrot.lane.b32.xlu0 %v1189, 55
        %v1204 = vpop.permute.xlu0 %1203
        %vm1205 = vcmask 449536
        %v1206 = vsel %vm1205, %v1196, %v1198
        %v1207 = vsel %vm1205, %v1198, %v1200
        %v1208 = vsel %vm1205, %v1200, %v1202
        %v1209 = vsel %vm1205, %v1202, %v1204
        %1214 = vst [vmem:[#allocation4 + $0x260] sm:$0xff] %v1206
        %1215 = vst [vmem:[#allocation4 + $0x268] sm:$0xff] %v1207
        %1216 = vst [vmem:[#allocation4 + $0x270] sm:$0xff] %v1208
        %1217 = vst [vmem:[#allocation4 + $0x278] sm:$0xff] %v1209
        %v1218 = vld [vmem:[%s459 + $0x8] sm:$0xff]
        %v1219 = vld [vmem:[%s459 + $0x10] sm:$0xff]
        %v1220 = vld [vmem:[%s459 + $0x18] sm:$0xff]
        %v1221 = vld [vmem:[%s459 + $0x20] sm:$0xff]
        %v1222 = vld [vmem:[%s459 + $0x28] sm:$0xff]
        %1228 = vrot.lane.b32.xlu0 %v1218, 54
        %v1229 = vpop.permute.xlu0 %1228
        %1230 = vrot.lane.b32.xlu0 %v1219, 54
        %v1231 = vpop.permute.xlu0 %1230
        %1232 = vrot.lane.b32.xlu0 %v1220, 54
        %v1233 = vpop.permute.xlu0 %1232
        %1234 = vrot.lane.b32.xlu0 %v1221, 54
        %v1235 = vpop.permute.xlu0 %1234
        %1236 = vrot.lane.b32.xlu0 %v1222, 54
        %v1237 = vpop.permute.xlu0 %1236
        %vm1238 = vcmask 441344
        %v1239 = vsel %vm1238, %v1229, %v1231
        %v1240 = vsel %vm1238, %v1231, %v1233
        %v1241 = vsel %vm1238, %v1233, %v1235
        %v1242 = vsel %vm1238, %v1235, %v1237
        %1247 = vst [vmem:[#allocation4 + $0x280] sm:$0xff] %v1239
        %1248 = vst [vmem:[#allocation4 + $0x288] sm:$0xff] %v1240
        %1249 = vst [vmem:[#allocation4 + $0x290] sm:$0xff] %v1241
        %1250 = vst [vmem:[#allocation4 + $0x298] sm:$0xff] %v1242
        %v1251 = vld [vmem:[%s459 + $0x8] sm:$0xff]
        %v1252 = vld [vmem:[%s459 + $0x10] sm:$0xff]
        %v1253 = vld [vmem:[%s459 + $0x18] sm:$0xff]
        %v1254 = vld [vmem:[%s459 + $0x20] sm:$0xff]
        %v1255 = vld [vmem:[%s459 + $0x28] sm:$0xff]
        %1261 = vrot.lane.b32.xlu0 %v1251, 46
        %v1262 = vpop.permute.xlu0 %1261
        %1263 = vrot.lane.b32.xlu0 %v1252, 46
        %v1264 = vpop.permute.xlu0 %1263
        %1265 = vrot.lane.b32.xlu0 %v1253, 46
        %v1266 = vpop.permute.xlu0 %1265
        %1267 = vrot.lane.b32.xlu0 %v1254, 46
        %v1268 = vpop.permute.xlu0 %1267
        %1269 = vrot.lane.b32.xlu0 %v1255, 46
        %v1270 = vpop.permute.xlu0 %1269
        %vm1271 = vcmask 375808
        %v1272 = vsel %vm1271, %v1262, %v1264
        %v1273 = vsel %vm1271, %v1264, %v1266
        %v1274 = vsel %vm1271, %v1266, %v1268
        %v1275 = vsel %vm1271, %v1268, %v1270
        %1280 = vst [vmem:[#allocation4 + $0x2a0] sm:$0xff] %v1272
        %1281 = vst [vmem:[#allocation4 + $0x2a8] sm:$0xff] %v1273
        %1282 = vst [vmem:[#allocation4 + $0x2b0] sm:$0xff] %v1274
        %1283 = vst [vmem:[#allocation4 + $0x2b8] sm:$0xff] %v1275
        %v1284 = vld [vmem:[%s459 + $0x8] sm:$0xff]
        %v1285 = vld [vmem:[%s459 + $0x10] sm:$0xff]
        %v1286 = vld [vmem:[%s459 + $0x18] sm:$0xff]
        %v1287 = vld [vmem:[%s459 + $0x20] sm:$0xff]
        %v1288 = vld [vmem:[%s459 + $0x28] sm:$0xff]
        %1294 = vrot.lane.b32.xlu0 %v1284, 45
        %v1295 = vpop.permute.xlu0 %1294
        %1296 = vrot.lane.b32.xlu0 %v1285, 45
        %v1297 = vpop.permute.xlu0 %1296
        %1298 = vrot.lane.b32.xlu0 %v1286, 45
        %v1299 = vpop.permute.xlu0 %1298
        %1300 = vrot.lane.b32.xlu0 %v1287, 45
        %v1301 = vpop.permute.xlu0 %1300
        %1302 = vrot.lane.b32.xlu0 %v1288, 45
        %v1303 = vpop.permute.xlu0 %1302
        %vm1304 = vcmask 367616
        %v1305 = vsel %vm1304, %v1295, %v1297
        %v1306 = vsel %vm1304, %v1297, %v1299
        %v1307 = vsel %vm1304, %v1299, %v1301
        %v1308 = vsel %vm1304, %v1301, %v1303
        %1313 = vst [vmem:[#allocation4 + $0x2c0] sm:$0xff] %v1305
        %1314 = vst [vmem:[#allocation4 + $0x2c8] sm:$0xff] %v1306
        %1315 = vst [vmem:[#allocation4 + $0x2d0] sm:$0xff] %v1307
        %1316 = vst [vmem:[#allocation4 + $0x2d8] sm:$0xff] %v1308
        %v1317 = vld [vmem:[%s459 + $0x8] sm:$0xff]
        %v1318 = vld [vmem:[%s459 + $0x10] sm:$0xff]
        %v1319 = vld [vmem:[%s459 + $0x18] sm:$0xff]
        %v1320 = vld [vmem:[%s459 + $0x20] sm:$0xff]
        %v1321 = vld [vmem:[%s459 + $0x28] sm:$0xff]
        %1327 = vrot.lane.b32.xlu0 %v1317, 44
        %v1328 = vpop.permute.xlu0 %1327
        %1329 = vrot.lane.b32.xlu0 %v1318, 44
        %v1330 = vpop.permute.xlu0 %1329
        %1331 = vrot.lane.b32.xlu0 %v1319, 44
        %v1332 = vpop.permute.xlu0 %1331
        %1333 = vrot.lane.b32.xlu0 %v1320, 44
        %v1334 = vpop.permute.xlu0 %1333
        %1335 = vrot.lane.b32.xlu0 %v1321, 44
        %v1336 = vpop.permute.xlu0 %1335
        %vm1337 = vcmask 359424
        %v1338 = vsel %vm1337, %v1328, %v1330
        %v1339 = vsel %vm1337, %v1330, %v1332
        %v1340 = vsel %vm1337, %v1332, %v1334
        %v1341 = vsel %vm1337, %v1334, %v1336
        %1346 = vst [vmem:[#allocation4 + $0x2e0] sm:$0xff] %v1338
        %1347 = vst [vmem:[#allocation4 + $0x2e8] sm:$0xff] %v1339
        %1348 = vst [vmem:[#allocation4 + $0x2f0] sm:$0xff] %v1340
        %1349 = vst [vmem:[#allocation4 + $0x2f8] sm:$0xff] %v1341
        %v1350 = vld [vmem:[%s459 + $0x8] sm:$0xff]
        %v1351 = vld [vmem:[%s459 + $0x10] sm:$0xff]
        %v1352 = vld [vmem:[%s459 + $0x18] sm:$0xff]
        %v1353 = vld [vmem:[%s459 + $0x20] sm:$0xff]
        %v1354 = vld [vmem:[%s459 + $0x28] sm:$0xff]
        %1360 = vrot.lane.b32.xlu0 %v1350, 36
        %v1361 = vpop.permute.xlu0 %1360
        %1362 = vrot.lane.b32.xlu0 %v1351, 36
        %v1363 = vpop.permute.xlu0 %1362
        %1364 = vrot.lane.b32.xlu0 %v1352, 36
        %v1365 = vpop.permute.xlu0 %1364
        %1366 = vrot.lane.b32.xlu0 %v1353, 36
        %v1367 = vpop.permute.xlu0 %1366
        %1368 = vrot.lane.b32.xlu0 %v1354, 36
        %v1369 = vpop.permute.xlu0 %1368
        %vm1370 = vcmask 293888
        %v1371 = vsel %vm1370, %v1361, %v1363
        %v1372 = vsel %vm1370, %v1363, %v1365
        %v1373 = vsel %vm1370, %v1365, %v1367
        %v1374 = vsel %vm1370, %v1367, %v1369
        %1379 = vst [vmem:[#allocation4 + $0x300] sm:$0xff] %v1371
        %1380 = vst [vmem:[#allocation4 + $0x308] sm:$0xff] %v1372
        %1381 = vst [vmem:[#allocation4 + $0x310] sm:$0xff] %v1373
        %1382 = vst [vmem:[#allocation4 + $0x318] sm:$0xff] %v1374
        %v1383 = vld [vmem:[%s459 + $0x8] sm:$0xff]
        %v1384 = vld [vmem:[%s459 + $0x10] sm:$0xff]
        %v1385 = vld [vmem:[%s459 + $0x18] sm:$0xff]
        %v1386 = vld [vmem:[%s459 + $0x20] sm:$0xff]
        %v1387 = vld [vmem:[%s459 + $0x28] sm:$0xff]
        %1393 = vrot.lane.b32.xlu0 %v1383, 35
        %v1394 = vpop.permute.xlu0 %1393
        %1395 = vrot.lane.b32.xlu0 %v1384, 35
        %v1396 = vpop.permute.xlu0 %1395
        %1397 = vrot.lane.b32.xlu0 %v1385, 35
        %v1398 = vpop.permute.xlu0 %1397
        %1399 = vrot.lane.b32.xlu0 %v1386, 35
        %v1400 = vpop.permute.xlu0 %1399
        %1401 = vrot.lane.b32.xlu0 %v1387, 35
        %v1402 = vpop.permute.xlu0 %1401
        %vm1403 = vcmask 285696
        %v1404 = vsel %vm1403, %v1394, %v1396
        %v1405 = vsel %vm1403, %v1396, %v1398
        %v1406 = vsel %vm1403, %v1398, %v1400
        %v1407 = vsel %vm1403, %v1400, %v1402
        %1412 = vst [vmem:[#allocation4 + $0x320] sm:$0xff] %v1404
        %1413 = vst [vmem:[#allocation4 + $0x328] sm:$0xff] %v1405
        %1414 = vst [vmem:[#allocation4 + $0x330] sm:$0xff] %v1406
        %1415 = vst [vmem:[#allocation4 + $0x338] sm:$0xff] %v1407
        %v1416 = vld [vmem:[%s459 + $0x8] sm:$0xff]
        %v1417 = vld [vmem:[%s459 + $0x10] sm:$0xff]
        %v1418 = vld [vmem:[%s459 + $0x18] sm:$0xff]
        %v1419 = vld [vmem:[%s459 + $0x20] sm:$0xff]
        %v1420 = vld [vmem:[%s459 + $0x28] sm:$0xff]
        %1426 = vrot.lane.b32.xlu0 %v1416, 34
        %v1427 = vpop.permute.xlu0 %1426
        %1428 = vrot.lane.b32.xlu0 %v1417, 34
        %v1429 = vpop.permute.xlu0 %1428
        %1430 = vrot.lane.b32.xlu0 %v1418, 34
        %v1431 = vpop.permute.xlu0 %1430
        %1432 = vrot.lane.b32.xlu0 %v1419, 34
        %v1433 = vpop.permute.xlu0 %1432
        %1434 = vrot.lane.b32.xlu0 %v1420, 34
        %v1435 = vpop.permute.xlu0 %1434
        %vm1436 = vcmask 277504
        %v1437 = vsel %vm1436, %v1427, %v1429
        %v1438 = vsel %vm1436, %v1429, %v1431
        %v1439 = vsel %vm1436, %v1431, %v1433
        %v1440 = vsel %vm1436, %v1433, %v1435
        %1445 = vst [vmem:[#allocation4 + $0x340] sm:$0xff] %v1437
        %1446 = vst [vmem:[#allocation4 + $0x348] sm:$0xff] %v1438
        %1447 = vst [vmem:[#allocation4 + $0x350] sm:$0xff] %v1439
        %1448 = vst [vmem:[#allocation4 + $0x358] sm:$0xff] %v1440
        %v1449 = vld [vmem:[%s1] sm:$0xff]
        %v1450 = vld [vmem:[%s1 + $0x8] sm:$0xff]
        %v1451 = vld [vmem:[%s1 + $0x10] sm:$0xff]
        %v1452 = vld [vmem:[%s1 + $0x18] sm:$0xff]
        %v1453 = vld [vmem:[%s1 + $0x20] sm:$0xff]
        %v1454 = vld [vmem:[%s1 + $0x28] sm:$0xff]
        %v1455 = vld [vmem:[%s1 + $0x30] sm:$0xff]
        %v1456 = vld [vmem:[%s1 + $0x38] sm:$0xff]
        %v1457 = vld [vmem:[%s1 + $0x40] sm:$0xff]
        %v1458 = vld [vmem:[%s1 + $0x48] sm:$0xff]
        %v1459 = vld [vmem:[%s1 + $0x50] sm:$0xff]
        %v1460 = vld [vmem:[%s1 + $0x58] sm:$0xff]
        %v1461 = vld [vmem:[%s1 + $0x60] sm:$0xff]
        %v1462 = vld [vmem:[%s1 + $0x68] sm:$0xff]
        %v1463 = vld [vmem:[%s1 + $0x70] sm:$0xff]
        %v1464 = vld [vmem:[%s1 + $0x78] sm:$0xff]
        %v1465 = vld [vmem:[#allocation4] sm:$0xff]
        %v1466 = vld [vmem:[#allocation4 + $0x8] sm:$0xff]
        %v1467 = vld [vmem:[#allocation4 + $0x10] sm:$0xff]
        %v1468 = vld [vmem:[#allocation4 + $0x18] sm:$0xff]
        %v1469 = vld [vmem:[#allocation4 + $0x20] sm:$0xff]
        %v1470 = vld [vmem:[#allocation4 + $0x28] sm:$0xff]
        %v1471 = vld [vmem:[#allocation4 + $0x30] sm:$0xff]
        %v1472 = vld [vmem:[#allocation4 + $0x38] sm:$0xff]
        %v1473 = vld [vmem:[#allocation4 + $0x40] sm:$0xff]
        %v1474 = vld [vmem:[#allocation4 + $0x48] sm:$0xff]
        %v1475 = vld [vmem:[#allocation4 + $0x50] sm:$0xff]
        %v1476 = vld [vmem:[#allocation4 + $0x58] sm:$0xff]
        %v1477 = vld [vmem:[#allocation4 + $0x60] sm:$0xff]
        %v1478 = vld [vmem:[#allocation4 + $0x68] sm:$0xff]
        %v1479 = vld [vmem:[#allocation4 + $0x70] sm:$0xff]
        %v1480 = vld [vmem:[#allocation4 + $0x78] sm:$0xff]
        %v1481 = vld [vmem:[#allocation4 + $0x80] sm:$0xff]
        %v1482 = vld [vmem:[#allocation4 + $0x88] sm:$0xff]
        %v1483 = vld [vmem:[#allocation4 + $0x90] sm:$0xff]
        %v1484 = vld [vmem:[#allocation4 + $0x98] sm:$0xff]
        %v1485 = vld [vmem:[#allocation4 + $0xa0] sm:$0xff]
        %v1486 = vld [vmem:[#allocation4 + $0xa8] sm:$0xff]
        %v1487 = vld [vmem:[#allocation4 + $0xb0] sm:$0xff]
        %v1488 = vld [vmem:[#allocation4 + $0xb8] sm:$0xff]
        %v1489 = vld [vmem:[#allocation4 + $0xc0] sm:$0xff]
        %v1490 = vld [vmem:[#allocation4 + $0xc8] sm:$0xff]
        %v1491 = vld [vmem:[#allocation4 + $0xd0] sm:$0xff]
        %v1492 = vld [vmem:[#allocation4 + $0xd8] sm:$0xff]
        %v1493 = vld [vmem:[#allocation4 + $0xe0] sm:$0xff]
        %v1494 = vld [vmem:[#allocation4 + $0xe8] sm:$0xff]
        %v1495 = vld [vmem:[#allocation4 + $0xf0] sm:$0xff]
        %v1496 = vld [vmem:[#allocation4 + $0xf8] sm:$0xff]
        %v1497 = vld [vmem:[#allocation4 + $0x100] sm:$0xff]
        %v1498 = vld [vmem:[#allocation4 + $0x108] sm:$0xff]
        %v1499 = vld [vmem:[#allocation4 + $0x110] sm:$0xff]
        %v1500 = vld [vmem:[#allocation4 + $0x118] sm:$0xff]
        %v1501 = vld [vmem:[#allocation4 + $0x120] sm:$0xff]
        %v1502 = vld [vmem:[#allocation4 + $0x128] sm:$0xff]
        %v1503 = vld [vmem:[#allocation4 + $0x130] sm:$0xff]
        %v1504 = vld [vmem:[#allocation4 + $0x138] sm:$0xff]
        %v1505 = vld [vmem:[#allocation4 + $0x140] sm:$0xff]
        %v1506 = vld [vmem:[#allocation4 + $0x148] sm:$0xff]
        %v1507 = vld [vmem:[#allocation4 + $0x150] sm:$0xff]
        %v1508 = vld [vmem:[#allocation4 + $0x158] sm:$0xff]
        %v1509 = vld [vmem:[#allocation4 + $0x160] sm:$0xff]
        %v1510 = vld [vmem:[#allocation4 + $0x168] sm:$0xff]
        %v1511 = vld [vmem:[#allocation4 + $0x170] sm:$0xff]
        %v1512 = vld [vmem:[#allocation4 + $0x178] sm:$0xff]
        %v1513 = vld [vmem:[#allocation4 + $0x180] sm:$0xff]
        %v1514 = vld [vmem:[#allocation4 + $0x188] sm:$0xff]
        %v1515 = vld [vmem:[#allocation4 + $0x190] sm:$0xff]
        %v1516 = vld [vmem:[#allocation4 + $0x198] sm:$0xff]
        %v1517 = vld [vmem:[#allocation4 + $0x1a0] sm:$0xff]
        %v1518 = vld [vmem:[#allocation4 + $0x1a8] sm:$0xff]
        %v1519 = vld [vmem:[#allocation4 + $0x1b0] sm:$0xff]
        %v1520 = vld [vmem:[#allocation4 + $0x1b8] sm:$0xff]
        %v1521 = vld [vmem:[#allocation4 + $0x1c0] sm:$0xff]
        %v1522 = vld [vmem:[#allocation4 + $0x1c8] sm:$0xff]
        %v1523 = vld [vmem:[#allocation4 + $0x1d0] sm:$0xff]
        %v1524 = vld [vmem:[#allocation4 + $0x1d8] sm:$0xff]
        %v1525 = vld [vmem:[#allocation4 + $0x1e0] sm:$0xff]
        %v1526 = vld [vmem:[#allocation4 + $0x1e8] sm:$0xff]
        %v1527 = vld [vmem:[#allocation4 + $0x1f0] sm:$0xff]
        %v1528 = vld [vmem:[#allocation4 + $0x1f8] sm:$0xff]
        %v1529 = vld [vmem:[#allocation4 + $0x200] sm:$0xff]
        %v1530 = vld [vmem:[#allocation4 + $0x208] sm:$0xff]
        %v1531 = vld [vmem:[#allocation4 + $0x210] sm:$0xff]
        %v1532 = vld [vmem:[#allocation4 + $0x218] sm:$0xff]
        %v1533 = vld [vmem:[#allocation4 + $0x220] sm:$0xff]
        %v1534 = vld [vmem:[#allocation4 + $0x228] sm:$0xff]
        %v1535 = vld [vmem:[#allocation4 + $0x230] sm:$0xff]
        %v1536 = vld [vmem:[#allocation4 + $0x238] sm:$0xff]
        %v1537 = vld [vmem:[#allocation4 + $0x240] sm:$0xff]
        %v1538 = vld [vmem:[#allocation4 + $0x248] sm:$0xff]
        %v1539 = vld [vmem:[#allocation4 + $0x250] sm:$0xff]
        %v1540 = vld [vmem:[#allocation4 + $0x258] sm:$0xff]
        %v1541 = vld [vmem:[#allocation4 + $0x260] sm:$0xff]
        %v1542 = vld [vmem:[#allocation4 + $0x268] sm:$0xff]
        %v1543 = vld [vmem:[#allocation4 + $0x270] sm:$0xff]
        %v1544 = vld [vmem:[#allocation4 + $0x278] sm:$0xff]
        %v1545 = vld [vmem:[#allocation4 + $0x280] sm:$0xff]
        %v1546 = vld [vmem:[#allocation4 + $0x288] sm:$0xff]
        %v1547 = vld [vmem:[#allocation4 + $0x290] sm:$0xff]
        %v1548 = vld [vmem:[#allocation4 + $0x298] sm:$0xff]
        %v1549 = vld [vmem:[#allocation4 + $0x2a0] sm:$0xff]
        %v1550 = vld [vmem:[#allocation4 + $0x2a8] sm:$0xff]
        %v1551 = vld [vmem:[#allocation4 + $0x2b0] sm:$0xff]
        %v1552 = vld [vmem:[#allocation4 + $0x2b8] sm:$0xff]
        %v1553 = vld [vmem:[#allocation4 + $0x2c0] sm:$0xff]
        %v1554 = vld [vmem:[#allocation4 + $0x2c8] sm:$0xff]
        %v1555 = vld [vmem:[#allocation4 + $0x2d0] sm:$0xff]
        %v1556 = vld [vmem:[#allocation4 + $0x2d8] sm:$0xff]
        %v1557 = vld [vmem:[#allocation4 + $0x2e0] sm:$0xff]
        %v1558 = vld [vmem:[#allocation4 + $0x2e8] sm:$0xff]
        %v1559 = vld [vmem:[#allocation4 + $0x2f0] sm:$0xff]
        %v1560 = vld [vmem:[#allocation4 + $0x2f8] sm:$0xff]
        %v1561 = vld [vmem:[#allocation4 + $0x300] sm:$0xff]
        %v1562 = vld [vmem:[#allocation4 + $0x308] sm:$0xff]
        %v1563 = vld [vmem:[#allocation4 + $0x310] sm:$0xff]
        %v1564 = vld [vmem:[#allocation4 + $0x318] sm:$0xff]
        %v1565 = vld [vmem:[#allocation4 + $0x320] sm:$0xff]
        %v1566 = vld [vmem:[#allocation4 + $0x328] sm:$0xff]
        %v1567 = vld [vmem:[#allocation4 + $0x330] sm:$0xff]
        %v1568 = vld [vmem:[#allocation4 + $0x338] sm:$0xff]
        %v1569 = vld [vmem:[#allocation4 + $0x340] sm:$0xff]
        %v1570 = vld [vmem:[#allocation4 + $0x348] sm:$0xff]
        %v1571 = vld [vmem:[#allocation4 + $0x350] sm:$0xff]
        %v1572 = vld [vmem:[#allocation4 + $0x358] sm:$0xff]
        %v1573 = vld [vmem:[%s2] sm:$0xff]
        %v1574 = vld [vmem:[%s2 + $0x8] sm:$0xff]
        %v1575 = vld [vmem:[%s2 + $0x10] sm:$0xff]
        %v1576 = vld [vmem:[%s2 + $0x18] sm:$0xff]
        %v1577 = vld [vmem:[%s2 + $0x20] sm:$0xff]
        %v1578 = vld [vmem:[%s2 + $0x28] sm:$0xff]
        %v1579 = vld [vmem:[%s2 + $0x30] sm:$0xff]
        %v1580 = vld [vmem:[%s2 + $0x38] sm:$0xff]
        %1582 = vset.pattern.permute.xlu0 0
        %1583 = vperm.xlu0 %1582, %v1573
        %v1584 = vpop.permute.xlu0 %1583
        %1587 = vset.pattern.permute.xlu0 0
        %1588 = vperm.xlu0 %1587, %v1574
        %v1589 = vpop.permute.xlu0 %1588
        %1592 = vset.pattern.permute.xlu0 0
        %1593 = vperm.xlu0 %1592, %v1575
        %v1594 = vpop.permute.xlu0 %1593
        %1597 = vset.pattern.permute.xlu0 0
        %1598 = vperm.xlu0 %1597, %v1576
        %v1599 = vpop.permute.xlu0 %1598
        %1602 = vset.pattern.permute.xlu0 0
        %1603 = vperm.xlu0 %1602, %v1577
        %v1604 = vpop.permute.xlu0 %1603
        %1607 = vset.pattern.permute.xlu0 0
        %1608 = vperm.xlu0 %1607, %v1578
        %v1609 = vpop.permute.xlu0 %1608
        %1612 = vset.pattern.permute.xlu0 0
        %1613 = vperm.xlu0 %1612, %v1579
        %v1614 = vpop.permute.xlu0 %1613
        %1617 = vset.pattern.permute.xlu0 0
        %1618 = vperm.xlu0 %1617, %v1580
        %v1619 = vpop.permute.xlu0 %1618
        %v1637 = vunpack.c.l.b16 %v1449
        %v1638 = vunpack.c.h.b16 %v1449
        %v1639 = vunpack.c.l.b16 %v1450
        %v1640 = vunpack.c.h.b16 %v1450
        %v1641 = vunpack.c.l.b16 %v1451
        %v1642 = vunpack.c.h.b16 %v1451
        %v1643 = vunpack.c.l.b16 %v1452
        %v1644 = vunpack.c.h.b16 %v1452
        %v1645 = vunpack.c.l.b16 %v1453
        %v1646 = vunpack.c.h.b16 %v1453
        %v1647 = vunpack.c.l.b16 %v1454
        %v1648 = vunpack.c.h.b16 %v1454
        %v1649 = vunpack.c.l.b16 %v1455
        %v1650 = vunpack.c.h.b16 %v1455
        %v1651 = vunpack.c.l.b16 %v1456
        %v1652 = vunpack.c.h.b16 %v1456
        %v1653 = vunpack.c.l.b16 %v1457
        %v1654 = vunpack.c.h.b16 %v1457
        %v1655 = vunpack.c.l.b16 %v1458
        %v1656 = vunpack.c.h.b16 %v1458
        %v1657 = vunpack.c.l.b16 %v1459
        %v1658 = vunpack.c.h.b16 %v1459
        %v1659 = vunpack.c.l.b16 %v1460
        %v1660 = vunpack.c.h.b16 %v1460
        %v1661 = vunpack.c.l.b16 %v1461
        %v1662 = vunpack.c.h.b16 %v1461
        %v1663 = vunpack.c.l.b16 %v1462
        %v1664 = vunpack.c.h.b16 %v1462
        %v1665 = vunpack.c.l.b16 %v1463
        %v1666 = vunpack.c.h.b16 %v1463
        %v1667 = vunpack.c.l.b16 %v1464
        %v1668 = vunpack.c.h.b16 %v1464
        %v1669 = vpack.c.b16 %v1641, %v1637
        %v1670 = vpack.c.b16 %v1642, %v1638
        %v1671 = vpack.c.b16 %v1643, %v1639
        %v1672 = vpack.c.b16 %v1644, %v1640
        %v1673 = vpack.c.b16 %v1649, %v1645
        %v1674 = vpack.c.b16 %v1650, %v1646
        %v1675 = vpack.c.b16 %v1651, %v1647
        %v1676 = vpack.c.b16 %v1652, %v1648
        %v1677 = vpack.c.b16 %v1657, %v1653
        %v1678 = vpack.c.b16 %v1658, %v1654
        %v1679 = vpack.c.b16 %v1659, %v1655
        %v1680 = vpack.c.b16 %v1660, %v1656
        %v1681 = vpack.c.b16 %v1665, %v1661
        %v1682 = vpack.c.b16 %v1666, %v1662
        %v1683 = vpack.c.b16 %v1667, %v1663
        %v1684 = vpack.c.b16 %v1668, %v1664
        %vm1697 = vcmask 392192
        %v1699 = vsel %vm1697, %v1672, 0
        %v1702 = vsel %vm1697, %v1676, 0
        %v1705 = vsel %vm1697, %v1680, 0
        %v1708 = vsel %vm1697, %v1684, 0
        %1710 = vmatprep.subr.bf16.mxu0 %v1466
        %1711 = vmatpush1.bf16.msra.mxu0 %v1465
        %1712 = vmatprep.subr.bf16.mxu0 %v1470
        %1713 = vmatpush1.bf16.msra.mxu0 %v1469
        %1714 = vmatprep.subr.bf16.mxu0 %v1474
        %1715 = vmatpush1.bf16.msra.mxu0 %v1473
        %1716 = vmatprep.subr.bf16.mxu0 %v1478
        %1717 = vmatpush1.bf16.msra.mxu0 %v1477
        %1718 = vmatprep.subr.bf16.mxu0 %v1482
        %1719 = vmatpush1.bf16.msra.mxu0 %v1481
        %1720 = vmatprep.subr.bf16.mxu0 %v1486
        %1721 = vmatpush1.bf16.msra.mxu0 %v1485
        %1722 = vmatprep.subr.bf16.mxu0 %v1490
        %1723 = vmatpush1.bf16.msra.mxu0 %v1489
        %1724 = vmatprep.subr.bf16.mxu0 %v1494
        %1725 = vmatpush1.bf16.msra.mxu0 %v1493
        %1726 = vmatprep.subr.bf16.mxu0 %v1498
        %1727 = vmatpush1.bf16.msra.mxu0 %v1497
        %1728 = vmatprep.subr.bf16.mxu0 %v1502
        %1729 = vmatpush1.bf16.msra.mxu0 %v1501
        %1730 = vmatprep.subr.bf16.mxu0 %v1506
        %1731 = vmatpush1.bf16.msra.mxu0 %v1505
        %1732 = vmatprep.subr.bf16.mxu0 %v1510
        %1733 = vmatpush1.bf16.msra.mxu0 %v1509
        %1734 = vmatprep.subr.bf16.mxu0 %v1514
        %1735 = vmatpush1.bf16.msra.mxu0 %v1513
        %1736 = vmatprep.subr.bf16.mxu0 %v1518
        %1737 = vmatpush1.bf16.msra.mxu0 %v1517
        %1738 = vmatprep.subr.bf16.mxu0 %v1522
        %1739 = vmatpush1.bf16.msra.mxu0 %v1521
        %1740 = vmatprep.subr.bf16.mxu0 %v1526
        %1741 = vmatpush1.bf16.msra.mxu0 %v1525
        %1742 = vmatprep.mubr.bf16.mxu0 %v1670
        %1743 = vmatmul.mubr.bf16.gmra.mrb[0].mxu0 %v1669
        %v1744 = vpop.f32.mrb[0].mxu0
        %v1745 = vadd.f32 %v1584, %v1744
        %v1746 = vpop.f32.mrb[0].mxu0
        %v1747 = vadd.f32 %v1584, %v1746
        %v1748 = vpop.f32.mrb[0].mxu0
        %v1749 = vadd.f32 %v1589, %v1748
        %v1750 = vpop.f32.mrb[0].mxu0
        %v1751 = vadd.f32 %v1589, %v1750
        %1752 = vmatprep.mubr.bf16.mxu0 %v1674
        %1753 = vmatmul.mubr.bf16.gmra.mrb[0].mxu0 %v1673
        %v1754 = vpop.f32.mrb[0].mxu0
        %v1755 = vadd.f32 %v1594, %v1754
        %v1756 = vpop.f32.mrb[0].mxu0
        %v1757 = vadd.f32 %v1594, %v1756
        %v1758 = vpop.f32.mrb[0].mxu0
        %v1759 = vadd.f32 %v1599, %v1758
        %v1760 = vpop.f32.mrb[0].mxu0
        %v1761 = vadd.f32 %v1599, %v1760
        %1762 = vmatprep.mubr.bf16.mxu0 %v1678
        %1763 = vmatmul.mubr.bf16.gmra.mrb[0].mxu0 %v1677
        %v1764 = vpop.f32.mrb[0].mxu0
        %v1765 = vadd.f32 %v1604, %v1764
        %v1766 = vpop.f32.mrb[0].mxu0
        %v1767 = vadd.f32 %v1604, %v1766
        %v1768 = vpop.f32.mrb[0].mxu0
        %v1769 = vadd.f32 %v1609, %v1768
        %v1770 = vpop.f32.mrb[0].mxu0
        %v1771 = vadd.f32 %v1609, %v1770
        %1772 = vmatprep.mubr.bf16.mxu0 %v1682
        %1773 = vmatmul.mubr.bf16.gmra.mrb[0].mxu0 %v1681
        %v1774 = vpop.f32.mrb[0].mxu0
        %v1775 = vadd.f32 %v1614, %v1774
        %v1776 = vpop.f32.mrb[0].mxu0
        %v1777 = vadd.f32 %v1614, %v1776
        %v1778 = vpop.f32.mrb[0].mxu0
        %v1779 = vadd.f32 %v1619, %v1778
        %v1780 = vpop.f32.mrb[0].mxu0
        %v1781 = vadd.f32 %v1619, %v1780
        %1782 = vdwg.mxu0
        %1783 = vmatprep.subr.bf16.mxu0 %v1530
        %1784 = vmatpush1.bf16.msra.mxu0 %v1529
        %1785 = vmatprep.subr.bf16.mxu0 %v1534
        %1786 = vmatpush1.bf16.msra.mxu0 %v1533
        %1787 = vmatprep.subr.bf16.mxu0 %v1538
        %1788 = vmatpush1.bf16.msra.mxu0 %v1537
        %1789 = vmatprep.subr.bf16.mxu0 %v1542
        %1790 = vmatpush1.bf16.msra.mxu0 %v1541
        %1791 = vmatprep.subr.bf16.mxu0 %v1546
        %1792 = vmatpush1.bf16.msra.mxu0 %v1545
        %1793 = vmatprep.subr.bf16.mxu0 %v1550
        %1794 = vmatpush1.bf16.msra.mxu0 %v1549
        %1795 = vmatprep.subr.bf16.mxu0 %v1554
        %1796 = vmatpush1.bf16.msra.mxu0 %v1553
        %1797 = vmatprep.subr.bf16.mxu0 %v1558
        %1798 = vmatpush1.bf16.msra.mxu0 %v1557
        %1799 = vmatprep.subr.bf16.mxu0 %v1562
        %1800 = vmatpush1.bf16.msra.mxu0 %v1561
        %1801 = vmatprep.subr.bf16.mxu0 %v1566
        %1802 = vmatpush1.bf16.msra.mxu0 %v1565
        %1803 = vmatprep.subr.bf16.mxu0 %v1570
        %1804 = vmatpush1.bf16.msra.mxu0 %v1569
        %1805 = vmatprep.subr.bf16.mxu0 0
        %1806 = vmatpush1.bf16.msra.mxu0 0
        %1807 = vmatprep.subr.bf16.mxu0 0
        %1808 = vmatpush1.bf16.msra.mxu0 0
        %1809 = vmatprep.subr.bf16.mxu0 0
        %1810 = vmatpush1.bf16.msra.mxu0 0
        %1811 = vmatprep.subr.bf16.mxu0 0
        %1812 = vmatpush1.bf16.msra.mxu0 0
        %1813 = vmatprep.subr.bf16.mxu0 0
        %1814 = vmatpush1.bf16.msra.mxu0 0
        %1815 = vmatprep.mubr.bf16.mxu0 %v1699
        %1816 = vmatmul.mubr.bf16.gmra.mrb[0].mxu0 %v1671
        %v1817 = vpop.f32.mrb[0].mxu0
        %v1818 = vadd.f32 %v1745, %v1817
        %v1819 = vpop.f32.mrb[0].mxu0
        %v1820 = vadd.f32 %v1747, %v1819
        %v1821 = vpop.f32.mrb[0].mxu0
        %v1822 = vadd.f32 %v1749, %v1821
        %v1823 = vpop.f32.mrb[0].mxu0
        %v1824 = vadd.f32 %v1751, %v1823
        %1825 = vmatprep.mubr.bf16.mxu0 %v1702
        %1826 = vmatmul.mubr.bf16.gmra.mrb[0].mxu0 %v1675
        %v1827 = vpop.f32.mrb[0].mxu0
        %v1828 = vadd.f32 %v1755, %v1827
        %v1829 = vpop.f32.mrb[0].mxu0
        %v1830 = vadd.f32 %v1757, %v1829
        %v1831 = vpop.f32.mrb[0].mxu0
        %v1832 = vadd.f32 %v1759, %v1831
        %v1833 = vpop.f32.mrb[0].mxu0
        %v1834 = vadd.f32 %v1761, %v1833
        %1835 = vmatprep.mubr.bf16.mxu0 %v1705
        %1836 = vmatmul.mubr.bf16.gmra.mrb[0].mxu0 %v1679
        %v1837 = vpop.f32.mrb[0].mxu0
        %v1838 = vadd.f32 %v1765, %v1837
        %v1839 = vpop.f32.mrb[0].mxu0
        %v1840 = vadd.f32 %v1767, %v1839
        %v1841 = vpop.f32.mrb[0].mxu0
        %v1842 = vadd.f32 %v1769, %v1841
        %v1843 = vpop.f32.mrb[0].mxu0
        %v1844 = vadd.f32 %v1771, %v1843
        %1845 = vmatprep.mubr.bf16.mxu0 %v1708
        %1846 = vmatmul.mubr.bf16.gmra.mrb[0].mxu0 %v1683
        %v1847 = vpop.f32.mrb[0].mxu0
        %v1848 = vadd.f32 %v1775, %v1847
        %v1849 = vpop.f32.mrb[0].mxu0
        %v1850 = vadd.f32 %v1777, %v1849
        %v1851 = vpop.f32.mrb[0].mxu0
        %v1852 = vadd.f32 %v1779, %v1851
        %v1853 = vpop.f32.mrb[0].mxu0
        %v1854 = vadd.f32 %v1781, %v1853
        %1855 = vdwg.mxu0
        %1856 = vmatprep.subr.bf16.mxu0 %v1468
        %1857 = vmatpush1.bf16.msra.mxu0 %v1467
        %1858 = vmatprep.subr.bf16.mxu0 %v1472
        %1859 = vmatpush1.bf16.msra.mxu0 %v1471
        %1860 = vmatprep.subr.bf16.mxu0 %v1476
        %1861 = vmatpush1.bf16.msra.mxu0 %v1475
        %1862 = vmatprep.subr.bf16.mxu0 %v1480
        %1863 = vmatpush1.bf16.msra.mxu0 %v1479
        %1864 = vmatprep.subr.bf16.mxu0 %v1484
        %1865 = vmatpush1.bf16.msra.mxu0 %v1483
        %1866 = vmatprep.subr.bf16.mxu0 %v1488
        %1867 = vmatpush1.bf16.msra.mxu0 %v1487
        %1868 = vmatprep.subr.bf16.mxu0 %v1492
        %1869 = vmatpush1.bf16.msra.mxu0 %v1491
        %1870 = vmatprep.subr.bf16.mxu0 %v1496
        %1871 = vmatpush1.bf16.msra.mxu0 %v1495
        %1872 = vmatprep.subr.bf16.mxu0 %v1500
        %1873 = vmatpush1.bf16.msra.mxu0 %v1499
        %1874 = vmatprep.subr.bf16.mxu0 %v1504
        %1875 = vmatpush1.bf16.msra.mxu0 %v1503
        %1876 = vmatprep.subr.bf16.mxu0 %v1508
        %1877 = vmatpush1.bf16.msra.mxu0 %v1507
        %1878 = vmatprep.subr.bf16.mxu0 %v1512
        %1879 = vmatpush1.bf16.msra.mxu0 %v1511
        %1880 = vmatprep.subr.bf16.mxu0 %v1516
        %1881 = vmatpush1.bf16.msra.mxu0 %v1515
        %1882 = vmatprep.subr.bf16.mxu0 %v1520
        %1883 = vmatpush1.bf16.msra.mxu0 %v1519
        %1884 = vmatprep.subr.bf16.mxu0 %v1524
        %1885 = vmatpush1.bf16.msra.mxu0 %v1523
        %1886 = vmatprep.subr.bf16.mxu0 %v1528
        %1887 = vmatpush1.bf16.msra.mxu0 %v1527
        %1888 = vmatprep.mubr.bf16.mxu0 %v1670
        %1889 = vmatmul.mubr.bf16.gmra.mrb[0].mxu0 %v1669
        %v1890 = vpop.f32.mrb[0].mxu0
        %v1891 = vadd.f32 %v1584, %v1890
        %v1892 = vpop.f32.mrb[0].mxu0
        %v1893 = vadd.f32 %v1584, %v1892
        %v1894 = vpop.f32.mrb[0].mxu0
        %v1895 = vadd.f32 %v1589, %v1894
        %v1896 = vpop.f32.mrb[0].mxu0
        %v1897 = vadd.f32 %v1589, %v1896
        %1898 = vmatprep.mubr.bf16.mxu0 %v1674
        %1899 = vmatmul.mubr.bf16.gmra.mrb[0].mxu0 %v1673
        %v1900 = vpop.f32.mrb[0].mxu0
        %v1901 = vadd.f32 %v1594, %v1900
        %v1902 = vpop.f32.mrb[0].mxu0
        %v1903 = vadd.f32 %v1594, %v1902
        %v1904 = vpop.f32.mrb[0].mxu0
        %v1905 = vadd.f32 %v1599, %v1904
        %v1906 = vpop.f32.mrb[0].mxu0
        %v1907 = vadd.f32 %v1599, %v1906
        %1908 = vmatprep.mubr.bf16.mxu0 %v1678
        %1909 = vmatmul.mubr.bf16.gmra.mrb[0].mxu0 %v1677
        %v1910 = vpop.f32.mrb[0].mxu0
        %v1911 = vadd.f32 %v1604, %v1910
        %v1912 = vpop.f32.mrb[0].mxu0
        %v1913 = vadd.f32 %v1604, %v1912
        %v1914 = vpop.f32.mrb[0].mxu0
        %v1915 = vadd.f32 %v1609, %v1914
        %v1916 = vpop.f32.mrb[0].mxu0
        %v1917 = vadd.f32 %v1609, %v1916
        %1918 = vmatprep.mubr.bf16.mxu0 %v1682
        %1919 = vmatmul.mubr.bf16.gmra.mrb[0].mxu0 %v1681
        %v1920 = vpop.f32.mrb[0].mxu0
        %v1921 = vadd.f32 %v1614, %v1920
        %v1922 = vpop.f32.mrb[0].mxu0
        %v1923 = vadd.f32 %v1614, %v1922
        %v1924 = vpop.f32.mrb[0].mxu0
        %v1925 = vadd.f32 %v1619, %v1924
        %v1926 = vpop.f32.mrb[0].mxu0
        %v1927 = vadd.f32 %v1619, %v1926
        %1928 = vdwg.mxu0
        %1929 = vmatprep.subr.bf16.mxu0 %v1532
        %1930 = vmatpush1.bf16.msra.mxu0 %v1531
        %1931 = vmatprep.subr.bf16.mxu0 %v1536
        %1932 = vmatpush1.bf16.msra.mxu0 %v1535
        %1933 = vmatprep.subr.bf16.mxu0 %v1540
        %1934 = vmatpush1.bf16.msra.mxu0 %v1539
        %1935 = vmatprep.subr.bf16.mxu0 %v1544
        %1936 = vmatpush1.bf16.msra.mxu0 %v1543
        %1937 = vmatprep.subr.bf16.mxu0 %v1548
        %1938 = vmatpush1.bf16.msra.mxu0 %v1547
        %1939 = vmatprep.subr.bf16.mxu0 %v1552
        %1940 = vmatpush1.bf16.msra.mxu0 %v1551
        %1941 = vmatprep.subr.bf16.mxu0 %v1556
        %1942 = vmatpush1.bf16.msra.mxu0 %v1555
        %1943 = vmatprep.subr.bf16.mxu0 %v1560
        %1944 = vmatpush1.bf16.msra.mxu0 %v1559
        %1945 = vmatprep.subr.bf16.mxu0 %v1564
        %1946 = vmatpush1.bf16.msra.mxu0 %v1563
        %1947 = vmatprep.subr.bf16.mxu0 %v1568
        %1948 = vmatpush1.bf16.msra.mxu0 %v1567
        %1949 = vmatprep.subr.bf16.mxu0 %v1572
        %1950 = vmatpush1.bf16.msra.mxu0 %v1571
        %1951 = vmatprep.subr.bf16.mxu0 0
        %1952 = vmatpush1.bf16.msra.mxu0 0
        %1953 = vmatprep.subr.bf16.mxu0 0
        %1954 = vmatpush1.bf16.msra.mxu0 0
        %1955 = vmatprep.subr.bf16.mxu0 0
        %1956 = vmatpush1.bf16.msra.mxu0 0
        %1957 = vmatprep.subr.bf16.mxu0 0
        %1958 = vmatpush1.bf16.msra.mxu0 0
        %1959 = vmatprep.subr.bf16.mxu0 0
        %1960 = vmatpush1.bf16.msra.mxu0 0
        %1961 = vmatprep.mubr.bf16.mxu0 %v1699
        %1962 = vmatmul.mubr.bf16.gmra.mrb[0].mxu0 %v1671
        %v1963 = vpop.f32.mrb[0].mxu0
        %v1964 = vadd.f32 %v1891, %v1963
        %v1965 = vpop.f32.mrb[0].mxu0
        %v1966 = vadd.f32 %v1893, %v1965
        %v1967 = vpop.f32.mrb[0].mxu0
        %v1968 = vadd.f32 %v1895, %v1967
        %v1969 = vpop.f32.mrb[0].mxu0
        %v1970 = vadd.f32 %v1897, %v1969
        %1971 = vmatprep.mubr.bf16.mxu0 %v1702
        %1972 = vmatmul.mubr.bf16.gmra.mrb[0].mxu0 %v1675
        %v1973 = vpop.f32.mrb[0].mxu0
        %v1974 = vadd.f32 %v1901, %v1973
        %v1975 = vpop.f32.mrb[0].mxu0
        %v1976 = vadd.f32 %v1903, %v1975
        %v1977 = vpop.f32.mrb[0].mxu0
        %v1978 = vadd.f32 %v1905, %v1977
        %v1979 = vpop.f32.mrb[0].mxu0
        %v1980 = vadd.f32 %v1907, %v1979
        %1981 = vmatprep.mubr.bf16.mxu0 %v1705
        %1982 = vmatmul.mubr.bf16.gmra.mrb[0].mxu0 %v1679
        %v1983 = vpop.f32.mrb[0].mxu0
        %v1984 = vadd.f32 %v1911, %v1983
        %v1985 = vpop.f32.mrb[0].mxu0
        %v1986 = vadd.f32 %v1913, %v1985
        %v1987 = vpop.f32.mrb[0].mxu0
        %v1988 = vadd.f32 %v1915, %v1987
        %v1989 = vpop.f32.mrb[0].mxu0
        %v1990 = vadd.f32 %v1917, %v1989
        %1991 = vmatprep.mubr.bf16.mxu0 %v1708
        %1992 = vmatmul.mubr.bf16.gmra.mrb[0].mxu0 %v1683
        %v1993 = vpop.f32.mrb[0].mxu0
        %v1994 = vadd.f32 %v1921, %v1993
        %v1995 = vpop.f32.mrb[0].mxu0
        %v1996 = vadd.f32 %v1923, %v1995
        %v1997 = vpop.f32.mrb[0].mxu0
        %v1998 = vadd.f32 %v1925, %v1997
        %v1999 = vpop.f32.mrb[0].mxu0
        %v2000 = vadd.f32 %v1927, %v1999
        %2001 = vdwg.mxu0
        %v2002 = vld [vmem:[%s320] sm:$0xf]
        %v2004 = vlaneseq
        %v2005 = vshrl.u32 %v2004, 7
        %v2006 = vsub.s32 0, %v2005
        %v2007 = vrot.slane %v2002, %v2006
        %v2008 = vlaneseq
        %v2009 = vshrl.u32 %v2008, 7
        %v2010 = vsub.s32 1, %v2009
        %v2011 = vrot.slane %v2002, %v2010
        %v2012 = vlaneseq
        %v2013 = vshrl.u32 %v2012, 7
        %v2014 = vsub.s32 2, %v2013
        %v2015 = vrot.slane %v2002, %v2014
        %v2016 = vlaneseq
        %v2017 = vshrl.u32 %v2016, 7
        %v2018 = vsub.s32 3, %v2017
        %v2019 = vrot.slane %v2002, %v2018
        %v2024 = vmul.f32 %v1818, %v2007
        %v2025 = vmul.f32 %v1820, %v2011
        %v2026 = vmul.f32 %v1964, %v2015
        %v2027 = vmul.f32 %v1966, %v2019
        %v2028 = vmul.f32 %v1822, %v2007
        %v2029 = vmul.f32 %v1824, %v2011
        %v2030 = vmul.f32 %v1968, %v2015
        %v2031 = vmul.f32 %v1970, %v2019
        %v2032 = vmul.f32 %v1828, %v2007
        %v2033 = vmul.f32 %v1830, %v2011
        %v2034 = vmul.f32 %v1974, %v2015
        %v2035 = vmul.f32 %v1976, %v2019
        %v2036 = vmul.f32 %v1832, %v2007
        %v2037 = vmul.f32 %v1834, %v2011
        %v2038 = vmul.f32 %v1978, %v2015
        %v2039 = vmul.f32 %v1980, %v2019
        %v2040 = vmul.f32 %v1838, %v2007
        %v2041 = vmul.f32 %v1840, %v2011
        %v2042 = vmul.f32 %v1984, %v2015
        %v2043 = vmul.f32 %v1986, %v2019
        %v2044 = vmul.f32 %v1842, %v2007
        %v2045 = vmul.f32 %v1844, %v2011
        %v2046 = vmul.f32 %v1988, %v2015
        %v2047 = vmul.f32 %v1990, %v2019
        %v2048 = vmul.f32 %v1848, %v2007
        %v2049 = vmul.f32 %v1850, %v2011
        %v2050 = vmul.f32 %v1994, %v2015
        %v2051 = vmul.f32 %v1996, %v2019
        %v2052 = vmul.f32 %v1852, %v2007
        %v2053 = vmul.f32 %v1854, %v2011
        %v2054 = vmul.f32 %v1998, %v2015
        %v2055 = vmul.f32 %v2000, %v2019
        %v2056 = vld [vmem:[#allocation5] sm:$0xff]
        %v2057 = vld [vmem:[#allocation5 + $0x8] sm:$0xff]
        %v2058 = vld [vmem:[#allocation5 + $0x10] sm:$0xff]
        %v2059 = vld [vmem:[#allocation5 + $0x18] sm:$0xff]
        %v2060 = vld [vmem:[#allocation5 + $0x20] sm:$0xff]
        %v2061 = vld [vmem:[#allocation5 + $0x28] sm:$0xff]
        %v2062 = vld [vmem:[#allocation5 + $0x30] sm:$0xff]
        %v2063 = vld [vmem:[#allocation5 + $0x38] sm:$0xff]
        %v2064 = vadd.f32 %v2024, %v2025
        %v2065 = vadd.f32 %v2064, %v2026
        %v2066 = vadd.f32 %v2065, %v2027
        %2067 = vadd.xlane.f32.xlu0 %v2066
        %v2068 = vpop.xlane.xlu0 %2067
        %v2069 = vadd.f32 %v2028, %v2029
        %v2070 = vadd.f32 %v2069, %v2030
        %v2071 = vadd.f32 %v2070, %v2031
        %2072 = vadd.xlane.f32.xlu0 %v2071
        %v2073 = vpop.xlane.xlu0 %2072
        %v2074 = vadd.f32 %v2032, %v2033
        %v2075 = vadd.f32 %v2074, %v2034
        %v2076 = vadd.f32 %v2075, %v2035
        %2077 = vadd.xlane.f32.xlu0 %v2076
        %v2078 = vpop.xlane.xlu0 %2077
        %v2079 = vadd.f32 %v2036, %v2037
        %v2080 = vadd.f32 %v2079, %v2038
        %v2081 = vadd.f32 %v2080, %v2039
        %2082 = vadd.xlane.f32.xlu0 %v2081
        %v2083 = vpop.xlane.xlu0 %2082
        %v2084 = vadd.f32 %v2040, %v2041
        %v2085 = vadd.f32 %v2084, %v2042
        %v2086 = vadd.f32 %v2085, %v2043
        %2087 = vadd.xlane.f32.xlu0 %v2086
        %v2088 = vpop.xlane.xlu0 %2087
        %v2089 = vadd.f32 %v2044, %v2045
        %v2090 = vadd.f32 %v2089, %v2046
        %v2091 = vadd.f32 %v2090, %v2047
        %2092 = vadd.xlane.f32.xlu0 %v2091
        %v2093 = vpop.xlane.xlu0 %2092
        %v2094 = vadd.f32 %v2048, %v2049
        %v2095 = vadd.f32 %v2094, %v2050
        %v2096 = vadd.f32 %v2095, %v2051
        %2097 = vadd.xlane.f32.xlu0 %v2096
        %v2098 = vpop.xlane.xlu0 %2097
        %v2099 = vadd.f32 %v2052, %v2053
        %v2100 = vadd.f32 %v2099, %v2054
        %v2101 = vadd.f32 %v2100, %v2055
        %2102 = vadd.xlane.f32.xlu0 %v2101
        %v2103 = vpop.xlane.xlu0 %2102
        %v2104 = vadd.f32 %v2056, %v2068
        %v2105 = vadd.f32 %v2057, %v2073
        %v2106 = vadd.f32 %v2058, %v2078
        %v2107 = vadd.f32 %v2059, %v2083
        %v2108 = vadd.f32 %v2060, %v2088
        %v2109 = vadd.f32 %v2061, %v2093
        %v2110 = vadd.f32 %v2062, %v2098
        %v2111 = vadd.f32 %v2063, %v2103
        %vm2112 = vcmask 7168
        %2113 = vst.msk [vmem:[#allocation5] sm:$0xff] %vm2112, %v2104
        %2114 = vst.msk [vmem:[#allocation5 + $0x8] sm:$0xff] %vm2112, %v2105
        %2115 = vst.msk [vmem:[#allocation5 + $0x10] sm:$0xff] %vm2112, %v2106
        %2116 = vst.msk [vmem:[#allocation5 + $0x18] sm:$0xff] %vm2112, %v2107
        %2117 = vst.msk [vmem:[#allocation5 + $0x20] sm:$0xff] %vm2112, %v2108
        %2118 = vst.msk [vmem:[#allocation5 + $0x28] sm:$0xff] %vm2112, %v2109
        %2119 = vst.msk [vmem:[#allocation5 + $0x30] sm:$0xff] %vm2112, %v2110
        %2120 = vst.msk [vmem:[#allocation5 + $0x38] sm:$0xff] %vm2112, %v2111
        %v2121 = vld [vmem:[#allocation6] sm:$0xff]
        %v2122 = vld [vmem:[#allocation6 + $0x8] sm:$0xff]
        %v2123 = vld [vmem:[#allocation6 + $0x10] sm:$0xff]
        %v2124 = vld [vmem:[#allocation6 + $0x18] sm:$0xff]
        %v2125 = vld [vmem:[#allocation6 + $0x20] sm:$0xff]
        %v2126 = vld [vmem:[#allocation6 + $0x28] sm:$0xff]
        %v2127 = vld [vmem:[#allocation6 + $0x30] sm:$0xff]
        %v2128 = vld [vmem:[#allocation6 + $0x38] sm:$0xff]
        %v2129 = vmul.f32 %v2024, %v1818
        %v2130 = vmul.f32 %v2025, %v1820
        %v2131 = vmul.f32 %v2026, %v1964
        %v2132 = vmul.f32 %v2027, %v1966
        %v2133 = vmul.f32 %v2028, %v1822
        %v2134 = vmul.f32 %v2029, %v1824
        %v2135 = vmul.f32 %v2030, %v1968
        %v2136 = vmul.f32 %v2031, %v1970
        %v2137 = vmul.f32 %v2032, %v1828
        %v2138 = vmul.f32 %v2033, %v1830
        %v2139 = vmul.f32 %v2034, %v1974
        %v2140 = vmul.f32 %v2035, %v1976
        %v2141 = vmul.f32 %v2036, %v1832
        %v2142 = vmul.f32 %v2037, %v1834
        %v2143 = vmul.f32 %v2038, %v1978
        %v2144 = vmul.f32 %v2039, %v1980
        %v2145 = vmul.f32 %v2040, %v1838
        %v2146 = vmul.f32 %v2041, %v1840
        %v2147 = vmul.f32 %v2042, %v1984
        %v2148 = vmul.f32 %v2043, %v1986
        %v2149 = vmul.f32 %v2044, %v1842
        %v2150 = vmul.f32 %v2045, %v1844
        %v2151 = vmul.f32 %v2046, %v1988
        %v2152 = vmul.f32 %v2047, %v1990
        %v2153 = vmul.f32 %v2048, %v1848
        %v2154 = vmul.f32 %v2049, %v1850
        %v2155 = vmul.f32 %v2050, %v1994
        %v2156 = vmul.f32 %v2051, %v1996
        %v2157 = vmul.f32 %v2052, %v1852
        %v2158 = vmul.f32 %v2053, %v1854
        %v2159 = vmul.f32 %v2054, %v1998
        %v2160 = vmul.f32 %v2055, %v2000
        %v2161 = vadd.f32 %v2129, %v2130
        %v2162 = vadd.f32 %v2161, %v2131
        %v2163 = vadd.f32 %v2162, %v2132
        %2164 = vadd.xlane.f32.xlu0 %v2163
        %v2165 = vpop.xlane.xlu0 %2164
        %v2166 = vadd.f32 %v2133, %v2134
        %v2167 = vadd.f32 %v2166, %v2135
        %v2168 = vadd.f32 %v2167, %v2136
        %2169 = vadd.xlane.f32.xlu0 %v2168
        %v2170 = vpop.xlane.xlu0 %2169
        %v2171 = vadd.f32 %v2137, %v2138
        %v2172 = vadd.f32 %v2171, %v2139
        %v2173 = vadd.f32 %v2172, %v2140
        %2174 = vadd.xlane.f32.xlu0 %v2173
        %v2175 = vpop.xlane.xlu0 %2174
        %v2176 = vadd.f32 %v2141, %v2142
        %v2177 = vadd.f32 %v2176, %v2143
        %v2178 = vadd.f32 %v2177, %v2144
        %2179 = vadd.xlane.f32.xlu0 %v2178
        %v2180 = vpop.xlane.xlu0 %2179
        %v2181 = vadd.f32 %v2145, %v2146
        %v2182 = vadd.f32 %v2181, %v2147
        %v2183 = vadd.f32 %v2182, %v2148
        %2184 = vadd.xlane.f32.xlu0 %v2183
        %v2185 = vpop.xlane.xlu0 %2184
        %v2186 = vadd.f32 %v2149, %v2150
        %v2187 = vadd.f32 %v2186, %v2151
        %v2188 = vadd.f32 %v2187, %v2152
        %2189 = vadd.xlane.f32.xlu0 %v2188
        %v2190 = vpop.xlane.xlu0 %2189
        %v2191 = vadd.f32 %v2153, %v2154
        %v2192 = vadd.f32 %v2191, %v2155
        %v2193 = vadd.f32 %v2192, %v2156
        %2194 = vadd.xlane.f32.xlu0 %v2193
        %v2195 = vpop.xlane.xlu0 %2194
        %v2196 = vadd.f32 %v2157, %v2158
        %v2197 = vadd.f32 %v2196, %v2159
        %v2198 = vadd.f32 %v2197, %v2160
        %2199 = vadd.xlane.f32.xlu0 %v2198
        %v2200 = vpop.xlane.xlu0 %2199
        %v2201 = vadd.f32 %v2121, %v2165
        %v2202 = vadd.f32 %v2122, %v2170
        %v2203 = vadd.f32 %v2123, %v2175
        %v2204 = vadd.f32 %v2124, %v2180
        %v2205 = vadd.f32 %v2125, %v2185
        %v2206 = vadd.f32 %v2126, %v2190
        %v2207 = vadd.f32 %v2127, %v2195
        %v2208 = vadd.f32 %v2128, %v2200
        %2209 = vst.msk [vmem:[#allocation6] sm:$0xff] %vm2112, %v2201
        %2210 = vst.msk [vmem:[#allocation6 + $0x8] sm:$0xff] %vm2112, %v2202
        %2211 = vst.msk [vmem:[#allocation6 + $0x10] sm:$0xff] %vm2112, %v2203
        %2212 = vst.msk [vmem:[#allocation6 + $0x18] sm:$0xff] %vm2112, %v2204
        %2213 = vst.msk [vmem:[#allocation6 + $0x20] sm:$0xff] %vm2112, %v2205
        %2214 = vst.msk [vmem:[#allocation6 + $0x28] sm:$0xff] %vm2112, %v2206
        %2215 = vst.msk [vmem:[#allocation6 + $0x30] sm:$0xff] %vm2112, %v2207
        %2216 = vst.msk [vmem:[#allocation6 + $0x38] sm:$0xff] %vm2112, %v2208
        %v2217 = vpack.c.bf16 %v1822, %v1818
        %v2218 = vpack.c.bf16 %v1824, %v1820
        %v2219 = vpack.c.bf16 %v1968, %v1964
        %v2220 = vpack.c.bf16 %v1970, %v1966
        %v2221 = vpack.c.bf16 %v1832, %v1828
        %v2222 = vpack.c.bf16 %v1834, %v1830
        %v2223 = vpack.c.bf16 %v1978, %v1974
        %v2224 = vpack.c.bf16 %v1980, %v1976
        %v2225 = vpack.c.bf16 %v1842, %v1838
        %v2226 = vpack.c.bf16 %v1844, %v1840
        %v2227 = vpack.c.bf16 %v1988, %v1984
        %v2228 = vpack.c.bf16 %v1990, %v1986
        %v2229 = vpack.c.bf16 %v1852, %v1848
        %v2230 = vpack.c.bf16 %v1854, %v1850
        %v2231 = vpack.c.bf16 %v1998, %v1994
        %v2232 = vpack.c.bf16 %v2000, %v1996
        %v2249 = vunpack.c.l.b16 %v2217
        %v2250 = vunpack.c.l.b16 %v2218
        %v2251 = vunpack.c.l.b16 %v2219
        %v2252 = vunpack.c.l.b16 %v2220
        %v2253 = vunpack.c.h.b16 %v2217
        %v2254 = vunpack.c.h.b16 %v2218
        %v2255 = vunpack.c.h.b16 %v2219
        %v2256 = vunpack.c.h.b16 %v2220
        %v2257 = vunpack.c.l.b16 %v2221
        %v2258 = vunpack.c.l.b16 %v2222
        %v2259 = vunpack.c.l.b16 %v2223
        %v2260 = vunpack.c.l.b16 %v2224
        %v2261 = vunpack.c.h.b16 %v2221
        %v2262 = vunpack.c.h.b16 %v2222
        %v2263 = vunpack.c.h.b16 %v2223
        %v2264 = vunpack.c.h.b16 %v2224
        %v2265 = vunpack.c.l.b16 %v2225
        %v2266 = vunpack.c.l.b16 %v2226
        %v2267 = vunpack.c.l.b16 %v2227
        %v2268 = vunpack.c.l.b16 %v2228
        %v2269 = vunpack.c.h.b16 %v2225
        %v2270 = vunpack.c.h.b16 %v2226
        %v2271 = vunpack.c.h.b16 %v2227
        %v2272 = vunpack.c.h.b16 %v2228
        %v2273 = vunpack.c.l.b16 %v2229
        %v2274 = vunpack.c.l.b16 %v2230
        %v2275 = vunpack.c.l.b16 %v2231
        %v2276 = vunpack.c.l.b16 %v2232
        %v2277 = vunpack.c.h.b16 %v2229
        %v2278 = vunpack.c.h.b16 %v2230
        %v2279 = vunpack.c.h.b16 %v2231
        %v2280 = vunpack.c.h.b16 %v2232
        %v2281 = vpack.c.b16 %v2250, %v2249
        %v2282 = vpack.c.b16 %v2252, %v2251
        %v2283 = vpack.c.b16 %v2254, %v2253
        %v2284 = vpack.c.b16 %v2256, %v2255
        %v2285 = vpack.c.b16 %v2258, %v2257
        %v2286 = vpack.c.b16 %v2260, %v2259
        %v2287 = vpack.c.b16 %v2262, %v2261
        %v2288 = vpack.c.b16 %v2264, %v2263
        %v2289 = vpack.c.b16 %v2266, %v2265
        %v2290 = vpack.c.b16 %v2268, %v2267
        %v2291 = vpack.c.b16 %v2270, %v2269
        %v2292 = vpack.c.b16 %v2272, %v2271
        %v2293 = vpack.c.b16 %v2274, %v2273
        %v2294 = vpack.c.b16 %v2276, %v2275
        %v2295 = vpack.c.b16 %v2278, %v2277
        %v2296 = vpack.c.b16 %v2280, %v2279
        %2313 = vst [vmem:[%s309] sm:$0xff] %v2281
        %2314 = vst [vmem:[%s309 + $0x8] sm:$0xff] %v2282
        %2315 = vst [vmem:[%s309 + $0x10] sm:$0xff] %v2283
        %2316 = vst [vmem:[%s309 + $0x18] sm:$0xff] %v2284
        %2317 = vst [vmem:[%s309 + $0x20] sm:$0xff] %v2285
        %2318 = vst [vmem:[%s309 + $0x28] sm:$0xff] %v2286
        %2319 = vst [vmem:[%s309 + $0x30] sm:$0xff] %v2287
        %2320 = vst [vmem:[%s309 + $0x38] sm:$0xff] %v2288
        %2321 = vst [vmem:[%s309 + $0x40] sm:$0xff] %v2289
        %2322 = vst [vmem:[%s309 + $0x48] sm:$0xff] %v2290
        %2323 = vst [vmem:[%s309 + $0x50] sm:$0xff] %v2291
        %2324 = vst [vmem:[%s309 + $0x58] sm:$0xff] %v2292
        %2325 = vst [vmem:[%s309 + $0x60] sm:$0xff] %v2293
        %2326 = vst [vmem:[%s309 + $0x68] sm:$0xff] %v2294
        %2327 = vst [vmem:[%s309 + $0x70] sm:$0xff] %v2295
        %2328 = vst [vmem:[%s309 + $0x78] sm:$0xff] %v2296
        %p2329 = scmp.eq.s32.totalorder %s26, 1
        // Predicated region
        $region135: #{cna_forward.2} parent=47 // pred_check
          %p2330 = pneg %p2329
        $region136: #{cna_forward.2} parent=47 // pred_check_branch
          %2332 = sbr.rel (%p2330) target = $region138
        $region137: #{cna_forward.2} parent=47 // pred_region
          %v2333 = vld [vmem:[#allocation5] sm:$0xff]
          %v2334 = vld [vmem:[#allocation5 + $0x8] sm:$0xff]
          %v2335 = vld [vmem:[#allocation5 + $0x10] sm:$0xff]
          %v2336 = vld [vmem:[#allocation5 + $0x18] sm:$0xff]
          %v2337 = vld [vmem:[#allocation5 + $0x20] sm:$0xff]
          %v2338 = vld [vmem:[#allocation5 + $0x28] sm:$0xff]
          %v2339 = vld [vmem:[#allocation5 + $0x30] sm:$0xff]
          %v2340 = vld [vmem:[#allocation5 + $0x38] sm:$0xff]
          %v2341 = vld [vmem:[#allocation6] sm:$0xff]
          %v2342 = vld [vmem:[#allocation6 + $0x8] sm:$0xff]
          %v2343 = vld [vmem:[#allocation6 + $0x10] sm:$0xff]
          %v2344 = vld [vmem:[#allocation6 + $0x18] sm:$0xff]
          %v2345 = vld [vmem:[#allocation6 + $0x20] sm:$0xff]
          %v2346 = vld [vmem:[#allocation6 + $0x28] sm:$0xff]
          %v2347 = vld [vmem:[#allocation6 + $0x30] sm:$0xff]
          %v2348 = vld [vmem:[#allocation6 + $0x38] sm:$0xff]
          %2357 = vrot.lane.b32.xlu0 %v2341, 1
          %v2358 = vpop.permute.xlu0 %2357
          %2359 = vrot.lane.b32.xlu0 %v2342, 1
          %v2360 = vpop.permute.xlu0 %2359
          %2361 = vrot.lane.b32.xlu0 %v2343, 1
          %v2362 = vpop.permute.xlu0 %2361
          %2363 = vrot.lane.b32.xlu0 %v2344, 1
          %v2364 = vpop.permute.xlu0 %2363
          %2365 = vrot.lane.b32.xlu0 %v2345, 1
          %v2366 = vpop.permute.xlu0 %2365
          %2367 = vrot.lane.b32.xlu0 %v2346, 1
          %v2368 = vpop.permute.xlu0 %2367
          %2369 = vrot.lane.b32.xlu0 %v2347, 1
          %v2370 = vpop.permute.xlu0 %2369
          %2371 = vrot.lane.b32.xlu0 %v2348, 1
          %v2372 = vpop.permute.xlu0 %2371
          %v2381 = vsel %vm2112, %v2333, %v2358
          %v2382 = vsel %vm2112, %v2334, %v2360
          %v2383 = vsel %vm2112, %v2335, %v2362
          %v2384 = vsel %vm2112, %v2336, %v2364
          %v2385 = vsel %vm2112, %v2337, %v2366
          %v2386 = vsel %vm2112, %v2338, %v2368
          %v2387 = vsel %vm2112, %v2339, %v2370
          %v2388 = vsel %vm2112, %v2340, %v2372
          %v2389 = vld [vmem:[%s6] sm:$0xff]
          %v2390 = vld [vmem:[%s6 + $0x8] sm:$0xff]
          %v2391 = vld [vmem:[%s6 + $0x10] sm:$0xff]
          %v2392 = vld [vmem:[%s6 + $0x18] sm:$0xff]
          %vm2393 = vcmask 523264
          %v2395 = vsel %vm2393, %v2389, 0
          %v2398 = vsel %vm2393, %v2390, 0
          %v2401 = vsel %vm2393, %v2391, 0
          %v2404 = vsel %vm2393, %v2392, 0
          %2406 = vmatprep.subr.mxu0 0.0
          %2407 = vmatpush1.msra.mxu0 %v2381
          %2408 = vmatprep.subr.mxu0 0.0
          %2409 = vmatpush1.msra.mxu0 %v2382
          %2410 = vmatprep.subr.mxu0 0.0
          %2411 = vmatpush1.msra.mxu0 %v2383
          %2412 = vmatprep.subr.mxu0 0.0
          %2413 = vmatpush1.msra.mxu0 %v2384
          %2414 = vmatprep.subr.mxu0 0.0
          %2415 = vmatpush1.msra.mxu0 %v2385
          %2416 = vmatprep.subr.mxu0 0.0
          %2417 = vmatpush1.msra.mxu0 %v2386
          %2418 = vmatprep.subr.mxu0 0.0
          %2419 = vmatpush1.msra.mxu0 %v2387
          %2420 = vmatprep.subr.mxu0 0.0
          %2421 = vmatpush1.msra.mxu0 %v2388
          %2422 = vmatprep.subr.mxu0 0.0
          %2423 = vmatpush1.msra.mxu0 0.0
          %2424 = vmatprep.subr.mxu0 0.0
          %2425 = vmatpush1.msra.mxu0 0.0
          %2426 = vmatprep.subr.mxu0 0.0
          %2427 = vmatpush1.msra.mxu0 0.0
          %2428 = vmatprep.subr.mxu0 0.0
          %2429 = vmatpush1.msra.mxu0 0.0
          %2430 = vmatprep.subr.mxu0 0.0
          %2431 = vmatpush1.msra.mxu0 0.0
          %2432 = vmatprep.subr.mxu0 0.0
          %2433 = vmatpush1.msra.mxu0 0.0
          %2434 = vmatprep.subr.mxu0 0.0
          %2435 = vmatpush1.msra.mxu0 0.0
          %2436 = vmatprep.subr.mxu0 0.0
          %2437 = vmatpush1.msra.mxu0 0.0
          %2438 = vmatprep.subr.mxu0 0.0
          %2439 = vmatpush1.msra.mxu0 0.0
          %2440 = vmatprep.subr.mxu0 0.0
          %2441 = vmatpush1.msra.mxu0 0.0
          %2442 = vmatprep.subr.mxu0 0.0
          %2443 = vmatpush1.msra.mxu0 0.0
          %2444 = vmatprep.subr.mxu0 0.0
          %2445 = vmatpush1.msra.mxu0 0.0
          %2446 = vmatprep.subr.mxu0 0.0
          %2447 = vmatpush1.msra.mxu0 0.0
          %2448 = vmatprep.subr.mxu0 0.0
          %2449 = vmatpush1.msra.mxu0 0.0
          %2450 = vmatprep.subr.mxu0 0.0
          %2451 = vmatpush1.msra.mxu0 0.0
          %2452 = vmatprep.subr.mxu0 0.0
          %2453 = vmatpush1.msra.mxu0 0.0
          %2454 = vmatprep.subr.mxu0 0.0
          %2455 = vmatpush1.msra.mxu0 0.0
          %2456 = vmatprep.subr.mxu0 0.0
          %2457 = vmatpush1.msra.mxu0 0.0
          %2458 = vmatprep.subr.mxu0 0.0
          %2459 = vmatpush1.msra.mxu0 0.0
          %2460 = vmatprep.subr.mxu0 0.0
          %2461 = vmatpush1.msra.mxu0 0.0
          %2462 = vmatprep.subr.mxu0 0.0
          %2463 = vmatpush1.msra.mxu0 0.0
          %2464 = vmatprep.subr.mxu0 0.0
          %2465 = vmatpush1.msra.mxu0 0.0
          %2466 = vmatprep.subr.mxu0 0.0
          %2467 = vmatpush1.msra.mxu0 0.0
          %2468 = vmatprep.subr.mxu0 0.0
          %2469 = vmatpush1.msra.mxu0 0.0
          %2470 = vmatprep.mubr.f32.mxu0 0.0
          %2471 = vmatmul.mubr.f32.gmra.mrb[0].mxu0 %v2395
          %v2472 = vpop.f32.mrb[0].mxu0
          %v2473 = vadd.f32 0.0, %v2472
          %v2474 = vpop.f32.mrb[0].mxu0
          %2475 = vmatprep.mubr.f32.mxu0 0.0
          %2476 = vmatmul.mubr.f32.gmra.mrb[0].mxu0 %v2398
          %v2477 = vpop.f32.mrb[0].mxu0
          %v2478 = vadd.f32 0.0, %v2477
          %v2479 = vpop.f32.mrb[0].mxu0
          %2480 = vmatprep.mubr.f32.mxu0 0.0
          %2481 = vmatmul.mubr.f32.gmra.mrb[0].mxu0 %v2401
          %v2482 = vpop.f32.mrb[0].mxu0
          %v2483 = vadd.f32 0.0, %v2482
          %v2484 = vpop.f32.mrb[0].mxu0
          %2485 = vmatprep.mubr.f32.mxu0 0.0
          %2486 = vmatmul.mubr.f32.gmra.mrb[0].mxu0 %v2404
          %v2487 = vpop.f32.mrb[0].mxu0
          %v2488 = vadd.f32 0.0, %v2487
          %v2489 = vpop.f32.mrb[0].mxu0
          %2490 = vdwg.mxu0
          %v2491 = vld [vmem:[%s7] sm:$0xff]
          %v2492 = vld [vmem:[%s7 + $0x8] sm:$0xff]
          %v2493 = vld [vmem:[%s7 + $0x10] sm:$0xff]
          %v2494 = vld [vmem:[%s7 + $0x18] sm:$0xff]
          %v2495 = vld [vmem:[%s7 + $0x20] sm:$0xff]
          %v2496 = vld [vmem:[%s7 + $0x28] sm:$0xff]
          %v2497 = vld [vmem:[%s7 + $0x30] sm:$0xff]
          %v2498 = vld [vmem:[%s7 + $0x38] sm:$0xff]
          %vm2499 = vcmask 261120
          %v2501 = vsel %vm2499, %v2491, 0
          %v2504 = vsel %vm2499, %v2492, 0
          %v2507 = vsel %vm2499, %v2493, 0
          %v2510 = vsel %vm2499, %v2494, 0
          %v2513 = vsel %vm2499, %v2495, 0
          %v2516 = vsel %vm2499, %v2496, 0
          %v2519 = vsel %vm2499, %v2497, 0
          %v2522 = vsel %vm2499, %v2498, 0
          %2524 = vmatprep.subr.mxu0 0.0
          %2525 = vmatpush1.msra.mxu0 %v2473
          %2526 = vmatprep.subr.mxu0 0.0
          %2527 = vmatpush1.msra.mxu0 %v2478
          %2528 = vmatprep.subr.mxu0 0.0
          %2529 = vmatpush1.msra.mxu0 %v2483
          %2530 = vmatprep.subr.mxu0 0.0
          %2531 = vmatpush1.msra.mxu0 %v2488
          %2532 = vmatprep.subr.mxu0 0.0
          %2533 = vmatpush1.msra.mxu0 0.0
          %2534 = vmatprep.subr.mxu0 0.0
          %2535 = vmatpush1.msra.mxu0 0.0
          %2536 = vmatprep.subr.mxu0 0.0
          %2537 = vmatpush1.msra.mxu0 0.0
          %2538 = vmatprep.subr.mxu0 0.0
          %2539 = vmatpush1.msra.mxu0 0.0
          %2540 = vmatprep.subr.mxu0 0.0
          %2541 = vmatpush1.msra.mxu0 0.0
          %2542 = vmatprep.subr.mxu0 0.0
          %2543 = vmatpush1.msra.mxu0 0.0
          %2544 = vmatprep.subr.mxu0 0.0
          %2545 = vmatpush1.msra.mxu0 0.0
          %2546 = vmatprep.subr.mxu0 0.0
          %2547 = vmatpush1.msra.mxu0 0.0
          %2548 = vmatprep.subr.mxu0 0.0
          %2549 = vmatpush1.msra.mxu0 0.0
          %2550 = vmatprep.subr.mxu0 0.0
          %2551 = vmatpush1.msra.mxu0 0.0
          %2552 = vmatprep.subr.mxu0 0.0
          %2553 = vmatpush1.msra.mxu0 0.0
          %2554 = vmatprep.subr.mxu0 0.0
          %2555 = vmatpush1.msra.mxu0 0.0
          %2556 = vmatprep.subr.mxu0 0.0
          %2557 = vmatpush1.msra.mxu0 0.0
          %2558 = vmatprep.subr.mxu0 0.0
          %2559 = vmatpush1.msra.mxu0 0.0
          %2560 = vmatprep.subr.mxu0 0.0
          %2561 = vmatpush1.msra.mxu0 0.0
          %2562 = vmatprep.subr.mxu0 0.0
          %2563 = vmatpush1.msra.mxu0 0.0
          %2564 = vmatprep.subr.mxu0 0.0
          %2565 = vmatpush1.msra.mxu0 0.0
          %2566 = vmatprep.subr.mxu0 0.0
          %2567 = vmatpush1.msra.mxu0 0.0
          %2568 = vmatprep.subr.mxu0 0.0
          %2569 = vmatpush1.msra.mxu0 0.0
          %2570 = vmatprep.subr.mxu0 0.0
          %2571 = vmatpush1.msra.mxu0 0.0
          %2572 = vmatprep.subr.mxu0 0.0
          %2573 = vmatpush1.msra.mxu0 0.0
          %2574 = vmatprep.subr.mxu0 0.0
          %2575 = vmatpush1.msra.mxu0 0.0
          %2576 = vmatprep.subr.mxu0 0.0
          %2577 = vmatpush1.msra.mxu0 0.0
          %2578 = vmatprep.subr.mxu0 0.0
          %2579 = vmatpush1.msra.mxu0 0.0
          %2580 = vmatprep.subr.mxu0 0.0
          %2581 = vmatpush1.msra.mxu0 0.0
          %2582 = vmatprep.subr.mxu0 0.0
          %2583 = vmatpush1.msra.mxu0 0.0
          %2584 = vmatprep.subr.mxu0 0.0
          %2585 = vmatpush1.msra.mxu0 0.0
          %2586 = vmatprep.subr.mxu0 0.0
          %2587 = vmatpush1.msra.mxu0 0.0
          %2588 = vmatprep.mubr.f32.mxu0 0.0
          %2589 = vmatmul.mubr.f32.gmra.mrb[0].mxu0 %v2501
          %v2590 = vpop.f32.mrb[0].mxu0
          %v2591 = vadd.f32 0.0, %v2590
          %v2592 = vpop.f32.mrb[0].mxu0
          %2593 = vmatprep.mubr.f32.mxu0 0.0
          %2594 = vmatmul.mubr.f32.gmra.mrb[0].mxu0 %v2504
          %v2595 = vpop.f32.mrb[0].mxu0
          %v2596 = vadd.f32 0.0, %v2595
          %v2597 = vpop.f32.mrb[0].mxu0
          %2598 = vmatprep.mubr.f32.mxu0 0.0
          %2599 = vmatmul.mubr.f32.gmra.mrb[0].mxu0 %v2507
          %v2600 = vpop.f32.mrb[0].mxu0
          %v2601 = vadd.f32 0.0, %v2600
          %v2602 = vpop.f32.mrb[0].mxu0
          %2603 = vmatprep.mubr.f32.mxu0 0.0
          %2604 = vmatmul.mubr.f32.gmra.mrb[0].mxu0 %v2510
          %v2605 = vpop.f32.mrb[0].mxu0
          %v2606 = vadd.f32 0.0, %v2605
          %v2607 = vpop.f32.mrb[0].mxu0
          %2608 = vmatprep.mubr.f32.mxu0 0.0
          %2609 = vmatmul.mubr.f32.gmra.mrb[0].mxu0 %v2513
          %v2610 = vpop.f32.mrb[0].mxu0
          %v2611 = vadd.f32 0.0, %v2610
          %v2612 = vpop.f32.mrb[0].mxu0
          %2613 = vmatprep.mubr.f32.mxu0 0.0
          %2614 = vmatmul.mubr.f32.gmra.mrb[0].mxu0 %v2516
          %v2615 = vpop.f32.mrb[0].mxu0
          %v2616 = vadd.f32 0.0, %v2615
          %v2617 = vpop.f32.mrb[0].mxu0
          %2618 = vmatprep.mubr.f32.mxu0 0.0
          %2619 = vmatmul.mubr.f32.gmra.mrb[0].mxu0 %v2519
          %v2620 = vpop.f32.mrb[0].mxu0
          %v2621 = vadd.f32 0.0, %v2620
          %v2622 = vpop.f32.mrb[0].mxu0
          %2623 = vmatprep.mubr.f32.mxu0 0.0
          %2624 = vmatmul.mubr.f32.gmra.mrb[0].mxu0 %v2522
          %v2625 = vpop.f32.mrb[0].mxu0
          %v2626 = vadd.f32 0.0, %v2625
          %v2627 = vpop.f32.mrb[0].mxu0
          %2628 = vdwg.mxu0
          %v2629 = vmul.f32 %v2591, 0.0009765625
          %v2630 = vmul.f32 %v2596, 0.0009765625
          %v2631 = vmul.f32 %v2601, 0.0009765625
          %v2632 = vmul.f32 %v2606, 0.0009765625
          %v2633 = vmul.f32 %v2611, 0.0009765625
          %v2634 = vmul.f32 %v2616, 0.0009765625
          %v2635 = vmul.f32 %v2621, 0.0009765625
          %v2636 = vmul.f32 %v2626, 0.0009765625
          %v2637 = vmul.f32 %v2629, %v2629
          %v2638 = vmul.f32 %v2630, %v2630
          %v2639 = vmul.f32 %v2631, %v2631
          %v2640 = vmul.f32 %v2632, %v2632
          %v2641 = vmul.f32 %v2633, %v2633
          %v2642 = vmul.f32 %v2634, %v2634
          %v2643 = vmul.f32 %v2635, %v2635
          %v2644 = vmul.f32 %v2636, %v2636
          %2653 = vrot.lane.b32.xlu0 %v2637, 1
          %v2654 = vpop.permute.xlu0 %2653
          %2655 = vrot.lane.b32.xlu0 %v2638, 1
          %v2656 = vpop.permute.xlu0 %2655
          %2657 = vrot.lane.b32.xlu0 %v2639, 1
          %v2658 = vpop.permute.xlu0 %2657
          %2659 = vrot.lane.b32.xlu0 %v2640, 1
          %v2660 = vpop.permute.xlu0 %2659
          %2661 = vrot.lane.b32.xlu0 %v2641, 1
          %v2662 = vpop.permute.xlu0 %2661
          %2663 = vrot.lane.b32.xlu0 %v2642, 1
          %v2664 = vpop.permute.xlu0 %2663
          %2665 = vrot.lane.b32.xlu0 %v2643, 1
          %v2666 = vpop.permute.xlu0 %2665
          %2667 = vrot.lane.b32.xlu0 %v2644, 1
          %v2668 = vpop.permute.xlu0 %2667
          %v2677 = vsub.f32 %v2629, %v2654
          %v2678 = vsub.f32 %v2630, %v2656
          %v2679 = vsub.f32 %v2631, %v2658
          %v2680 = vsub.f32 %v2632, %v2660
          %v2681 = vsub.f32 %v2633, %v2662
          %v2682 = vsub.f32 %v2634, %v2664
          %v2683 = vsub.f32 %v2635, %v2666
          %v2684 = vsub.f32 %v2636, %v2668
          %v2685 = vmax.f32 %v2677, 0.0
          %v2686 = vmax.f32 %v2678, 0.0
          %v2687 = vmax.f32 %v2679, 0.0
          %v2688 = vmax.f32 %v2680, 0.0
          %v2689 = vmax.f32 %v2681, 0.0
          %v2690 = vmax.f32 %v2682, 0.0
          %v2691 = vmax.f32 %v2683, 0.0
          %v2692 = vmax.f32 %v2684, 0.0
          %v2693 = vadd.f32 %v2685, 1e-05
          %v2694 = vadd.f32 %v2686, 1e-05
          %v2695 = vadd.f32 %v2687, 1e-05
          %v2696 = vadd.f32 %v2688, 1e-05
          %v2697 = vadd.f32 %v2689, 1e-05
          %v2698 = vadd.f32 %v2690, 1e-05
          %v2699 = vadd.f32 %v2691, 1e-05
          %v2700 = vadd.f32 %v2692, 1e-05
          %v2701 = vrsqrt.pop %v2693
          %v2702 = vrsqrt.pop %v2694
          %v2703 = vrsqrt.pop %v2695
          %v2704 = vrsqrt.pop %v2696
          %v2705 = vrsqrt.pop %v2697
          %v2706 = vrsqrt.pop %v2698
          %v2707 = vrsqrt.pop %v2699
          %v2708 = vrsqrt.pop %v2700
          %v2709 = vld [vmem:[%s3] sm:$0xff]
          %v2710 = vld [vmem:[%s3 + $0x8] sm:$0xff]
          %v2711 = vld [vmem:[%s3 + $0x10] sm:$0xff]
          %v2712 = vld [vmem:[%s3 + $0x18] sm:$0xff]
          %v2713 = vld [vmem:[%s3 + $0x20] sm:$0xff]
          %v2714 = vld [vmem:[%s3 + $0x28] sm:$0xff]
          %v2715 = vld [vmem:[%s3 + $0x30] sm:$0xff]
          %v2716 = vld [vmem:[%s3 + $0x38] sm:$0xff]
          %2725 = vrot.lane.b32.xlu0 %v2709, 1
          %v2726 = vpop.permute.xlu0 %2725
          %2727 = vrot.lane.b32.xlu0 %v2710, 1
          %v2728 = vpop.permute.xlu0 %2727
          %2729 = vrot.lane.b32.xlu0 %v2711, 1
          %v2730 = vpop.permute.xlu0 %2729
          %2731 = vrot.lane.b32.xlu0 %v2712, 1
          %v2732 = vpop.permute.xlu0 %2731
          %2733 = vrot.lane.b32.xlu0 %v2713, 1
          %v2734 = vpop.permute.xlu0 %2733
          %2735 = vrot.lane.b32.xlu0 %v2714, 1
          %v2736 = vpop.permute.xlu0 %2735
          %2737 = vrot.lane.b32.xlu0 %v2715, 1
          %v2738 = vpop.permute.xlu0 %2737
          %2739 = vrot.lane.b32.xlu0 %v2716, 1
          %v2740 = vpop.permute.xlu0 %2739
          %v2749 = vmul.f32 %v2701, %v2726
          %v2750 = vmul.f32 %v2702, %v2728
          %v2751 = vmul.f32 %v2703, %v2730
          %v2752 = vmul.f32 %v2704, %v2732
          %v2753 = vmul.f32 %v2705, %v2734
          %v2754 = vmul.f32 %v2706, %v2736
          %v2755 = vmul.f32 %v2707, %v2738
          %v2756 = vmul.f32 %v2708, %v2740
          %v2757 = vld [vmem:[%s4] sm:$0xff]
          %v2758 = vld [vmem:[%s4 + $0x8] sm:$0xff]
          %v2759 = vld [vmem:[%s4 + $0x10] sm:$0xff]
          %v2760 = vld [vmem:[%s4 + $0x18] sm:$0xff]
          %v2761 = vld [vmem:[%s4 + $0x20] sm:$0xff]
          %v2762 = vld [vmem:[%s4 + $0x28] sm:$0xff]
          %v2763 = vld [vmem:[%s4 + $0x30] sm:$0xff]
          %v2764 = vld [vmem:[%s4 + $0x38] sm:$0xff]
          %2773 = vrot.lane.b32.xlu0 %v2749, 127
          %v2774 = vpop.permute.xlu0 %2773
          %2775 = vrot.lane.b32.xlu0 %v2750, 127
          %v2776 = vpop.permute.xlu0 %2775
          %2777 = vrot.lane.b32.xlu0 %v2751, 127
          %v2778 = vpop.permute.xlu0 %2777
          %2779 = vrot.lane.b32.xlu0 %v2752, 127
          %v2780 = vpop.permute.xlu0 %2779
          %2781 = vrot.lane.b32.xlu0 %v2753, 127
          %v2782 = vpop.permute.xlu0 %2781
          %2783 = vrot.lane.b32.xlu0 %v2754, 127
          %v2784 = vpop.permute.xlu0 %2783
          %2785 = vrot.lane.b32.xlu0 %v2755, 127
          %v2786 = vpop.permute.xlu0 %2785
          %2787 = vrot.lane.b32.xlu0 %v2756, 127
          %v2788 = vpop.permute.xlu0 %2787
          %v2797 = vmul.f32 %v2629, %v2774
          %v2798 = vmul.f32 %v2630, %v2776
          %v2799 = vmul.f32 %v2631, %v2778
          %v2800 = vmul.f32 %v2632, %v2780
          %v2801 = vmul.f32 %v2633, %v2782
          %v2802 = vmul.f32 %v2634, %v2784
          %v2803 = vmul.f32 %v2635, %v2786
          %v2804 = vmul.f32 %v2636, %v2788
          %v2805 = vsub.f32 %v2757, %v2797
          %v2806 = vsub.f32 %v2758, %v2798
          %v2807 = vsub.f32 %v2759, %v2799
          %v2808 = vsub.f32 %v2760, %v2800
          %v2809 = vsub.f32 %v2761, %v2801
          %v2810 = vsub.f32 %v2762, %v2802
          %v2811 = vsub.f32 %v2763, %v2803
          %v2812 = vsub.f32 %v2764, %v2804
          %2821 = vrot.lane.b32.xlu0 %v2805, 1
          %v2822 = vpop.permute.xlu0 %2821
          %2823 = vrot.lane.b32.xlu0 %v2806, 1
          %v2824 = vpop.permute.xlu0 %2823
          %2825 = vrot.lane.b32.xlu0 %v2807, 1
          %v2826 = vpop.permute.xlu0 %2825
          %2827 = vrot.lane.b32.xlu0 %v2808, 1
          %v2828 = vpop.permute.xlu0 %2827
          %2829 = vrot.lane.b32.xlu0 %v2809, 1
          %v2830 = vpop.permute.xlu0 %2829
          %2831 = vrot.lane.b32.xlu0 %v2810, 1
          %v2832 = vpop.permute.xlu0 %2831
          %2833 = vrot.lane.b32.xlu0 %v2811, 1
          %v2834 = vpop.permute.xlu0 %2833
          %2835 = vrot.lane.b32.xlu0 %v2812, 1
          %v2836 = vpop.permute.xlu0 %2835
          %v2845 = vsel %vm2112, %v2774, %v2822
          %v2846 = vsel %vm2112, %v2776, %v2824
          %v2847 = vsel %vm2112, %v2778, %v2826
          %v2848 = vsel %vm2112, %v2780, %v2828
          %v2849 = vsel %vm2112, %v2782, %v2830
          %v2850 = vsel %vm2112, %v2784, %v2832
          %v2851 = vsel %vm2112, %v2786, %v2834
          %v2852 = vsel %vm2112, %v2788, %v2836
          %vm2853 = vcmask 15360
          %2854 = vst.msk [vmem:[%s327] sm:$0xff] %vm2853, %v2845
          %2855 = vst.msk [vmem:[%s327 + $0x8] sm:$0xff] %vm2853, %v2846
          %2856 = vst.msk [vmem:[%s327 + $0x10] sm:$0xff] %vm2853, %v2847
          %2857 = vst.msk [vmem:[%s327 + $0x18] sm:$0xff] %vm2853, %v2848
          %2858 = vst.msk [vmem:[%s327 + $0x20] sm:$0xff] %vm2853, %v2849
          %2859 = vst.msk [vmem:[%s327 + $0x28] sm:$0xff] %vm2853, %v2850
          %2860 = vst.msk [vmem:[%s327 + $0x30] sm:$0xff] %vm2853, %v2851
          %2861 = vst.msk [vmem:[%s327 + $0x38] sm:$0xff] %vm2853, %v2852
        $region138: #{cna_forward.2} parent=47 // pred_fallthru
          _
        %s2862 = sand.u32 %s195, 1
        %s2863 = sand.u32 %s195, 1
        %s2864 = smul.addr %s2863, 128
        %s2865 = scalar_lea.vmem [#allocation7], %s2864
        %p2866 = scmp.lt.s32.totalorder %s25, 1
        %s2867 = scalar_select %p2866, %s25, 1
        %s2868 = smul.addr %s2867, 8
        %s2869 = smul.addr %s2868, 8
        %s2870 = scalar_lea.vmem %s9, %s2869
        // Predicated region
        $region139: #{cna_forward.2} parent=47 // pred_check
          %p2871 = pneg %p205
        $region140: #{cna_forward.2} parent=47 // pred_check_branch
          %2873 = sbr.rel (%p2871) target = $region142
        $region141: #{cna_forward.2} parent=47 // pred_region
          %s2874 = smul.u32 4, %s26
          %s2875 = smul.addr %s25, 64
          %s2876 = sadd.s32 %s2874, %s2875
          %s2877 = smul.addr %s2876, 4
          %s2878 = scalar_lea.vmem %s8, %s2877
          // Predicated region
          $region143: #{cna_forward.2} parent=141 // pred_check
            _
          $region144: #{cna_forward.2} parent=141 // pred_check_branch
            %2880 = sbr.rel (0) target = $region146
          $region145: #{cna_forward.2} parent=141 // pred_region
            // Predicated region
            $region147: #{cna_forward.2} parent=145 // pred_check
              _
            $region148: #{cna_forward.2} parent=145 // pred_check_branch
              %2882 = sbr.rel (0) target = $region150
            $region149: #{cna_forward.2} parent=145 // pred_region
              loop: start=0, step=1, limit=1
              $region151: #{cna_forward.2} parent=149 // loop_pre_header
                _
              $region152: #{cna_forward.2} parent=149 // loop_header
                %s2884 = sphi 0, %s2888
                %p2885 = scmp.ge.s32.totalorder %s2884, 1
                %s2889 = sphi %s2865, %s2865
                %s2890 = sphi %s2878, %s2878
              $region153: #{cna_forward.2} parent=149 // loop_header_branch
                %2887 = sbr.rel (%p2885) target = $region157
              $region154: #{cna_forward.2} parent=149 // loop_body
                %v2891 = vld [vmem:[%s2889] sm:$0xff]
                %2892 = vst [vmem:[%s2890] sm:$0xff] %v2891
                %v2893 = vld [vmem:[%s2889 + $0x8] sm:$0xff]
                %2894 = vst [vmem:[%s2890 + $0x8] sm:$0xff] %v2893
                %v2895 = vld [vmem:[%s2889 + $0x10] sm:$0xff]
                %2896 = vst [vmem:[%s2890 + $0x20] sm:$0xff] %v2895
                %v2897 = vld [vmem:[%s2889 + $0x18] sm:$0xff]
                %2898 = vst [vmem:[%s2890 + $0x28] sm:$0xff] %v2897
                %v2899 = vld [vmem:[%s2889 + $0x20] sm:$0xff]
                %2900 = vst [vmem:[%s2890 + $0x40] sm:$0xff] %v2899
                %v2901 = vld [vmem:[%s2889 + $0x28] sm:$0xff]
                %2902 = vst [vmem:[%s2890 + $0x48] sm:$0xff] %v2901
                %v2903 = vld [vmem:[%s2889 + $0x30] sm:$0xff]
                %2904 = vst [vmem:[%s2890 + $0x60] sm:$0xff] %v2903
                %v2905 = vld [vmem:[%s2889 + $0x38] sm:$0xff]
                %2906 = vst [vmem:[%s2890 + $0x68] sm:$0xff] %v2905
                %v2907 = vld [vmem:[%s2889 + $0x40] sm:$0xff]
                %2908 = vst [vmem:[%s2890 + $0x80] sm:$0xff] %v2907
                %v2909 = vld [vmem:[%s2889 + $0x48] sm:$0xff]
                %2910 = vst [vmem:[%s2890 + $0x88] sm:$0xff] %v2909
                %v2911 = vld [vmem:[%s2889 + $0x50] sm:$0xff]
                %2912 = vst [vmem:[%s2890 + $0xa0] sm:$0xff] %v2911
                %v2913 = vld [vmem:[%s2889 + $0x58] sm:$0xff]
                %2914 = vst [vmem:[%s2890 + $0xa8] sm:$0xff] %v2913
                %v2915 = vld [vmem:[%s2889 + $0x60] sm:$0xff]
                %2916 = vst [vmem:[%s2890 + $0xc0] sm:$0xff] %v2915
                %v2917 = vld [vmem:[%s2889 + $0x68] sm:$0xff]
                %2918 = vst [vmem:[%s2890 + $0xc8] sm:$0xff] %v2917
                %v2919 = vld [vmem:[%s2889 + $0x70] sm:$0xff]
                %2920 = vst [vmem:[%s2890 + $0xe0] sm:$0xff] %v2919
                %v2921 = vld [vmem:[%s2889 + $0x78] sm:$0xff]
                %2922 = vst [vmem:[%s2890 + $0xe8] sm:$0xff] %v2921
              $region155: #{cna_forward.2} parent=149 // loop_footer
                %s2888 = sadd.s32 1, %s2884
              $region156: #{cna_forward.2} parent=149 // loop_footer_branch
                %2883 = sbr.rel target = $region152
              $region157: #{cna_forward.2} parent=149 // loop_exit
                _
            $region150: #{cna_forward.2} parent=145 // pred_fallthru
              _
            // Predicated region
            $region158: #{cna_forward.2} parent=145 // pred_check
              _
            $region159: #{cna_forward.2} parent=145 // pred_check_branch
              %2924 = sbr.rel target = $region161
            $region160: #{cna_forward.2} parent=145 // pred_region
              _
            $region161: #{cna_forward.2} parent=145 // pred_fallthru
              _
          $region146: #{cna_forward.2} parent=141 // pred_fallthru
            _
          %2925 = vnop
        $region142: #{cna_forward.2} parent=47 // pred_fallthru
          _
        // Predicated region
        $region162: #{cna_forward.2} parent=47 // pred_check
          %p2926 = pneg %p231
        $region163: #{cna_forward.2} parent=47 // pred_check_branch
          %2928 = sbr.rel (%p2926) target = $region165
        $region164: #{cna_forward.2} parent=47 // pred_region
          _
        $region165: #{cna_forward.2} parent=47 // pred_fallthru
          _
      $region48: #{cna_forward.2} parent=5 // pred_fallthru
        _
      %p2929 = scmp.le.s32.totalorder 2, %s16
      // Predicated region
      $region166: #{cna_forward.2} parent=5 // pred_check
        %p2930 = pneg %p2929
      $region167: #{cna_forward.2} parent=5 // pred_check_branch
        %2932 = sbr.rel (%p2930) target = $region169
      $region168: #{cna_forward.2} parent=5 // pred_region
        %s2933 = ssub.s32 %s16, 2
        // Predicated region
        $region170: #{cna_forward.2} parent=168 // pred_check
          %p2934 = pneg %p211
        $region171: #{cna_forward.2} parent=168 // pred_check_branch
          %2936 = sbr.rel (%p2934) target = $region173
        $region172: #{cna_forward.2} parent=168 // pred_region
          %s2937 = sand.u32 %s196, 1
          %s2938 = sand.u32 %s196, 1
          %s2939 = smul.addr %s2938, 128
          %s2940 = scalar_lea.vmem [#allocation7], %s2939
        $region173: #{cna_forward.2} parent=168 // pred_fallthru
          _
        // Predicated region
        $region174: #{cna_forward.2} parent=168 // pred_check
          %p2941 = pneg %p237
        $region175: #{cna_forward.2} parent=168 // pred_check_branch
          %2943 = sbr.rel (%p2941) target = $region177
        $region176: #{cna_forward.2} parent=168 // pred_region
          %p2944 = scmp.lt.s32.totalorder %s27, 1
          %s2945 = scalar_select %p2944, %s27, 1
          %s2946 = smul.addr %s2945, 8
          %s2947 = smul.addr %s2946, 8
          %s2948 = scalar_lea.vmem %s9, %s2947
        $region177: #{cna_forward.2} parent=168 // pred_fallthru
          _
      $region169: #{cna_forward.2} parent=5 // pred_fallthru
        _
    $region6: #{cna_forward.2} parent=1 // loop_footer
      %s20 = sadd.s32 1, %s16
    $region7: #{cna_forward.2} parent=1 // loop_footer_branch
      %15 = sbr.rel target = $region3
    $region8: #{cna_forward.2} parent=1 // loop_exit
      _
  %2949 = vsyncmov [#allocation3]
  %s2950 = vpop.sfrf %2949
  %p2951 = scmp.eq.s32.totalorder %s2950, 0
  %p2952 = pneg %p2951
  %2954 = shalt.err (%p2952)
  %s2955 = scalar_lea.sflag [#allocation3], 1
  %2956 = vsyncmov %s2955
  %s2957 = vpop.sfrf %2956
  %p2958 = scmp.eq.s32.totalorder %s2957, 0
  %p2959 = pneg %p2958
  %2961 = shalt.err (%p2959)

</llo_original>
